<compile_context>
chip_gen: v6e
topology: v6e:2x2x1
jax: 0.10.0
libtpu: 0.0.40
codegen_flags: <defaults>
</compile_context>

<pallas_src>
import jax
import jax.numpy as jnp
import numpy as np
from jax.experimental import pallas as pl
from jax.experimental.pallas import tpu as pltpu

HID = 1322        # hidden width in the PyTorch module
HID_PAD = 1408    # 11 * 128 -> lane-dense padding of the 1322 axis


def _round_up(n, m):
    return ((n + m - 1) // m) * m


# ------------------------------ Fused kernel --------------------------------


def _fused_autoencoder_kernel(
    x_ref,
    w0, b0, w1, b1, w2, b2, w3, b3,          # encoder
    w4, b4, w5, b5, w6, b6, w7, b7,          # decoder
    s7, t7,                                  # dec3's BatchNorm (not foldable)
    wc, bc,                                  # classifier
    latent_ref, recon_ref, cls_ref,
):
    def dense(h, w_ref, b_ref):
        # bf16 inputs on the MXU, f32 accumulation, f32 epilogue on the VPU.
        return (
            jnp.dot(h.astype(jnp.bfloat16), w_ref[...],
                    preferred_element_type=jnp.float32)
            + b_ref[...]
        )

    relu = lambda v: jnp.maximum(v, 0.0)

    # Encoder (each BN already folded into the next Linear; Dropout = identity).
    h = relu(dense(x_ref[...], w0, b0))      # enc0: Linear + ReLU (+ folded BN)
    h = relu(dense(h, w1, b1))               # enc1
    h = relu(dense(h, w2, b2))               # enc2
    latent = dense(h, w3, b3)                # enc3 -> latent (plain Linear)
    latent_ref[...] = latent

    # Decoder.
    d = relu(dense(latent, w4, b4))          # dec0
    d = relu(dense(d, w5, b5))               # dec1
    d = relu(dense(d, w6, b6))               # dec2
    r = relu(dense(d, w7, b7))               # dec3: Linear + ReLU
    recon_ref[...] = r * s7[...] + t7[...]   # dec3's BN stays explicit

    # Classifier: latent is already live in vregs, fuse it here.
    cls_ref[...] = jax.nn.sigmoid(dense(latent, wc, bc))


@jax.jit
def autoencoder_forward(params, x):
    B, input_dim = x.shape
    bottleneck_dim = params["weights"][3].shape[1]

    # Batch tiling: keep weights resident, stream activations per batch tile.
    TB = min(128, _round_up(B, 8))
    B_pad = _round_up(B, TB)
    xp = jnp.pad(x, ((0, B_pad - B), (0, 0))) if B_pad != B else x
    n_tiles = B_pad // TB

    operands = [xp]
    for w, b in zip(params["weights"][:8], params["biases"][:8]):
        operands += [w, b]
    operands += [
        params["dec3_scale"], params["dec3_shift"],
        params["weights"][8], params["biases"][8],
    ]

    def batch_spec(ncols):
        # Streams one (TB, ncols) batch tile per grid step.
        return pl.BlockSpec((TB, ncols), lambda i: (i, 0))

    def resident_spec(arr):
        # Constant block index -> fetched once, resident across batch tiles.
        return pl.BlockSpec(arr.shape, lambda i: (0, 0))

    in_specs = [batch_spec(input_dim)] + [resident_spec(a) for a in operands[1:]]

    latent, recon, cls = pl.pallas_call(
        _fused_autoencoder_kernel,
        grid=(n_tiles,),
        out_shape=(
            jax.ShapeDtypeStruct((B_pad, bottleneck_dim), jnp.float32),
            jax.ShapeDtypeStruct((B_pad, input_dim), jnp.float32),
            jax.ShapeDtypeStruct((B_pad, 1), jnp.float32),
        ),
        in_specs=in_specs,
        out_specs=(
            batch_spec(bottleneck_dim),
            batch_spec(input_dim),
            batch_spec(1),
        ),
        compiler_params=pltpu.CompilerParams(
            dimension_semantics=("parallel",),
            vmem_limit_bytes=32 << 20,
        ),
    )(*operands)
    return latent[:B], recon[:B], cls[:B]


# --------------------------- Parameter construction -------------------------


def _init_linear(key, fan_in, fan_out):
    """PyTorch nn.Linear default init, stored pre-transposed as (in, out)."""
    kw, kb = jax.random.split(key)
    bound = 1.0 / (fan_in ** 0.5)
    w_t = jax.random.uniform(kw, (fan_in, fan_out), jnp.float32, -bound, bound)
    b = jax.random.uniform(kb, (fan_out,), jnp.float32, -bound, bound)
    return w_t, b


def _init_bn(n, eps=1e-5):
    """PyTorch BatchNorm1d eval-mode defaults folded to scale/shift."""
    gamma = jnp.ones((n,), jnp.float32)
    beta = jnp.zeros((n,), jnp.float32)
    mean = jnp.zeros((n,), jnp.float32)
    var = jnp.ones((n,), jnp.float32)
    scale = gamma / jnp.sqrt(var + eps)
    shift = beta - mean * scale
    return scale, shift


def _fold_bn(scale, shift, w_t_next, b_next):
    """Fold a preceding affine BN into the consuming Linear (exact in eval)."""
    return w_t_next * scale[:, None], b_next + shift @ w_t_next


def _pad_cols(a, n):
    return jnp.pad(a, ((0, 0), (0, n - a.shape[1])))


def _pad_rows(a, n):
    return jnp.pad(a, ((0, n - a.shape[0]), (0, 0)))


def _pad_vec(v, n):
    return jnp.pad(v, (0, n - v.shape[0]))


def init_autoencoder_params(key, input_dim, bottleneck_dim):
    keys = jax.random.split(key, 9)

    # Raw f32 (in, out) Linear parameters, PyTorch-default init.
    w0, b0 = _init_linear(keys[0], input_dim, HID)            # enc0
    w1, b1 = _init_linear(keys[1], HID, 256)                  # enc1
    w2, b2 = _init_linear(keys[2], 256, 128)                  # enc2
    w3, b3 = _init_linear(keys[3], 128, bottleneck_dim)       # enc3
    w4, b4 = _init_linear(keys[4], bottleneck_dim, 128)       # dec0
    w5, b5 = _init_linear(keys[5], 128, 256)                  # dec1
    w6, b6 = _init_linear(keys[6], 256, HID)                  # dec2
    w7, b7 = _init_linear(keys[7], HID, input_dim)            # dec3
    wc, bc = _init_linear(keys[8], bottleneck_dim, 1)         # classifier

    # Eval-mode BatchNorms as per-feature scale/shift.
    s0, t0 = _init_bn(HID)            # after enc0
    s1, t1 = _init_bn(256)            # after enc1
    s2, t2 = _init_bn(128)            # after enc2
    s4, t4 = _init_bn(128)            # after dec0
    s5, t5 = _init_bn(256)            # after dec1
    s6, t6 = _init_bn(HID)            # after dec2
    s7, t7 = _init_bn(input_dim)      # after dec3 (no following Linear)

    # Fold every BN that feeds a following Linear into that Linear.
    w1, b1 = _fold_bn(s0, t0, w1, b1)
    w2, b2 = _fold_bn(s1, t1, w2, b2)
    w3, b3 = _fold_bn(s2, t2, w3, b3)
    w5, b5 = _fold_bn(s4, t4, w5, b5)
    w6, b6 = _fold_bn(s5, t5, w6, b6)
    w7, b7 = _fold_bn(s6, t6, w7, b7)

    # Pad the 1322-wide axis to 1408 (11*128). Padded output columns get zero
    # weight + zero bias (so ReLU keeps them 0); the consuming layer's padded
    # rows are zero, so padded lanes contribute nothing.
    w0 = _pad_cols(w0, HID_PAD); b0 = _pad_vec(b0, HID_PAD)
    w1 = _pad_rows(w1, HID_PAD)
    w6 = _pad_cols(w6, HID_PAD); b6 = _pad_vec(b6, HID_PAD)
    w7 = _pad_rows(w7, HID_PAD)

    def _w(w):   # bf16 weights: halve HBM->VMEM traffic, MXU-native dtype
        return w.astype(jnp.bfloat16)

    def _v(v):   # biases / BN params stay f32 (1, N) for the VPU epilogue
        return v.reshape(1, -1).astype(jnp.float32)

    return {
        "weights": [_w(w) for w in (w0, w1, w2, w3, w4, w5, w6, w7, wc)],
        "biases": [_v(b) for b in (b0, b1, b2, b3, b4, b5, b6, b7, bc)],
        "dec3_scale": _v(s7),
        "dec3_shift": _v(t7),
    }


# --------------------------- Plain-JAX reference -----------------------------


def reference_forward(params, x):
    """Same math as the fused kernel, on the same folded/padded bf16 params."""
    ws, bs = params["weights"], params["biases"]

    def dense(h, w, b):
        return jnp.dot(h.astype(jnp.bfloat16), w,
                       preferred_element_type=jnp.float32) + b

    relu = lambda v: jnp.maximum(v, 0.0)
    h = relu(dense(x, ws[0], bs[0]))
    h = relu(dense(h, ws[1], bs[1]))
    h = relu(dense(h, ws[2], bs[2]))
    latent = dense(h, ws[3], bs[3])
    d = relu(dense(latent, ws[4], bs[4]))
    d = relu(dense(d, ws[5], bs[5]))
    d = relu(dense(d, ws[6], bs[6]))
    r = relu(dense(d, ws[7], bs[7]))
    recon = r * params["dec3_scale"] + params["dec3_shift"]
    cls = jax.nn.sigmoid(dense(latent, ws[8], bs[8]))
    return latent, recon, cls


# ----------------------------------- Main ------------------------------------

if __name__ == "__main__":
    key = jax.random.PRNGKey(0)
    k_params, k_x = jax.random.split(key)

    batch = 8
    input_dim = 64
    bottleneck_dim = 16

    params = init_autoencoder_params(k_params, input_dim, bottleneck_dim)
    x = jax.random.normal(k_x, (batch, input_dim), jnp.float32)

    latent, reconstruction, classification = autoencoder_forward(params, x)
    jax.block_until_ready((latent, reconstruction, classification))

    assert latent.shape == (batch, bottleneck_dim)
    assert reconstruction.shape == (batch, input_dim)
    assert classification.shape == (batch, 1)
    assert bool(jnp.all(jnp.isfinite(latent)))
    assert bool(jnp.all(jnp.isfinite(reconstruction)))
    assert bool(jnp.all((classification >= 0.0) & (classification <= 1.0)))

    # Cross-check the fused kernel against a plain-JAX reference that uses the
    # exact same (folded, padded, bf16) parameters.
    ref_lat, ref_rec, ref_cls = jax.jit(reference_forward)(params, x)
    np.testing.assert_allclose(np.asarray(latent), np.asarray(ref_lat),
                               rtol=1e-2, atol=1e-2)
    np.testing.assert_allclose(np.asarray(reconstruction), np.asarray(ref_rec),
                               rtol=1e-2, atol=1e-2)
    np.testing.assert_allclose(np.asarray(classification), np.asarray(ref_cls),
                               rtol=1e-2, atol=1e-2)

    print("KERNEL_OK")
</pallas_src>

<mosaic_0001>
module attributes {stable_mosaic.version = 11 : i64} {
  func.func @_fused_autoencoder_kernel(%arg0: i32, %arg1: memref<8x64xf32, #tpu.memory_space<vmem>>, %arg2: memref<64x1408xbf16, #tpu.memory_space<vmem>>, %arg3: memref<1x1408xf32, #tpu.memory_space<vmem>>, %arg4: memref<1408x256xbf16, #tpu.memory_space<vmem>>, %arg5: memref<1x256xf32, #tpu.memory_space<vmem>>, %arg6: memref<256x128xbf16, #tpu.memory_space<vmem>>, %arg7: memref<1x128xf32, #tpu.memory_space<vmem>>, %arg8: memref<128x16xbf16, #tpu.memory_space<vmem>>, %arg9: memref<1x16xf32, #tpu.memory_space<vmem>>, %arg10: memref<16x128xbf16, #tpu.memory_space<vmem>>, %arg11: memref<1x128xf32, #tpu.memory_space<vmem>>, %arg12: memref<128x256xbf16, #tpu.memory_space<vmem>>, %arg13: memref<1x256xf32, #tpu.memory_space<vmem>>, %arg14: memref<256x1408xbf16, #tpu.memory_space<vmem>>, %arg15: memref<1x1408xf32, #tpu.memory_space<vmem>>, %arg16: memref<1408x64xbf16, #tpu.memory_space<vmem>>, %arg17: memref<1x64xf32, #tpu.memory_space<vmem>>, %arg18: memref<1x64xf32, #tpu.memory_space<vmem>>, %arg19: memref<1x64xf32, #tpu.memory_space<vmem>>, %arg20: memref<16x1xbf16, #tpu.memory_space<vmem>>, %arg21: memref<1x1xf32, #tpu.memory_space<vmem>>, %arg22: memref<8x16xf32, #tpu.memory_space<vmem>>, %arg23: memref<8x64xf32, #tpu.memory_space<vmem>>, %arg24: memref<8x1xf32, #tpu.memory_space<vmem>>) attributes {dimension_semantics = [#tpu.dimension_semantics<parallel>], iteration_bounds = array<i64: 1>, scalar_prefetch = 0 : i64, scratch_operands = 0 : i64, tpu.core_type = #tpu.core_type<tc>, window_params = [{transform_indices = @transform_0, window_bounds = array<i64: 8, 64>}, {pipeline_mode = #tpu.pipeline_mode<synchronous>, transform_indices = @transform_1, window_bounds = array<i64: 64, 1408>}, {pipeline_mode = #tpu.pipeline_mode<synchronous>, transform_indices = @transform_2, window_bounds = array<i64: 1, 1408>}, {pipeline_mode = #tpu.pipeline_mode<synchronous>, transform_indices = @transform_3, window_bounds = array<i64: 1408, 256>}, {pipeline_mode = #tpu.pipeline_mode<synchronous>, transform_indices = @transform_4, window_bounds = array<i64: 1, 256>}, {pipeline_mode = #tpu.pipeline_mode<synchronous>, transform_indices = @transform_5, window_bounds = array<i64: 256, 128>}, {pipeline_mode = #tpu.pipeline_mode<synchronous>, transform_indices = @transform_6, window_bounds = array<i64: 1, 128>}, {pipeline_mode = #tpu.pipeline_mode<synchronous>, transform_indices = @transform_7, window_bounds = array<i64: 128, 16>}, {pipeline_mode = #tpu.pipeline_mode<synchronous>, transform_indices = @transform_8, window_bounds = array<i64: 1, 16>}, {pipeline_mode = #tpu.pipeline_mode<synchronous>, transform_indices = @transform_9, window_bounds = array<i64: 16, 128>}, {pipeline_mode = #tpu.pipeline_mode<synchronous>, transform_indices = @transform_10, window_bounds = array<i64: 1, 128>}, {pipeline_mode = #tpu.pipeline_mode<synchronous>, transform_indices = @transform_11, window_bounds = array<i64: 128, 256>}, {pipeline_mode = #tpu.pipeline_mode<synchronous>, transform_indices = @transform_12, window_bounds = array<i64: 1, 256>}, {pipeline_mode = #tpu.pipeline_mode<synchronous>, transform_indices = @transform_13, window_bounds = array<i64: 256, 1408>}, {pipeline_mode = #tpu.pipeline_mode<synchronous>, transform_indices = @transform_14, window_bounds = array<i64: 1, 1408>}, {pipeline_mode = #tpu.pipeline_mode<synchronous>, transform_indices = @transform_15, window_bounds = array<i64: 1408, 64>}, {pipeline_mode = #tpu.pipeline_mode<synchronous>, transform_indices = @transform_16, window_bounds = array<i64: 1, 64>}, {pipeline_mode = #tpu.pipeline_mode<synchronous>, transform_indices = @transform_17, window_bounds = array<i64: 1, 64>}, {pipeline_mode = #tpu.pipeline_mode<synchronous>, transform_indices = @transform_18, window_bounds = array<i64: 1, 64>}, {pipeline_mode = #tpu.pipeline_mode<synchronous>, transform_indices = @transform_19, window_bounds = array<i64: 16, 1>}, {pipeline_mode = #tpu.pipeline_mode<synchronous>, transform_indices = @transform_20, window_bounds = array<i64: 1, 1>}, {transform_indices = @transform_21, window_bounds = array<i64: 8, 16>}, {transform_indices = @transform_22, window_bounds = array<i64: 8, 64>}, {transform_indices = @transform_23, window_bounds = array<i64: 8, 1>}]} {
    %c0 = arith.constant 0 : index
    %c0_0 = arith.constant 0 : index
    %0 = vector.load %arg1[%c0, %c0_0] : memref<8x64xf32, #tpu.memory_space<vmem>>, vector<8x64xf32>
    %1 = arith.truncf %0 : vector<8x64xf32> to vector<8x64xbf16>
    %c0_1 = arith.constant 0 : index
    %c0_2 = arith.constant 0 : index
    %2 = vector.load %arg2[%c0_1, %c0_2] : memref<64x1408xbf16, #tpu.memory_space<vmem>>, vector<64x1408xbf16>
    %cst = arith.constant dense<0.000000e+00> : vector<8x1408xf32>
    %3 = tpu.matmul %1, %2, %cst {dimension_numbers = #tpu.dot_dimension_numbers<[1], [0], [0], [1], [0, 0, 1, 1], [], []>} : vector<8x64xbf16>, vector<64x1408xbf16>, vector<8x1408xf32> -> vector<8x1408xf32>
    %c0_3 = arith.constant 0 : index
    %c0_4 = arith.constant 0 : index
    %4 = vector.load %arg3[%c0_3, %c0_4] : memref<1x1408xf32, #tpu.memory_space<vmem>>, vector<1x1408xf32>
    %5 = vector.broadcast %4 : vector<1x1408xf32> to vector<8x1408xf32>
    %6 = arith.addf %3, %5 : vector<8x1408xf32>
    %cst_5 = arith.constant 0.000000e+00 : f32
    %7 = vector.broadcast %cst_5 : f32 to vector<8x1408xf32>
    %8 = arith.maximumf %6, %7 : vector<8x1408xf32>
    %9 = arith.truncf %8 : vector<8x1408xf32> to vector<8x1408xbf16>
    %c0_6 = arith.constant 0 : index
    %c0_7 = arith.constant 0 : index
    %10 = vector.load %arg4[%c0_6, %c0_7] : memref<1408x256xbf16, #tpu.memory_space<vmem>>, vector<1408x256xbf16>
    %cst_8 = arith.constant dense<0.000000e+00> : vector<8x256xf32>
    %11 = tpu.matmul %9, %10, %cst_8 {dimension_numbers = #tpu.dot_dimension_numbers<[1], [0], [0], [1], [0, 0, 1, 1], [], []>} : vector<8x1408xbf16>, vector<1408x256xbf16>, vector<8x256xf32> -> vector<8x256xf32>
    %c0_9 = arith.constant 0 : index
    %c0_10 = arith.constant 0 : index
    %12 = vector.load %arg5[%c0_9, %c0_10] : memref<1x256xf32, #tpu.memory_space<vmem>>, vector<1x256xf32>
    %13 = vector.broadcast %12 : vector<1x256xf32> to vector<8x256xf32>
    %14 = arith.addf %11, %13 : vector<8x256xf32>
    %cst_11 = arith.constant 0.000000e+00 : f32
    %15 = vector.broadcast %cst_11 : f32 to vector<8x256xf32>
    %16 = arith.maximumf %14, %15 : vector<8x256xf32>
    %17 = arith.truncf %16 : vector<8x256xf32> to vector<8x256xbf16>
    %c0_12 = arith.constant 0 : index
    %c0_13 = arith.constant 0 : index
    %18 = vector.load %arg6[%c0_12, %c0_13] : memref<256x128xbf16, #tpu.memory_space<vmem>>, vector<256x128xbf16>
    %cst_14 = arith.constant dense<0.000000e+00> : vector<8x128xf32>
    %19 = tpu.matmul %17, %18, %cst_14 {dimension_numbers = #tpu.dot_dimension_numbers<[1], [0], [0], [1], [0, 0, 1, 1], [], []>} : vector<8x256xbf16>, vector<256x128xbf16>, vector<8x128xf32> -> vector<8x128xf32>
    %c0_15 = arith.constant 0 : index
    %c0_16 = arith.constant 0 : index
    %20 = vector.load %arg7[%c0_15, %c0_16] : memref<1x128xf32, #tpu.memory_space<vmem>>, vector<1x128xf32>
    %21 = vector.broadcast %20 : vector<1x128xf32> to vector<8x128xf32>
    %22 = arith.addf %19, %21 : vector<8x128xf32>
    %cst_17 = arith.constant 0.000000e+00 : f32
    %23 = vector.broadcast %cst_17 : f32 to vector<8x128xf32>
    %24 = arith.maximumf %22, %23 : vector<8x128xf32>
    %25 = arith.truncf %24 : vector<8x128xf32> to vector<8x128xbf16>
    %c0_18 = arith.constant 0 : index
    %c0_19 = arith.constant 0 : index
    %26 = vector.load %arg8[%c0_18, %c0_19] : memref<128x16xbf16, #tpu.memory_space<vmem>>, vector<128x16xbf16>
    %cst_20 = arith.constant dense<0.000000e+00> : vector<8x16xf32>
    %27 = tpu.matmul %25, %26, %cst_20 {dimension_numbers = #tpu.dot_dimension_numbers<[1], [0], [0], [1], [0, 0, 1, 1], [], []>} : vector<8x128xbf16>, vector<128x16xbf16>, vector<8x16xf32> -> vector<8x16xf32>
    %c0_21 = arith.constant 0 : index
    %c0_22 = arith.constant 0 : index
    %28 = vector.load %arg9[%c0_21, %c0_22] : memref<1x16xf32, #tpu.memory_space<vmem>>, vector<1x16xf32>
    %29 = vector.broadcast %28 : vector<1x16xf32> to vector<8x16xf32>
    %30 = arith.addf %27, %29 : vector<8x16xf32>
    %c0_23 = arith.constant 0 : index
    %c0_24 = arith.constant 0 : index
    %31 = vector.load %arg22[%c0_23, %c0_24] : memref<8x16xf32, #tpu.memory_space<vmem>>, vector<8x16xf32>
    tpu.vector_store %arg22[%c0_23, %c0_24], %30 {strides = array<i32>} : memref<8x16xf32, #tpu.memory_space<vmem>>, vector<8x16xf32>,
    %32 = arith.truncf %30 : vector<8x16xf32> to vector<8x16xbf16>
    %c0_25 = arith.constant 0 : index
    %c0_26 = arith.constant 0 : index
    %33 = vector.load %arg10[%c0_25, %c0_26] : memref<16x128xbf16, #tpu.memory_space<vmem>>, vector<16x128xbf16>
    %cst_27 = arith.constant dense<0.000000e+00> : vector<8x128xf32>
    %34 = tpu.matmul %32, %33, %cst_27 {dimension_numbers = #tpu.dot_dimension_numbers<[1], [0], [0], [1], [0, 0, 1, 1], [], []>} : vector<8x16xbf16>, vector<16x128xbf16>, vector<8x128xf32> -> vector<8x128xf32>
    %c0_28 = arith.constant 0 : index
    %c0_29 = arith.constant 0 : index
    %35 = vector.load %arg11[%c0_28, %c0_29] : memref<1x128xf32, #tpu.memory_space<vmem>>, vector<1x128xf32>
    %36 = vector.broadcast %35 : vector<1x128xf32> to vector<8x128xf32>
    %37 = arith.addf %34, %36 : vector<8x128xf32>
    %cst_30 = arith.constant 0.000000e+00 : f32
    %38 = vector.broadcast %cst_30 : f32 to vector<8x128xf32>
    %39 = arith.maximumf %37, %38 : vector<8x128xf32>
    %40 = arith.truncf %39 : vector<8x128xf32> to vector<8x128xbf16>
    %c0_31 = arith.constant 0 : index
    %c0_32 = arith.constant 0 : index
    %41 = vector.load %arg12[%c0_31, %c0_32] : memref<128x256xbf16, #tpu.memory_space<vmem>>, vector<128x256xbf16>
    %cst_33 = arith.constant dense<0.000000e+00> : vector<8x256xf32>
    %42 = tpu.matmul %40, %41, %cst_33 {dimension_numbers = #tpu.dot_dimension_numbers<[1], [0], [0], [1], [0, 0, 1, 1], [], []>} : vector<8x128xbf16>, vector<128x256xbf16>, vector<8x256xf32> -> vector<8x256xf32>
    %c0_34 = arith.constant 0 : index
    %c0_35 = arith.constant 0 : index
    %43 = vector.load %arg13[%c0_34, %c0_35] : memref<1x256xf32, #tpu.memory_space<vmem>>, vector<1x256xf32>
    %44 = vector.broadcast %43 : vector<1x256xf32> to vector<8x256xf32>
    %45 = arith.addf %42, %44 : vector<8x256xf32>
    %cst_36 = arith.constant 0.000000e+00 : f32
    %46 = vector.broadcast %cst_36 : f32 to vector<8x256xf32>
    %47 = arith.maximumf %45, %46 : vector<8x256xf32>
    %48 = arith.truncf %47 : vector<8x256xf32> to vector<8x256xbf16>
    %c0_37 = arith.constant 0 : index
    %c0_38 = arith.constant 0 : index
    %49 = vector.load %arg14[%c0_37, %c0_38] : memref<256x1408xbf16, #tpu.memory_space<vmem>>, vector<256x1408xbf16>
    %cst_39 = arith.constant dense<0.000000e+00> : vector<8x1408xf32>
    %50 = tpu.matmul %48, %49, %cst_39 {dimension_numbers = #tpu.dot_dimension_numbers<[1], [0], [0], [1], [0, 0, 1, 1], [], []>} : vector<8x256xbf16>, vector<256x1408xbf16>, vector<8x1408xf32> -> vector<8x1408xf32>
    %c0_40 = arith.constant 0 : index
    %c0_41 = arith.constant 0 : index
    %51 = vector.load %arg15[%c0_40, %c0_41] : memref<1x1408xf32, #tpu.memory_space<vmem>>, vector<1x1408xf32>
    %52 = vector.broadcast %51 : vector<1x1408xf32> to vector<8x1408xf32>
    %53 = arith.addf %50, %52 : vector<8x1408xf32>
    %cst_42 = arith.constant 0.000000e+00 : f32
    %54 = vector.broadcast %cst_42 : f32 to vector<8x1408xf32>
    %55 = arith.maximumf %53, %54 : vector<8x1408xf32>
    %56 = arith.truncf %55 : vector<8x1408xf32> to vector<8x1408xbf16>
    %c0_43 = arith.constant 0 : index
    %c0_44 = arith.constant 0 : index
    %57 = vector.load %arg16[%c0_43, %c0_44] : memref<1408x64xbf16, #tpu.memory_space<vmem>>, vector<1408x64xbf16>
    %cst_45 = arith.constant dense<0.000000e+00> : vector<8x64xf32>
    %58 = tpu.matmul %56, %57, %cst_45 {dimension_numbers = #tpu.dot_dimension_numbers<[1], [0], [0], [1], [0, 0, 1, 1], [], []>} : vector<8x1408xbf16>, vector<1408x64xbf16>, vector<8x64xf32> -> vector<8x64xf32>
    %c0_46 = arith.constant 0 : index
    %c0_47 = arith.constant 0 : index
    %59 = vector.load %arg17[%c0_46, %c0_47] : memref<1x64xf32, #tpu.memory_space<vmem>>, vector<1x64xf32>
    %60 = vector.broadcast %59 : vector<1x64xf32> to vector<8x64xf32>
    %61 = arith.addf %58, %60 : vector<8x64xf32>
    %cst_48 = arith.constant 0.000000e+00 : f32
    %62 = vector.broadcast %cst_48 : f32 to vector<8x64xf32>
    %63 = arith.maximumf %61, %62 : vector<8x64xf32>
    %c0_49 = arith.constant 0 : index
    %c0_50 = arith.constant 0 : index
    %64 = vector.load %arg18[%c0_49, %c0_50] : memref<1x64xf32, #tpu.memory_space<vmem>>, vector<1x64xf32>
    %65 = vector.broadcast %64 : vector<1x64xf32> to vector<8x64xf32>
    %66 = arith.mulf %63, %65 : vector<8x64xf32>
    %c0_51 = arith.constant 0 : index
    %c0_52 = arith.constant 0 : index
    %67 = vector.load %arg19[%c0_51, %c0_52] : memref<1x64xf32, #tpu.memory_space<vmem>>, vector<1x64xf32>
    %68 = vector.broadcast %67 : vector<1x64xf32> to vector<8x64xf32>
    %69 = arith.addf %66, %68 : vector<8x64xf32>
    %c0_53 = arith.constant 0 : index
    %c0_54 = arith.constant 0 : index
    %70 = vector.load %arg23[%c0_53, %c0_54] : memref<8x64xf32, #tpu.memory_space<vmem>>, vector<8x64xf32>
    tpu.vector_store %arg23[%c0_53, %c0_54], %69 {strides = array<i32>} : memref<8x64xf32, #tpu.memory_space<vmem>>, vector<8x64xf32>,
    %71 = arith.truncf %30 : vector<8x16xf32> to vector<8x16xbf16>
    %c0_55 = arith.constant 0 : index
    %c0_56 = arith.constant 0 : index
    %72 = vector.load %arg20[%c0_55, %c0_56] : memref<16x1xbf16, #tpu.memory_space<vmem>>, vector<16x1xbf16>
    %cst_57 = arith.constant dense<0.000000e+00> : vector<8x1xf32>
    %73 = tpu.matmul %71, %72, %cst_57 {dimension_numbers = #tpu.dot_dimension_numbers<[1], [0], [0], [1], [0, 0, 1, 1], [], []>} : vector<8x16xbf16>, vector<16x1xbf16>, vector<8x1xf32> -> vector<8x1xf32>
    %c0_58 = arith.constant 0 : index
    %c0_59 = arith.constant 0 : index
    %74 = vector.load %arg21[%c0_58, %c0_59] : memref<1x1xf32, #tpu.memory_space<vmem>>, vector<1x1xf32>
    %75 = vector.broadcast %74 : vector<1x1xf32> to vector<8x1xf32>
    %76 = arith.addf %73, %75 : vector<8x1xf32>
    %77 = arith.negf %76 : vector<8x1xf32>
    %78 = math.exp %77 : vector<8x1xf32>
    %cst_60 = arith.constant 1.000000e+00 : f32
    %79 = vector.broadcast %cst_60 : f32 to vector<8x1xf32>
    %80 = arith.addf %79, %78 : vector<8x1xf32>
    %81 = arith.divf %79, %80 : vector<8x1xf32>
    %c0_61 = arith.constant 0 : index
    %c0_62 = arith.constant 0 : index
    %82 = vector.load %arg24[%c0_61, %c0_62] : memref<8x1xf32, #tpu.memory_space<vmem>>, vector<8x1xf32>
    tpu.vector_store %arg24[%c0_61, %c0_62], %81 {strides = array<i32>} : memref<8x1xf32, #tpu.memory_space<vmem>>, vector<8x1xf32>,
    return
  }
  func.func @transform_0(%arg0: i32) -> (i32, i32) {
    %c0_i32 = arith.constant 0 : i32
    %c0_i32_0 = arith.constant 0 : i32
    return %arg0, %c0_i32 : i32, i32
  }
  func.func @transform_1(%arg0: i32) -> (i32, i32) {
    %c0_i32 = arith.constant 0 : i32
    %c0_i32_0 = arith.constant 0 : i32
    %c0_i32_1 = arith.constant 0 : i32
    return %c0_i32, %c0_i32_0 : i32, i32
  }
  func.func @transform_2(%arg0: i32) -> (i32, i32) {
    %c0_i32 = arith.constant 0 : i32
    %c0_i32_0 = arith.constant 0 : i32
    %c0_i32_1 = arith.constant 0 : i32
    return %c0_i32, %c0_i32_0 : i32, i32
  }
  func.func @transform_3(%arg0: i32) -> (i32, i32) {
    %c0_i32 = arith.constant 0 : i32
    %c0_i32_0 = arith.constant 0 : i32
    %c0_i32_1 = arith.constant 0 : i32
    return %c0_i32, %c0_i32_0 : i32, i32
  }
  func.func @transform_4(%arg0: i32) -> (i32, i32) {
    %c0_i32 = arith.constant 0 : i32
    %c0_i32_0 = arith.constant 0 : i32
    %c0_i32_1 = arith.constant 0 : i32
    return %c0_i32, %c0_i32_0 : i32, i32
  }
  func.func @transform_5(%arg0: i32) -> (i32, i32) {
    %c0_i32 = arith.constant 0 : i32
    %c0_i32_0 = arith.constant 0 : i32
    %c0_i32_1 = arith.constant 0 : i32
    return %c0_i32, %c0_i32_0 : i32, i32
  }
  func.func @transform_6(%arg0: i32) -> (i32, i32) {
    %c0_i32 = arith.constant 0 : i32
    %c0_i32_0 = arith.constant 0 : i32
    %c0_i32_1 = arith.constant 0 : i32
    return %c0_i32, %c0_i32_0 : i32, i32
  }
  func.func @transform_7(%arg0: i32) -> (i32, i32) {
    %c0_i32 = arith.constant 0 : i32
    %c0_i32_0 = arith.constant 0 : i32
    %c0_i32_1 = arith.constant 0 : i32
    return %c0_i32, %c0_i32_0 : i32, i32
  }
  func.func @transform_8(%arg0: i32) -> (i32, i32) {
    %c0_i32 = arith.constant 0 : i32
    %c0_i32_0 = arith.constant 0 : i32
    %c0_i32_1 = arith.constant 0 : i32
    return %c0_i32, %c0_i32_0 : i32, i32
  }
  func.func @transform_9(%arg0: i32) -> (i32, i32) {
    %c0_i32 = arith.constant 0 : i32
    %c0_i32_0 = arith.constant 0 : i32
    %c0_i32_1 = arith.constant 0 : i32
    return %c0_i32, %c0_i32_0 : i32, i32
  }
  func.func @transform_10(%arg0: i32) -> (i32, i32) {
    %c0_i32 = arith.constant 0 : i32
    %c0_i32_0 = arith.constant 0 : i32
    %c0_i32_1 = arith.constant 0 : i32
    return %c0_i32, %c0_i32_0 : i32, i32
  }
  func.func @transform_11(%arg0: i32) -> (i32, i32) {
    %c0_i32 = arith.constant 0 : i32
    %c0_i32_0 = arith.constant 0 : i32
    %c0_i32_1 = arith.constant 0 : i32
    return %c0_i32, %c0_i32_0 : i32, i32
  }
  func.func @transform_12(%arg0: i32) -> (i32, i32) {
    %c0_i32 = arith.constant 0 : i32
    %c0_i32_0 = arith.constant 0 : i32
    %c0_i32_1 = arith.constant 0 : i32
    return %c0_i32, %c0_i32_0 : i32, i32
  }
  func.func @transform_13(%arg0: i32) -> (i32, i32) {
    %c0_i32 = arith.constant 0 : i32
    %c0_i32_0 = arith.constant 0 : i32
    %c0_i32_1 = arith.constant 0 : i32
    return %c0_i32, %c0_i32_0 : i32, i32
  }
  func.func @transform_14(%arg0: i32) -> (i32, i32) {
    %c0_i32 = arith.constant 0 : i32
    %c0_i32_0 = arith.constant 0 : i32
    %c0_i32_1 = arith.constant 0 : i32
    return %c0_i32, %c0_i32_0 : i32, i32
  }
  func.func @transform_15(%arg0: i32) -> (i32, i32) {
    %c0_i32 = arith.constant 0 : i32
    %c0_i32_0 = arith.constant 0 : i32
    %c0_i32_1 = arith.constant 0 : i32
    return %c0_i32, %c0_i32_0 : i32, i32
  }
  func.func @transform_16(%arg0: i32) -> (i32, i32) {
    %c0_i32 = arith.constant 0 : i32
    %c0_i32_0 = arith.constant 0 : i32
    %c0_i32_1 = arith.constant 0 : i32
    return %c0_i32, %c0_i32_0 : i32, i32
  }
  func.func @transform_17(%arg0: i32) -> (i32, i32) {
    %c0_i32 = arith.constant 0 : i32
    %c0_i32_0 = arith.constant 0 : i32
    %c0_i32_1 = arith.constant 0 : i32
    return %c0_i32, %c0_i32_0 : i32, i32
  }
  func.func @transform_18(%arg0: i32) -> (i32, i32) {
    %c0_i32 = arith.constant 0 : i32
    %c0_i32_0 = arith.constant 0 : i32
    %c0_i32_1 = arith.constant 0 : i32
    return %c0_i32, %c0_i32_0 : i32, i32
  }
  func.func @transform_19(%arg0: i32) -> (i32, i32) {
    %c0_i32 = arith.constant 0 : i32
    %c0_i32_0 = arith.constant 0 : i32
    %c0_i32_1 = arith.constant 0 : i32
    return %c0_i32, %c0_i32_0 : i32, i32
  }
  func.func @transform_20(%arg0: i32) -> (i32, i32) {
    %c0_i32 = arith.constant 0 : i32
    %c0_i32_0 = arith.constant 0 : i32
    %c0_i32_1 = arith.constant 0 : i32
    return %c0_i32, %c0_i32_0 : i32, i32
  }
  func.func @transform_21(%arg0: i32) -> (i32, i32) {
    %c0_i32 = arith.constant 0 : i32
    %c0_i32_0 = arith.constant 0 : i32
    return %arg0, %c0_i32 : i32, i32
  }
  func.func @transform_22(%arg0: i32) -> (i32, i32) {
    %c0_i32 = arith.constant 0 : i32
    %c0_i32_0 = arith.constant 0 : i32
    return %arg0, %c0_i32 : i32, i32
  }
  func.func @transform_23(%arg0: i32) -> (i32, i32) {
    %c0_i32 = arith.constant 0 : i32
    %c0_i32_0 = arith.constant 0 : i32
    return %arg0, %c0_i32 : i32, i32
  }
}

</mosaic_0001>

<llo_original>
// kernel: autoencoder_forward.1
$region0: #{autoencoder_forward.1}
  #allocation0 [shape = 'u32[]', space=smem, size = 0x4, offset = 0x4, fixed_abs, tag = 'smem constant byte address 0x4 - core index']
  #allocation1 [shape = 'u32[144,128]{1,0:T(1,128)}', space=vmem, size = 0x12000, scoped, tag = 'internal scratch']
  #allocation2 [shape = 'f32[1,1]{1,0:T(1,128)S(1)}', space=vmem, size = 0x200, scoped, tag = 'scoped memory for autoencoder_forward.1']
  %s0 = inlined_call_operand.vmem [shape: f32[8,64], index: 0, kind: input, shape index: {}]
  %s1 = inlined_call_operand.vmem [shape: bf16[64,1408], index: 1, kind: input, shape index: {}]
  %s2 = inlined_call_operand.vmem [shape: f32[1,1408], index: 2, kind: input, shape index: {}]
  %s3 = inlined_call_operand.hbm [shape: bf16[1408,256], index: 3, kind: input, shape index: {}]
  %s4 = inlined_call_operand.vmem [shape: f32[1,256], index: 4, kind: input, shape index: {}]
  %s5 = inlined_call_operand.vmem [shape: bf16[256,128], index: 5, kind: input, shape index: {}]
  %s6 = inlined_call_operand.vmem [shape: f32[1,128], index: 6, kind: input, shape index: {}]
  %s7 = inlined_call_operand.vmem [shape: bf16[128,16], index: 7, kind: input, shape index: {}]
  %s8 = inlined_call_operand.vmem [shape: f32[1,16], index: 8, kind: input, shape index: {}]
  %s9 = inlined_call_operand.vmem [shape: bf16[16,128], index: 9, kind: input, shape index: {}]
  %s10 = inlined_call_operand.vmem [shape: f32[1,128], index: 10, kind: input, shape index: {}]
  %s11 = inlined_call_operand.vmem [shape: bf16[128,256], index: 11, kind: input, shape index: {}]
  %s12 = inlined_call_operand.vmem [shape: f32[1,256], index: 12, kind: input, shape index: {}]
  %s13 = inlined_call_operand.hbm [shape: bf16[256,1408], index: 13, kind: input, shape index: {}]
  %s14 = inlined_call_operand.vmem [shape: f32[1,1408], index: 14, kind: input, shape index: {}]
  %s15 = inlined_call_operand.vmem [shape: bf16[1408,64], index: 15, kind: input, shape index: {}]
  %s16 = inlined_call_operand.vmem [shape: f32[1,64], index: 16, kind: input, shape index: {}]
  %s17 = inlined_call_operand.vmem [shape: f32[1,64], index: 17, kind: input, shape index: {}]
  %s18 = inlined_call_operand.vmem [shape: f32[1,64], index: 18, kind: input, shape index: {}]
  %s19 = inlined_call_operand.vmem [shape: bf16[16,1], index: 19, kind: input, shape index: {}]
  %s20 = inlined_call_operand.<no memory space> [shape: f32[1,1], index: 20, kind: input, shape index: {}]
  %s21 = inlined_call_operand.hbm [shape: f32[8,16], index: 21, kind: output, shape index: {0}]
  %s22 = inlined_call_operand.hbm [shape: f32[8,64], index: 22, kind: output, shape index: {1}]
  %s23 = inlined_call_operand.vmem [shape: f32[8,1], index: 23, kind: output, shape index: {2}]
  %24 = xla_tuple %s21, %s22, %s23
  %s25 = sld [smem:[#allocation0]]
  $region118: #{autoencoder_forward.1} parent=0
    _
  %s27 = ssub.s32 1, %s25
  %s28 = scalar_select 0, %s27, %s25
  %v29 = vstv %s20
  %30 = vst [vmem:[#allocation2] sm:$0x1] %v29
  $region1: #{autoencoder_forward.1} parent=0
    #allocation3 [shape = 'u8[720896]{0}', space=vmem, size = 0xb0000, scoped, tag = 'input window, operand 3, single buffered']
    #allocation4 [shape = 's32[1]{0}', space=sflag, size = 0x4, scoped, tag = 'scoped memory for autoencoder_forward.1']
    #allocation5 [shape = 's32[1]{0}', space=sflag, size = 0x4, scoped, tag = 'scoped memory for autoencoder_forward.1']
    #allocation6 [shape = 'u8[720896]{0}', space=vmem, size = 0xb0000, scoped, tag = 'input window, operand 13, single buffered']
    #allocation7 [shape = 's32[1]{0}', space=sflag, size = 0x4, scoped, tag = 'scoped memory for autoencoder_forward.1']
    #allocation8 [shape = 'u8[4096]{0}', space=vmem, size = 0x1000, scoped, tag = 'output window, operand 0, single buffered']
    #allocation9 [shape = 'u8[4096]{0}', space=vmem, size = 0x1000, scoped, tag = 'output window, operand 1, single buffered']
    #allocation10 [shape = 's32[1]{0}', space=sflag, size = 0x4, scoped, tag = 'scoped memory for autoencoder_forward.1']
    %31 = vsyncpa [#allocation4], 0
    %32 = vsyncpa [#allocation7], 0
    %33 = vsyncpa [#allocation5], 0
    %34 = vsyncpa [#allocation10], 0
    // Predicated region
    $region2: #{autoencoder_forward.1} parent=1 // pred_check
      _
    $region3: #{autoencoder_forward.1} parent=1 // pred_check_branch
      %36 = sbr.rel (0) target = $region5
    $region4: #{autoencoder_forward.1} parent=1 // pred_region
      _
    $region5: #{autoencoder_forward.1} parent=1 // pred_fallthru
      _
    // Predicated region
    $region6: #{autoencoder_forward.1} parent=1 // pred_check
      _
    $region7: #{autoencoder_forward.1} parent=1 // pred_check_branch
      %38 = sbr.rel (0) target = $region9
    $region8: #{autoencoder_forward.1} parent=1 // pred_region
      _
    $region9: #{autoencoder_forward.1} parent=1 // pred_fallthru
      _
    // Predicated region
    $region10: #{autoencoder_forward.1} parent=1 // pred_check
      _
    $region11: #{autoencoder_forward.1} parent=1 // pred_check_branch
      %40 = sbr.rel (0) target = $region13
    $region12: #{autoencoder_forward.1} parent=1 // pred_region
      _
    $region13: #{autoencoder_forward.1} parent=1 // pred_fallthru
      _
    // Predicated region
    $region14: #{autoencoder_forward.1} parent=1 // pred_check
      _
    $region15: #{autoencoder_forward.1} parent=1 // pred_check_branch
      %42 = sbr.rel (0) target = $region17
    $region16: #{autoencoder_forward.1} parent=1 // pred_region
      %s44 = ssub.s32 22528, 22528
      %45 = vsyncadd [#allocation4], %s44
      %s46 = sshll.u32 [#allocation3], 4
      %s47 = int_to_ptr.vmem [resolvable:$true] %s46
      %52 = dma.hbm_to_vmem [thread:$0]  %s3, 22528, %s47, [#allocation4], 128, 128, 8
    $region17: #{autoencoder_forward.1} parent=1 // pred_fallthru
      _
    // Predicated region
    $region18: #{autoencoder_forward.1} parent=1 // pred_check
      _
    $region19: #{autoencoder_forward.1} parent=1 // pred_check_branch
      %54 = sbr.rel (0) target = $region21
    $region20: #{autoencoder_forward.1} parent=1 // pred_region
      _
    $region21: #{autoencoder_forward.1} parent=1 // pred_fallthru
      _
    // Predicated region
    $region22: #{autoencoder_forward.1} parent=1 // pred_check
      _
    $region23: #{autoencoder_forward.1} parent=1 // pred_check_branch
      %56 = sbr.rel (0) target = $region25
    $region24: #{autoencoder_forward.1} parent=1 // pred_region
      _
    $region25: #{autoencoder_forward.1} parent=1 // pred_fallthru
      _
    // Predicated region
    $region26: #{autoencoder_forward.1} parent=1 // pred_check
      _
    $region27: #{autoencoder_forward.1} parent=1 // pred_check_branch
      %58 = sbr.rel (0) target = $region29
    $region28: #{autoencoder_forward.1} parent=1 // pred_region
      _
    $region29: #{autoencoder_forward.1} parent=1 // pred_fallthru
      _
    // Predicated region
    $region30: #{autoencoder_forward.1} parent=1 // pred_check
      _
    $region31: #{autoencoder_forward.1} parent=1 // pred_check_branch
      %60 = sbr.rel (0) target = $region33
    $region32: #{autoencoder_forward.1} parent=1 // pred_region
      _
    $region33: #{autoencoder_forward.1} parent=1 // pred_fallthru
      _
    // Predicated region
    $region34: #{autoencoder_forward.1} parent=1 // pred_check
      _
    $region35: #{autoencoder_forward.1} parent=1 // pred_check_branch
      %62 = sbr.rel (0) target = $region37
    $region36: #{autoencoder_forward.1} parent=1 // pred_region
      _
    $region37: #{autoencoder_forward.1} parent=1 // pred_fallthru
      _
    // Predicated region
    $region38: #{autoencoder_forward.1} parent=1 // pred_check
      _
    $region39: #{autoencoder_forward.1} parent=1 // pred_check_branch
      %64 = sbr.rel (0) target = $region41
    $region40: #{autoencoder_forward.1} parent=1 // pred_region
      _
    $region41: #{autoencoder_forward.1} parent=1 // pred_fallthru
      _
    // Predicated region
    $region42: #{autoencoder_forward.1} parent=1 // pred_check
      _
    $region43: #{autoencoder_forward.1} parent=1 // pred_check_branch
      %66 = sbr.rel (0) target = $region45
    $region44: #{autoencoder_forward.1} parent=1 // pred_region
      _
    $region45: #{autoencoder_forward.1} parent=1 // pred_fallthru
      _
    // Predicated region
    $region46: #{autoencoder_forward.1} parent=1 // pred_check
      _
    $region47: #{autoencoder_forward.1} parent=1 // pred_check_branch
      %68 = sbr.rel (0) target = $region49
    $region48: #{autoencoder_forward.1} parent=1 // pred_region
      _
    $region49: #{autoencoder_forward.1} parent=1 // pred_fallthru
      _
    // Predicated region
    $region50: #{autoencoder_forward.1} parent=1 // pred_check
      _
    $region51: #{autoencoder_forward.1} parent=1 // pred_check_branch
      %70 = sbr.rel (0) target = $region53
    $region52: #{autoencoder_forward.1} parent=1 // pred_region
      _
    $region53: #{autoencoder_forward.1} parent=1 // pred_fallthru
      _
    // Predicated region
    $region54: #{autoencoder_forward.1} parent=1 // pred_check
      _
    $region55: #{autoencoder_forward.1} parent=1 // pred_check_branch
      %72 = sbr.rel (0) target = $region57
    $region56: #{autoencoder_forward.1} parent=1 // pred_region
      %s74 = ssub.s32 22528, 22528
      %75 = vsyncadd [#allocation7], %s74
      %s76 = sshll.u32 [#allocation6], 4
      %s77 = int_to_ptr.vmem [resolvable:$true] %s76
      %82 = dma.hbm_to_vmem [thread:$0]  %s13, 22528, %s77, [#allocation7], 704, 704, 44
    $region57: #{autoencoder_forward.1} parent=1 // pred_fallthru
      _
    // Predicated region
    $region58: #{autoencoder_forward.1} parent=1 // pred_check
      _
    $region59: #{autoencoder_forward.1} parent=1 // pred_check_branch
      %84 = sbr.rel (0) target = $region61
    $region60: #{autoencoder_forward.1} parent=1 // pred_region
      _
    $region61: #{autoencoder_forward.1} parent=1 // pred_fallthru
      _
    // Predicated region
    $region62: #{autoencoder_forward.1} parent=1 // pred_check
      _
    $region63: #{autoencoder_forward.1} parent=1 // pred_check_branch
      %86 = sbr.rel (0) target = $region65
    $region64: #{autoencoder_forward.1} parent=1 // pred_region
      _
    $region65: #{autoencoder_forward.1} parent=1 // pred_fallthru
      _
    // Predicated region
    $region66: #{autoencoder_forward.1} parent=1 // pred_check
      _
    $region67: #{autoencoder_forward.1} parent=1 // pred_check_branch
      %88 = sbr.rel (0) target = $region69
    $region68: #{autoencoder_forward.1} parent=1 // pred_region
      _
    $region69: #{autoencoder_forward.1} parent=1 // pred_fallthru
      _
    // Predicated region
    $region70: #{autoencoder_forward.1} parent=1 // pred_check
      _
    $region71: #{autoencoder_forward.1} parent=1 // pred_check_branch
      %90 = sbr.rel (0) target = $region73
    $region72: #{autoencoder_forward.1} parent=1 // pred_region
      _
    $region73: #{autoencoder_forward.1} parent=1 // pred_fallthru
      _
    // Predicated region
    $region74: #{autoencoder_forward.1} parent=1 // pred_check
      _
    $region75: #{autoencoder_forward.1} parent=1 // pred_check_branch
      %92 = sbr.rel (0) target = $region77
    $region76: #{autoencoder_forward.1} parent=1 // pred_region
      _
    $region77: #{autoencoder_forward.1} parent=1 // pred_fallthru
      _
    // Predicated region
    $region78: #{autoencoder_forward.1} parent=1 // pred_check
      _
    $region79: #{autoencoder_forward.1} parent=1 // pred_check_branch
      %94 = sbr.rel (0) target = $region81
    $region80: #{autoencoder_forward.1} parent=1 // pred_region
      _
    $region81: #{autoencoder_forward.1} parent=1 // pred_fallthru
      _
    // Predicated region
    $region82: #{autoencoder_forward.1} parent=1 // pred_check
      _
    $region83: #{autoencoder_forward.1} parent=1 // pred_check_branch
      %96 = sbr.rel (0) target = $region85
    $region84: #{autoencoder_forward.1} parent=1 // pred_region
      _
    $region85: #{autoencoder_forward.1} parent=1 // pred_fallthru
      _
    // Predicated region
    $region86: #{autoencoder_forward.1} parent=1 // pred_check
      _
    $region87: #{autoencoder_forward.1} parent=1 // pred_check_branch
      %98 = sbr.rel (0) target = $region89
    $region88: #{autoencoder_forward.1} parent=1 // pred_region
      %99 = dma.done [#allocation4], 22528
    $region89: #{autoencoder_forward.1} parent=1 // pred_fallthru
      _
    // Predicated region
    $region90: #{autoencoder_forward.1} parent=1 // pred_check
      _
    $region91: #{autoencoder_forward.1} parent=1 // pred_check_branch
      %101 = sbr.rel (0) target = $region93
    $region92: #{autoencoder_forward.1} parent=1 // pred_region
      %102 = dma.done [#allocation7], 22528
    $region93: #{autoencoder_forward.1} parent=1 // pred_fallthru
      _
    %v104 = vld [vmem:[%s0] sm:$0xff]
    %v105 = vpack.c.bf16 %v104, %v104
    %v106 = vld [vmem:[%s1] sm:$0xff]
    %v107 = vld [vmem:[%s1 + $0x8] sm:$0xff]
    %v108 = vld [vmem:[%s1 + $0x10] sm:$0xff]
    %v109 = vld [vmem:[%s1 + $0x18] sm:$0xff]
    %v110 = vld [vmem:[%s1 + $0x20] sm:$0xff]
    %v111 = vld [vmem:[%s1 + $0x28] sm:$0xf]
    %v112 = vld [vmem:[%s1 + $0x2c] sm:$0xff]
    %v113 = vld [vmem:[%s1 + $0x34] sm:$0xff]
    %v114 = vld [vmem:[%s1 + $0x3c] sm:$0xff]
    %v115 = vld [vmem:[%s1 + $0x44] sm:$0xff]
    %v116 = vld [vmem:[%s1 + $0x4c] sm:$0xff]
    %v117 = vld [vmem:[%s1 + $0x54] sm:$0xf]
    %v118 = vld [vmem:[%s1 + $0x58] sm:$0xff]
    %v119 = vld [vmem:[%s1 + $0x60] sm:$0xff]
    %v120 = vld [vmem:[%s1 + $0x68] sm:$0xff]
    %v121 = vld [vmem:[%s1 + $0x70] sm:$0xff]
    %v122 = vld [vmem:[%s1 + $0x78] sm:$0xff]
    %v123 = vld [vmem:[%s1 + $0x80] sm:$0xf]
    %v124 = vld [vmem:[%s1 + $0x84] sm:$0xff]
    %v125 = vld [vmem:[%s1 + $0x8c] sm:$0xff]
    %v126 = vld [vmem:[%s1 + $0x94] sm:$0xff]
    %v127 = vld [vmem:[%s1 + $0x9c] sm:$0xff]
    %v128 = vld [vmem:[%s1 + $0xa4] sm:$0xff]
    %v129 = vld [vmem:[%s1 + $0xac] sm:$0xf]
    %v130 = vld [vmem:[%s1 + $0xb0] sm:$0xff]
    %v131 = vld [vmem:[%s1 + $0xb8] sm:$0xff]
    %v132 = vld [vmem:[%s1 + $0xc0] sm:$0xff]
    %v133 = vld [vmem:[%s1 + $0xc8] sm:$0xff]
    %v134 = vld [vmem:[%s1 + $0xd0] sm:$0xff]
    %v135 = vld [vmem:[%s1 + $0xd8] sm:$0xf]
    %v136 = vld [vmem:[%s1 + $0xdc] sm:$0xff]
    %v137 = vld [vmem:[%s1 + $0xe4] sm:$0xff]
    %v138 = vld [vmem:[%s1 + $0xec] sm:$0xff]
    %v139 = vld [vmem:[%s1 + $0xf4] sm:$0xff]
    %v140 = vld [vmem:[%s1 + $0xfc] sm:$0xff]
    %v141 = vld [vmem:[%s1 + $0x104] sm:$0xf]
    %v142 = vld [vmem:[%s1 + $0x108] sm:$0xff]
    %v143 = vld [vmem:[%s1 + $0x110] sm:$0xff]
    %v144 = vld [vmem:[%s1 + $0x118] sm:$0xff]
    %v145 = vld [vmem:[%s1 + $0x120] sm:$0xff]
    %v146 = vld [vmem:[%s1 + $0x128] sm:$0xff]
    %v147 = vld [vmem:[%s1 + $0x130] sm:$0xf]
    %v148 = vld [vmem:[%s1 + $0x134] sm:$0xff]
    %v149 = vld [vmem:[%s1 + $0x13c] sm:$0xff]
    %v150 = vld [vmem:[%s1 + $0x144] sm:$0xff]
    %v151 = vld [vmem:[%s1 + $0x14c] sm:$0xff]
    %v152 = vld [vmem:[%s1 + $0x154] sm:$0xff]
    %v153 = vld [vmem:[%s1 + $0x15c] sm:$0xf]
    %v154 = vld [vmem:[%s2] sm:$0xff]
    %v155 = vld [vmem:[%s2 + $0x8] sm:$0x7]
    %v158 = vlaneseq
    %v159 = vshrl.u32 %v158, 7
    %v160 = vsub.s32 0, %v159
    %v161 = vrot.slane %v154, %v160
    %v162 = vlaneseq
    %v163 = vshrl.u32 %v162, 7
    %v164 = vsub.s32 1, %v163
    %v165 = vrot.slane %v154, %v164
    %v166 = vlaneseq
    %v167 = vshrl.u32 %v166, 7
    %v168 = vsub.s32 2, %v167
    %v169 = vrot.slane %v154, %v168
    %v170 = vlaneseq
    %v171 = vshrl.u32 %v170, 7
    %v172 = vsub.s32 3, %v171
    %v173 = vrot.slane %v154, %v172
    %v174 = vlaneseq
    %v175 = vshrl.u32 %v174, 7
    %v176 = vsub.s32 4, %v175
    %v177 = vrot.slane %v154, %v176
    %v178 = vlaneseq
    %v179 = vshrl.u32 %v178, 7
    %v180 = vsub.s32 5, %v179
    %v181 = vrot.slane %v154, %v180
    %v182 = vlaneseq
    %v183 = vshrl.u32 %v182, 7
    %v184 = vsub.s32 6, %v183
    %v185 = vrot.slane %v154, %v184
    %v186 = vlaneseq
    %v187 = vshrl.u32 %v186, 7
    %v188 = vsub.s32 7, %v187
    %v189 = vrot.slane %v154, %v188
    %v190 = vlaneseq
    %v191 = vshrl.u32 %v190, 7
    %v192 = vsub.s32 0, %v191
    %v193 = vrot.slane %v155, %v192
    %v194 = vlaneseq
    %v195 = vshrl.u32 %v194, 7
    %v196 = vsub.s32 1, %v195
    %v197 = vrot.slane %v155, %v196
    %v198 = vlaneseq
    %v199 = vshrl.u32 %v198, 7
    %v200 = vsub.s32 2, %v199
    %v201 = vrot.slane %v155, %v200
    %v261 = vunpack.c.l.b16 %v106
    %v262 = vunpack.c.h.b16 %v106
    %v263 = vunpack.c.l.b16 %v107
    %v264 = vunpack.c.h.b16 %v107
    %v265 = vunpack.c.l.b16 %v108
    %v266 = vunpack.c.h.b16 %v108
    %v267 = vunpack.c.l.b16 %v109
    %v268 = vunpack.c.h.b16 %v109
    %v269 = vunpack.c.l.b16 %v110
    %v270 = vunpack.c.h.b16 %v110
    %v271 = vunpack.c.l.b16 %v111
    %v272 = vunpack.c.l.b16 %v112
    %v273 = vunpack.c.h.b16 %v112
    %v274 = vunpack.c.l.b16 %v113
    %v275 = vunpack.c.h.b16 %v113
    %v276 = vunpack.c.l.b16 %v114
    %v277 = vunpack.c.h.b16 %v114
    %v278 = vunpack.c.l.b16 %v115
    %v279 = vunpack.c.h.b16 %v115
    %v280 = vunpack.c.l.b16 %v116
    %v281 = vunpack.c.h.b16 %v116
    %v282 = vunpack.c.l.b16 %v117
    %v283 = vunpack.c.l.b16 %v118
    %v284 = vunpack.c.h.b16 %v118
    %v285 = vunpack.c.l.b16 %v119
    %v286 = vunpack.c.h.b16 %v119
    %v287 = vunpack.c.l.b16 %v120
    %v288 = vunpack.c.h.b16 %v120
    %v289 = vunpack.c.l.b16 %v121
    %v290 = vunpack.c.h.b16 %v121
    %v291 = vunpack.c.l.b16 %v122
    %v292 = vunpack.c.h.b16 %v122
    %v293 = vunpack.c.l.b16 %v123
    %v294 = vunpack.c.l.b16 %v124
    %v295 = vunpack.c.h.b16 %v124
    %v296 = vunpack.c.l.b16 %v125
    %v297 = vunpack.c.h.b16 %v125
    %v298 = vunpack.c.l.b16 %v126
    %v299 = vunpack.c.h.b16 %v126
    %v300 = vunpack.c.l.b16 %v127
    %v301 = vunpack.c.h.b16 %v127
    %v302 = vunpack.c.l.b16 %v128
    %v303 = vunpack.c.h.b16 %v128
    %v304 = vunpack.c.l.b16 %v129
    %v305 = vunpack.c.l.b16 %v130
    %v306 = vunpack.c.h.b16 %v130
    %v307 = vunpack.c.l.b16 %v131
    %v308 = vunpack.c.h.b16 %v131
    %v309 = vunpack.c.l.b16 %v132
    %v310 = vunpack.c.h.b16 %v132
    %v311 = vunpack.c.l.b16 %v133
    %v312 = vunpack.c.h.b16 %v133
    %v313 = vunpack.c.l.b16 %v134
    %v314 = vunpack.c.h.b16 %v134
    %v315 = vunpack.c.l.b16 %v135
    %v316 = vunpack.c.l.b16 %v136
    %v317 = vunpack.c.h.b16 %v136
    %v318 = vunpack.c.l.b16 %v137
    %v319 = vunpack.c.h.b16 %v137
    %v320 = vunpack.c.l.b16 %v138
    %v321 = vunpack.c.h.b16 %v138
    %v322 = vunpack.c.l.b16 %v139
    %v323 = vunpack.c.h.b16 %v139
    %v324 = vunpack.c.l.b16 %v140
    %v325 = vunpack.c.h.b16 %v140
    %v326 = vunpack.c.l.b16 %v141
    %v327 = vunpack.c.l.b16 %v142
    %v328 = vunpack.c.h.b16 %v142
    %v329 = vunpack.c.l.b16 %v143
    %v330 = vunpack.c.h.b16 %v143
    %v331 = vunpack.c.l.b16 %v144
    %v332 = vunpack.c.h.b16 %v144
    %v333 = vunpack.c.l.b16 %v145
    %v334 = vunpack.c.h.b16 %v145
    %v335 = vunpack.c.l.b16 %v146
    %v336 = vunpack.c.h.b16 %v146
    %v337 = vunpack.c.l.b16 %v147
    %v338 = vunpack.c.l.b16 %v148
    %v339 = vunpack.c.h.b16 %v148
    %v340 = vunpack.c.l.b16 %v149
    %v341 = vunpack.c.h.b16 %v149
    %v342 = vunpack.c.l.b16 %v150
    %v343 = vunpack.c.h.b16 %v150
    %v344 = vunpack.c.l.b16 %v151
    %v345 = vunpack.c.h.b16 %v151
    %v346 = vunpack.c.l.b16 %v152
    %v347 = vunpack.c.h.b16 %v152
    %v348 = vunpack.c.l.b16 %v153
    %v349 = vpack.c.b16 %v272, %v261
    %v350 = vpack.c.b16 %v273, %v262
    %v351 = vpack.c.b16 %v274, %v263
    %v352 = vpack.c.b16 %v275, %v264
    %v353 = vpack.c.b16 %v276, %v265
    %v354 = vpack.c.b16 %v277, %v266
    %v355 = vpack.c.b16 %v278, %v267
    %v356 = vpack.c.b16 %v279, %v268
    %v357 = vpack.c.b16 %v280, %v269
    %v358 = vpack.c.b16 %v281, %v270
    %v359 = vpack.c.b16 %v282, %v271
    %v360 = vpack.c.b16 %v294, %v283
    %v361 = vpack.c.b16 %v295, %v284
    %v362 = vpack.c.b16 %v296, %v285
    %v363 = vpack.c.b16 %v297, %v286
    %v364 = vpack.c.b16 %v298, %v287
    %v365 = vpack.c.b16 %v299, %v288
    %v366 = vpack.c.b16 %v300, %v289
    %v367 = vpack.c.b16 %v301, %v290
    %v368 = vpack.c.b16 %v302, %v291
    %v369 = vpack.c.b16 %v303, %v292
    %v370 = vpack.c.b16 %v304, %v293
    %v371 = vpack.c.b16 %v316, %v305
    %v372 = vpack.c.b16 %v317, %v306
    %v373 = vpack.c.b16 %v318, %v307
    %v374 = vpack.c.b16 %v319, %v308
    %v375 = vpack.c.b16 %v320, %v309
    %v376 = vpack.c.b16 %v321, %v310
    %v377 = vpack.c.b16 %v322, %v311
    %v378 = vpack.c.b16 %v323, %v312
    %v379 = vpack.c.b16 %v324, %v313
    %v380 = vpack.c.b16 %v325, %v314
    %v381 = vpack.c.b16 %v326, %v315
    %v382 = vpack.c.b16 %v338, %v327
    %v383 = vpack.c.b16 %v339, %v328
    %v384 = vpack.c.b16 %v340, %v329
    %v385 = vpack.c.b16 %v341, %v330
    %v386 = vpack.c.b16 %v342, %v331
    %v387 = vpack.c.b16 %v343, %v332
    %v388 = vpack.c.b16 %v344, %v333
    %v389 = vpack.c.b16 %v345, %v334
    %v390 = vpack.c.b16 %v346, %v335
    %v391 = vpack.c.b16 %v347, %v336
    %v392 = vpack.c.b16 %v348, %v337
    %vm437 = vcmask 523264
    %v439 = vsel %vm437, %v105, 0
    %441 = vmatprep.subr.bf16.mxu0 0
    %442 = vmatpush1.bf16.msra.mxu0 0
    %443 = vmatprep.subr.bf16.mxu0 0
    %444 = vmatpush1.bf16.msra.mxu0 0
    %445 = vmatprep.subr.bf16.mxu0 0
    %446 = vmatpush1.bf16.msra.mxu0 0
    %447 = vmatprep.subr.bf16.mxu0 0
    %448 = vmatpush1.bf16.msra.mxu0 0
    %449 = vmatprep.subr.bf16.mxu0 %v383
    %450 = vmatpush1.bf16.msra.mxu0 %v382
    %451 = vmatprep.subr.bf16.mxu0 %v372
    %452 = vmatpush1.bf16.msra.mxu0 %v371
    %453 = vmatprep.subr.bf16.mxu0 %v361
    %454 = vmatpush1.bf16.msra.mxu0 %v360
    %455 = vmatprep.subr.bf16.mxu0 %v350
    %456 = vmatpush1.bf16.msra.mxu0 %v349
    %457 = vmatprep.subr.bf16.mxu0 0
    %458 = vmatpush2.bf16.msra.mxu0 0
    %459 = vmatprep.subr.bf16.mxu0 0
    %460 = vmatpush2.bf16.msra.mxu0 0
    %461 = vmatprep.subr.bf16.mxu0 0
    %462 = vmatpush2.bf16.msra.mxu0 0
    %463 = vmatprep.subr.bf16.mxu0 0
    %464 = vmatpush2.bf16.msra.mxu0 0
    %465 = vmatprep.subr.bf16.mxu0 0
    %466 = vmatpush2.bf16.msra.mxu0 0
    %467 = vmatprep.subr.bf16.mxu0 0
    %468 = vmatpush2.bf16.msra.mxu0 0
    %469 = vmatprep.subr.bf16.mxu0 0
    %470 = vmatpush2.bf16.msra.mxu0 0
    %471 = vmatprep.subr.bf16.mxu0 0
    %472 = vmatpush2.bf16.msra.mxu0 0
    %473 = vmatprep.mubr.bf16.mxu0 0
    %474 = vmatmul.mubr.bf16.gmra.mxu0 %v439
    %v475 = vpop.f32.mrf.mxu0
    %v476 = vadd.f32 %v161, %v475
    %v477 = vpop.f32.mrf.mxu0
    %v478 = vadd.f32 %v165, %v477
    %v479 = vpop.f32.mrf.mxu0
    %v480 = vpop.f32.mrf.mxu0
    %481 = vdwg.mxu0
    %482 = vmatprep.subr.bf16.mxu0 0
    %483 = vmatpush1.bf16.msra.mxu0 0
    %484 = vmatprep.subr.bf16.mxu0 0
    %485 = vmatpush1.bf16.msra.mxu0 0
    %486 = vmatprep.subr.bf16.mxu0 0
    %487 = vmatpush1.bf16.msra.mxu0 0
    %488 = vmatprep.subr.bf16.mxu0 0
    %489 = vmatpush1.bf16.msra.mxu0 0
    %490 = vmatprep.subr.bf16.mxu0 %v385
    %491 = vmatpush1.bf16.msra.mxu0 %v384
    %492 = vmatprep.subr.bf16.mxu0 %v374
    %493 = vmatpush1.bf16.msra.mxu0 %v373
    %494 = vmatprep.subr.bf16.mxu0 %v363
    %495 = vmatpush1.bf16.msra.mxu0 %v362
    %496 = vmatprep.subr.bf16.mxu0 %v352
    %497 = vmatpush1.bf16.msra.mxu0 %v351
    %498 = vmatprep.subr.bf16.mxu0 0
    %499 = vmatpush2.bf16.msra.mxu0 0
    %500 = vmatprep.subr.bf16.mxu0 0
    %501 = vmatpush2.bf16.msra.mxu0 0
    %502 = vmatprep.subr.bf16.mxu0 0
    %503 = vmatpush2.bf16.msra.mxu0 0
    %504 = vmatprep.subr.bf16.mxu0 0
    %505 = vmatpush2.bf16.msra.mxu0 0
    %506 = vmatprep.subr.bf16.mxu0 0
    %507 = vmatpush2.bf16.msra.mxu0 0
    %508 = vmatprep.subr.bf16.mxu0 0
    %509 = vmatpush2.bf16.msra.mxu0 0
    %510 = vmatprep.subr.bf16.mxu0 0
    %511 = vmatpush2.bf16.msra.mxu0 0
    %512 = vmatprep.subr.bf16.mxu0 0
    %513 = vmatpush2.bf16.msra.mxu0 0
    %514 = vmatprep.mubr.bf16.mxu0 0
    %515 = vmatmul.mubr.bf16.gmra.mxu0 %v439
    %v516 = vpop.f32.mrf.mxu0
    %v517 = vadd.f32 %v169, %v516
    %v518 = vpop.f32.mrf.mxu0
    %v519 = vadd.f32 %v173, %v518
    %v520 = vpop.f32.mrf.mxu0
    %v521 = vpop.f32.mrf.mxu0
    %522 = vdwg.mxu0
    %523 = vmatprep.subr.bf16.mxu0 0
    %524 = vmatpush1.bf16.msra.mxu0 0
    %525 = vmatprep.subr.bf16.mxu0 0
    %526 = vmatpush1.bf16.msra.mxu0 0
    %527 = vmatprep.subr.bf16.mxu0 0
    %528 = vmatpush1.bf16.msra.mxu0 0
    %529 = vmatprep.subr.bf16.mxu0 0
    %530 = vmatpush1.bf16.msra.mxu0 0
    %531 = vmatprep.subr.bf16.mxu0 %v387
    %532 = vmatpush1.bf16.msra.mxu0 %v386
    %533 = vmatprep.subr.bf16.mxu0 %v376
    %534 = vmatpush1.bf16.msra.mxu0 %v375
    %535 = vmatprep.subr.bf16.mxu0 %v365
    %536 = vmatpush1.bf16.msra.mxu0 %v364
    %537 = vmatprep.subr.bf16.mxu0 %v354
    %538 = vmatpush1.bf16.msra.mxu0 %v353
    %539 = vmatprep.subr.bf16.mxu0 0
    %540 = vmatpush2.bf16.msra.mxu0 0
    %541 = vmatprep.subr.bf16.mxu0 0
    %542 = vmatpush2.bf16.msra.mxu0 0
    %543 = vmatprep.subr.bf16.mxu0 0
    %544 = vmatpush2.bf16.msra.mxu0 0
    %545 = vmatprep.subr.bf16.mxu0 0
    %546 = vmatpush2.bf16.msra.mxu0 0
    %547 = vmatprep.subr.bf16.mxu0 0
    %548 = vmatpush2.bf16.msra.mxu0 0
    %549 = vmatprep.subr.bf16.mxu0 0
    %550 = vmatpush2.bf16.msra.mxu0 0
    %551 = vmatprep.subr.bf16.mxu0 0
    %552 = vmatpush2.bf16.msra.mxu0 0
    %553 = vmatprep.subr.bf16.mxu0 0
    %554 = vmatpush2.bf16.msra.mxu0 0
    %555 = vmatprep.mubr.bf16.mxu0 0
    %556 = vmatmul.mubr.bf16.gmra.mxu0 %v439
    %v557 = vpop.f32.mrf.mxu0
    %v558 = vadd.f32 %v177, %v557
    %v559 = vpop.f32.mrf.mxu0
    %v560 = vadd.f32 %v181, %v559
    %v561 = vpop.f32.mrf.mxu0
    %v562 = vpop.f32.mrf.mxu0
    %563 = vdwg.mxu0
    %564 = vmatprep.subr.bf16.mxu0 0
    %565 = vmatpush1.bf16.msra.mxu0 0
    %566 = vmatprep.subr.bf16.mxu0 0
    %567 = vmatpush1.bf16.msra.mxu0 0
    %568 = vmatprep.subr.bf16.mxu0 0
    %569 = vmatpush1.bf16.msra.mxu0 0
    %570 = vmatprep.subr.bf16.mxu0 0
    %571 = vmatpush1.bf16.msra.mxu0 0
    %572 = vmatprep.subr.bf16.mxu0 %v389
    %573 = vmatpush1.bf16.msra.mxu0 %v388
    %574 = vmatprep.subr.bf16.mxu0 %v378
    %575 = vmatpush1.bf16.msra.mxu0 %v377
    %576 = vmatprep.subr.bf16.mxu0 %v367
    %577 = vmatpush1.bf16.msra.mxu0 %v366
    %578 = vmatprep.subr.bf16.mxu0 %v356
    %579 = vmatpush1.bf16.msra.mxu0 %v355
    %580 = vmatprep.subr.bf16.mxu0 0
    %581 = vmatpush2.bf16.msra.mxu0 0
    %582 = vmatprep.subr.bf16.mxu0 0
    %583 = vmatpush2.bf16.msra.mxu0 0
    %584 = vmatprep.subr.bf16.mxu0 0
    %585 = vmatpush2.bf16.msra.mxu0 0
    %586 = vmatprep.subr.bf16.mxu0 0
    %587 = vmatpush2.bf16.msra.mxu0 0
    %588 = vmatprep.subr.bf16.mxu0 0
    %589 = vmatpush2.bf16.msra.mxu0 0
    %590 = vmatprep.subr.bf16.mxu0 0
    %591 = vmatpush2.bf16.msra.mxu0 0
    %592 = vmatprep.subr.bf16.mxu0 0
    %593 = vmatpush2.bf16.msra.mxu0 0
    %594 = vmatprep.subr.bf16.mxu0 0
    %595 = vmatpush2.bf16.msra.mxu0 0
    %596 = vmatprep.mubr.bf16.mxu0 0
    %597 = vmatmul.mubr.bf16.gmra.mxu0 %v439
    %v598 = vpop.f32.mrf.mxu0
    %v599 = vadd.f32 %v185, %v598
    %v600 = vpop.f32.mrf.mxu0
    %v601 = vadd.f32 %v189, %v600
    %v602 = vpop.f32.mrf.mxu0
    %v603 = vpop.f32.mrf.mxu0
    %604 = vdwg.mxu0
    %605 = vmatprep.subr.bf16.mxu0 0
    %606 = vmatpush1.bf16.msra.mxu0 0
    %607 = vmatprep.subr.bf16.mxu0 0
    %608 = vmatpush1.bf16.msra.mxu0 0
    %609 = vmatprep.subr.bf16.mxu0 0
    %610 = vmatpush1.bf16.msra.mxu0 0
    %611 = vmatprep.subr.bf16.mxu0 0
    %612 = vmatpush1.bf16.msra.mxu0 0
    %613 = vmatprep.subr.bf16.mxu0 %v391
    %614 = vmatpush1.bf16.msra.mxu0 %v390
    %615 = vmatprep.subr.bf16.mxu0 %v380
    %616 = vmatpush1.bf16.msra.mxu0 %v379
    %617 = vmatprep.subr.bf16.mxu0 %v369
    %618 = vmatpush1.bf16.msra.mxu0 %v368
    %619 = vmatprep.subr.bf16.mxu0 %v358
    %620 = vmatpush1.bf16.msra.mxu0 %v357
    %621 = vmatprep.subr.bf16.mxu0 0
    %622 = vmatpush2.bf16.msra.mxu0 0
    %623 = vmatprep.subr.bf16.mxu0 0
    %624 = vmatpush2.bf16.msra.mxu0 0
    %625 = vmatprep.subr.bf16.mxu0 0
    %626 = vmatpush2.bf16.msra.mxu0 0
    %627 = vmatprep.subr.bf16.mxu0 0
    %628 = vmatpush2.bf16.msra.mxu0 0
    %629 = vmatprep.subr.bf16.mxu0 0
    %630 = vmatpush2.bf16.msra.mxu0 0
    %631 = vmatprep.subr.bf16.mxu0 0
    %632 = vmatpush2.bf16.msra.mxu0 0
    %633 = vmatprep.subr.bf16.mxu0 0
    %634 = vmatpush2.bf16.msra.mxu0 0
    %635 = vmatprep.subr.bf16.mxu0 0
    %636 = vmatpush2.bf16.msra.mxu0 0
    %637 = vmatprep.mubr.bf16.mxu0 0
    %638 = vmatmul.mubr.bf16.gmra.mxu0 %v439
    %v639 = vpop.f32.mrf.mxu0
    %v640 = vadd.f32 %v193, %v639
    %v641 = vpop.f32.mrf.mxu0
    %v642 = vadd.f32 %v197, %v641
    %v643 = vpop.f32.mrf.mxu0
    %v644 = vpop.f32.mrf.mxu0
    %645 = vdwg.mxu0
    %646 = vmatprep.subr.bf16.mxu0 0
    %647 = vmatpush1.bf16.msra.mxu0 0
    %648 = vmatprep.subr.bf16.mxu0 0
    %649 = vmatpush1.bf16.msra.mxu0 0
    %650 = vmatprep.subr.bf16.mxu0 0
    %651 = vmatpush1.bf16.msra.mxu0 0
    %652 = vmatprep.subr.bf16.mxu0 0
    %653 = vmatpush1.bf16.msra.mxu0 0
    %654 = vmatprep.subr.bf16.mxu0 0
    %655 = vmatpush1.bf16.msra.mxu0 %v392
    %656 = vmatprep.subr.bf16.mxu0 0
    %657 = vmatpush1.bf16.msra.mxu0 %v381
    %658 = vmatprep.subr.bf16.mxu0 0
    %659 = vmatpush1.bf16.msra.mxu0 %v370
    %660 = vmatprep.subr.bf16.mxu0 0
    %661 = vmatpush1.bf16.msra.mxu0 %v359
    %662 = vmatprep.subr.bf16.mxu0 0
    %663 = vmatpush2.bf16.msra.mxu0 0
    %664 = vmatprep.subr.bf16.mxu0 0
    %665 = vmatpush2.bf16.msra.mxu0 0
    %666 = vmatprep.subr.bf16.mxu0 0
    %667 = vmatpush2.bf16.msra.mxu0 0
    %668 = vmatprep.subr.bf16.mxu0 0
    %669 = vmatpush2.bf16.msra.mxu0 0
    %670 = vmatprep.subr.bf16.mxu0 0
    %671 = vmatpush2.bf16.msra.mxu0 0
    %672 = vmatprep.subr.bf16.mxu0 0
    %673 = vmatpush2.bf16.msra.mxu0 0
    %674 = vmatprep.subr.bf16.mxu0 0
    %675 = vmatpush2.bf16.msra.mxu0 0
    %676 = vmatprep.subr.bf16.mxu0 0
    %677 = vmatpush2.bf16.msra.mxu0 0
    %678 = vmatprep.mubr.bf16.mxu0 0
    %679 = vmatmul.mubr.bf16.gmra.mxu0 %v439
    %v680 = vpop.f32.mrf.mxu0
    %v681 = vadd.f32 %v201, %v680
    %v682 = vpop.f32.mrf.mxu0
    %v683 = vpop.f32.mrf.mxu0
    %v684 = vpop.f32.mrf.mxu0
    %685 = vdwg.mxu0
    %v686 = vmax.f32 %v476, 0.0
    %v687 = vmax.f32 %v478, 0.0
    %v688 = vmax.f32 %v517, 0.0
    %v689 = vmax.f32 %v519, 0.0
    %v690 = vmax.f32 %v558, 0.0
    %v691 = vmax.f32 %v560, 0.0
    %v692 = vmax.f32 %v599, 0.0
    %v693 = vmax.f32 %v601, 0.0
    %v694 = vmax.f32 %v640, 0.0
    %v695 = vmax.f32 %v642, 0.0
    %v696 = vmax.f32 %v681, 0.0
    %v697 = vpack.c.bf16 %v686, %v686
    %v698 = vpack.c.bf16 %v687, %v687
    %v699 = vpack.c.bf16 %v688, %v688
    %v700 = vpack.c.bf16 %v689, %v689
    %v701 = vpack.c.bf16 %v690, %v690
    %v702 = vpack.c.bf16 %v691, %v691
    %v703 = vpack.c.bf16 %v692, %v692
    %v704 = vpack.c.bf16 %v693, %v693
    %v705 = vpack.c.bf16 %v694, %v694
    %v706 = vpack.c.bf16 %v695, %v695
    %v707 = vpack.c.bf16 %v696, %v696
    %v708 = vld [vmem:[#allocation3] sm:$0xff]
    %v709 = vld [vmem:[#allocation3 + $0x8] sm:$0xff]
    %v710 = vld [vmem:[#allocation3 + $0x10] sm:$0xff]
    %v711 = vld [vmem:[#allocation3 + $0x18] sm:$0xff]
    %v712 = vld [vmem:[#allocation3 + $0x20] sm:$0xff]
    %v713 = vld [vmem:[#allocation3 + $0x28] sm:$0xff]
    %v714 = vld [vmem:[#allocation3 + $0x30] sm:$0xff]
    %v715 = vld [vmem:[#allocation3 + $0x38] sm:$0xff]
    %v716 = vld [vmem:[#allocation3 + $0x40] sm:$0xff]
    %v717 = vld [vmem:[#allocation3 + $0x48] sm:$0xff]
    %v718 = vld [vmem:[#allocation3 + $0x50] sm:$0xff]
    %v719 = vld [vmem:[#allocation3 + $0x58] sm:$0xff]
    %v720 = vld [vmem:[#allocation3 + $0x60] sm:$0xff]
    %v721 = vld [vmem:[#allocation3 + $0x68] sm:$0xff]
    %v722 = vld [vmem:[#allocation3 + $0x70] sm:$0xff]
    %v723 = vld [vmem:[#allocation3 + $0x78] sm:$0xff]
    %v724 = vld [vmem:[#allocation3 + $0x80] sm:$0xff]
    %v725 = vld [vmem:[#allocation3 + $0x88] sm:$0xff]
    %v726 = vld [vmem:[#allocation3 + $0x90] sm:$0xff]
    %v727 = vld [vmem:[#allocation3 + $0x98] sm:$0xff]
    %v728 = vld [vmem:[#allocation3 + $0xa0] sm:$0xff]
    %v729 = vld [vmem:[#allocation3 + $0xa8] sm:$0xff]
    %v730 = vld [vmem:[#allocation3 + $0xb0] sm:$0xff]
    %v731 = vld [vmem:[#allocation3 + $0xb8] sm:$0xff]
    %v732 = vld [vmem:[#allocation3 + $0xc0] sm:$0xff]
    %v733 = vld [vmem:[#allocation3 + $0xc8] sm:$0xff]
    %v734 = vld [vmem:[#allocation3 + $0xd0] sm:$0xff]
    %v735 = vld [vmem:[#allocation3 + $0xd8] sm:$0xff]
    %v736 = vld [vmem:[#allocation3 + $0xe0] sm:$0xff]
    %v737 = vld [vmem:[#allocation3 + $0xe8] sm:$0xff]
    %v738 = vld [vmem:[#allocation3 + $0xf0] sm:$0xff]
    %v739 = vld [vmem:[#allocation3 + $0xf8] sm:$0xff]
    %v740 = vld [vmem:[#allocation3 + $0x100] sm:$0xff]
    %v741 = vld [vmem:[#allocation3 + $0x108] sm:$0xff]
    %v742 = vld [vmem:[#allocation3 + $0x110] sm:$0xff]
    %v743 = vld [vmem:[#allocation3 + $0x118] sm:$0xff]
    %v744 = vld [vmem:[#allocation3 + $0x120] sm:$0xff]
    %v745 = vld [vmem:[#allocation3 + $0x128] sm:$0xff]
    %v746 = vld [vmem:[#allocation3 + $0x130] sm:$0xff]
    %v747 = vld [vmem:[#allocation3 + $0x138] sm:$0xff]
    %v748 = vld [vmem:[#allocation3 + $0x140] sm:$0xff]
    %v749 = vld [vmem:[#allocation3 + $0x148] sm:$0xff]
    %v750 = vld [vmem:[#allocation3 + $0x150] sm:$0xff]
    %v751 = vld [vmem:[#allocation3 + $0x158] sm:$0xff]
    %v752 = vld [vmem:[#allocation3 + $0x160] sm:$0xff]
    %v753 = vld [vmem:[#allocation3 + $0x168] sm:$0xff]
    %v754 = vld [vmem:[#allocation3 + $0x170] sm:$0xff]
    %v755 = vld [vmem:[#allocation3 + $0x178] sm:$0xff]
    %v756 = vld [vmem:[#allocation3 + $0x180] sm:$0xff]
    %v757 = vld [vmem:[#allocation3 + $0x188] sm:$0xff]
    %v758 = vld [vmem:[#allocation3 + $0x190] sm:$0xff]
    %v759 = vld [vmem:[#allocation3 + $0x198] sm:$0xff]
    %v760 = vld [vmem:[#allocation3 + $0x1a0] sm:$0xff]
    %v761 = vld [vmem:[#allocation3 + $0x1a8] sm:$0xff]
    %v762 = vld [vmem:[#allocation3 + $0x1b0] sm:$0xff]
    %v763 = vld [vmem:[#allocation3 + $0x1b8] sm:$0xff]
    %v764 = vld [vmem:[#allocation3 + $0x1c0] sm:$0xff]
    %v765 = vld [vmem:[#allocation3 + $0x1c8] sm:$0xff]
    %v766 = vld [vmem:[#allocation3 + $0x1d0] sm:$0xff]
    %v767 = vld [vmem:[#allocation3 + $0x1d8] sm:$0xff]
    %v768 = vld [vmem:[#allocation3 + $0x1e0] sm:$0xff]
    %v769 = vld [vmem:[#allocation3 + $0x1e8] sm:$0xff]
    %v770 = vld [vmem:[#allocation3 + $0x1f0] sm:$0xff]
    %v771 = vld [vmem:[#allocation3 + $0x1f8] sm:$0xff]
    %v772 = vld [vmem:[#allocation3 + $0x200] sm:$0xff]
    %v773 = vld [vmem:[#allocation3 + $0x208] sm:$0xff]
    %v774 = vld [vmem:[#allocation3 + $0x210] sm:$0xff]
    %v775 = vld [vmem:[#allocation3 + $0x218] sm:$0xff]
    %v776 = vld [vmem:[#allocation3 + $0x220] sm:$0xff]
    %v777 = vld [vmem:[#allocation3 + $0x228] sm:$0xff]
    %v778 = vld [vmem:[#allocation3 + $0x230] sm:$0xff]
    %v779 = vld [vmem:[#allocation3 + $0x238] sm:$0xff]
    %v780 = vld [vmem:[#allocation3 + $0x240] sm:$0xff]
    %v781 = vld [vmem:[#allocation3 + $0x248] sm:$0xff]
    %v782 = vld [vmem:[#allocation3 + $0x250] sm:$0xff]
    %v783 = vld [vmem:[#allocation3 + $0x258] sm:$0xff]
    %v784 = vld [vmem:[#allocation3 + $0x260] sm:$0xff]
    %v785 = vld [vmem:[#allocation3 + $0x268] sm:$0xff]
    %v786 = vld [vmem:[#allocation3 + $0x270] sm:$0xff]
    %v787 = vld [vmem:[#allocation3 + $0x278] sm:$0xff]
    %v788 = vld [vmem:[#allocation3 + $0x280] sm:$0xff]
    %v789 = vld [vmem:[#allocation3 + $0x288] sm:$0xff]
    %v790 = vld [vmem:[#allocation3 + $0x290] sm:$0xff]
    %v791 = vld [vmem:[#allocation3 + $0x298] sm:$0xff]
    %v792 = vld [vmem:[#allocation3 + $0x2a0] sm:$0xff]
    %v793 = vld [vmem:[#allocation3 + $0x2a8] sm:$0xff]
    %v794 = vld [vmem:[#allocation3 + $0x2b0] sm:$0xff]
    %v795 = vld [vmem:[#allocation3 + $0x2b8] sm:$0xff]
    %v796 = vld [vmem:[#allocation3 + $0x2c0] sm:$0xff]
    %v797 = vld [vmem:[#allocation3 + $0x2c8] sm:$0xff]
    %v798 = vld [vmem:[#allocation3 + $0x2d0] sm:$0xff]
    %v799 = vld [vmem:[#allocation3 + $0x2d8] sm:$0xff]
    %v800 = vld [vmem:[#allocation3 + $0x2e0] sm:$0xff]
    %v801 = vld [vmem:[#allocation3 + $0x2e8] sm:$0xff]
    %v802 = vld [vmem:[#allocation3 + $0x2f0] sm:$0xff]
    %v803 = vld [vmem:[#allocation3 + $0x2f8] sm:$0xff]
    %v804 = vld [vmem:[#allocation3 + $0x300] sm:$0xff]
    %v805 = vld [vmem:[#allocation3 + $0x308] sm:$0xff]
    %v806 = vld [vmem:[#allocation3 + $0x310] sm:$0xff]
    %v807 = vld [vmem:[#allocation3 + $0x318] sm:$0xff]
    %v808 = vld [vmem:[#allocation3 + $0x320] sm:$0xff]
    %v809 = vld [vmem:[#allocation3 + $0x328] sm:$0xff]
    %v810 = vld [vmem:[#allocation3 + $0x330] sm:$0xff]
    %v811 = vld [vmem:[#allocation3 + $0x338] sm:$0xff]
    %v812 = vld [vmem:[#allocation3 + $0x340] sm:$0xff]
    %v813 = vld [vmem:[#allocation3 + $0x348] sm:$0xff]
    %v814 = vld [vmem:[#allocation3 + $0x350] sm:$0xff]
    %v815 = vld [vmem:[#allocation3 + $0x358] sm:$0xff]
    %v816 = vld [vmem:[#allocation3 + $0x360] sm:$0xff]
    %v817 = vld [vmem:[#allocation3 + $0x368] sm:$0xff]
    %v818 = vld [vmem:[#allocation3 + $0x370] sm:$0xff]
    %v819 = vld [vmem:[#allocation3 + $0x378] sm:$0xff]
    %v820 = vld [vmem:[#allocation3 + $0x380] sm:$0xff]
    %v821 = vld [vmem:[#allocation3 + $0x388] sm:$0xff]
    %v822 = vld [vmem:[#allocation3 + $0x390] sm:$0xff]
    %v823 = vld [vmem:[#allocation3 + $0x398] sm:$0xff]
    %v824 = vld [vmem:[#allocation3 + $0x3a0] sm:$0xff]
    %v825 = vld [vmem:[#allocation3 + $0x3a8] sm:$0xff]
    %v826 = vld [vmem:[#allocation3 + $0x3b0] sm:$0xff]
    %v827 = vld [vmem:[#allocation3 + $0x3b8] sm:$0xff]
    %v828 = vld [vmem:[#allocation3 + $0x3c0] sm:$0xff]
    %v829 = vld [vmem:[#allocation3 + $0x3c8] sm:$0xff]
    %v830 = vld [vmem:[#allocation3 + $0x3d0] sm:$0xff]
    %v831 = vld [vmem:[#allocation3 + $0x3d8] sm:$0xff]
    %v832 = vld [vmem:[#allocation3 + $0x3e0] sm:$0xff]
    %v833 = vld [vmem:[#allocation3 + $0x3e8] sm:$0xff]
    %v834 = vld [vmem:[#allocation3 + $0x3f0] sm:$0xff]
    %v835 = vld [vmem:[#allocation3 + $0x3f8] sm:$0xff]
    %v836 = vld [vmem:[#allocation3 + $0x400] sm:$0xff]
    %v837 = vld [vmem:[#allocation3 + $0x408] sm:$0xff]
    %v838 = vld [vmem:[#allocation3 + $0x410] sm:$0xff]
    %v839 = vld [vmem:[#allocation3 + $0x418] sm:$0xff]
    %v840 = vld [vmem:[#allocation3 + $0x420] sm:$0xff]
    %v841 = vld [vmem:[#allocation3 + $0x428] sm:$0xff]
    %v842 = vld [vmem:[#allocation3 + $0x430] sm:$0xff]
    %v843 = vld [vmem:[#allocation3 + $0x438] sm:$0xff]
    %v844 = vld [vmem:[#allocation3 + $0x440] sm:$0xff]
    %v845 = vld [vmem:[#allocation3 + $0x448] sm:$0xff]
    %v846 = vld [vmem:[#allocation3 + $0x450] sm:$0xff]
    %v847 = vld [vmem:[#allocation3 + $0x458] sm:$0xff]
    %v848 = vld [vmem:[#allocation3 + $0x460] sm:$0xff]
    %v849 = vld [vmem:[#allocation3 + $0x468] sm:$0xff]
    %v850 = vld [vmem:[#allocation3 + $0x470] sm:$0xff]
    %v851 = vld [vmem:[#allocation3 + $0x478] sm:$0xff]
    %v852 = vld [vmem:[#allocation3 + $0x480] sm:$0xff]
    %v853 = vld [vmem:[#allocation3 + $0x488] sm:$0xff]
    %v854 = vld [vmem:[#allocation3 + $0x490] sm:$0xff]
    %v855 = vld [vmem:[#allocation3 + $0x498] sm:$0xff]
    %v856 = vld [vmem:[#allocation3 + $0x4a0] sm:$0xff]
    %v857 = vld [vmem:[#allocation3 + $0x4a8] sm:$0xff]
    %v858 = vld [vmem:[#allocation3 + $0x4b0] sm:$0xff]
    %v859 = vld [vmem:[#allocation3 + $0x4b8] sm:$0xff]
    %v860 = vld [vmem:[#allocation3 + $0x4c0] sm:$0xff]
    %v861 = vld [vmem:[#allocation3 + $0x4c8] sm:$0xff]
    %v862 = vld [vmem:[#allocation3 + $0x4d0] sm:$0xff]
    %v863 = vld [vmem:[#allocation3 + $0x4d8] sm:$0xff]
    %v864 = vld [vmem:[#allocation3 + $0x4e0] sm:$0xff]
    %v865 = vld [vmem:[#allocation3 + $0x4e8] sm:$0xff]
    %v866 = vld [vmem:[#allocation3 + $0x4f0] sm:$0xff]
    %v867 = vld [vmem:[#allocation3 + $0x4f8] sm:$0xff]
    %v868 = vld [vmem:[#allocation3 + $0x500] sm:$0xff]
    %v869 = vld [vmem:[#allocation3 + $0x508] sm:$0xff]
    %v870 = vld [vmem:[#allocation3 + $0x510] sm:$0xff]
    %v871 = vld [vmem:[#allocation3 + $0x518] sm:$0xff]
    %v872 = vld [vmem:[#allocation3 + $0x520] sm:$0xff]
    %v873 = vld [vmem:[#allocation3 + $0x528] sm:$0xff]
    %v874 = vld [vmem:[#allocation3 + $0x530] sm:$0xff]
    %v875 = vld [vmem:[#allocation3 + $0x538] sm:$0xff]
    %v876 = vld [vmem:[#allocation3 + $0x540] sm:$0xff]
    %v877 = vld [vmem:[#allocation3 + $0x548] sm:$0xff]
    %v878 = vld [vmem:[#allocation3 + $0x550] sm:$0xff]
    %v879 = vld [vmem:[#allocation3 + $0x558] sm:$0xff]
    %v880 = vld [vmem:[#allocation3 + $0x560] sm:$0xff]
    %v881 = vld [vmem:[#allocation3 + $0x568] sm:$0xff]
    %v882 = vld [vmem:[#allocation3 + $0x570] sm:$0xff]
    %v883 = vld [vmem:[#allocation3 + $0x578] sm:$0xff]
    %v884 = vld [vmem:[%s4] sm:$0x3]
    %v886 = vlaneseq
    %v887 = vshrl.u32 %v886, 7
    %v888 = vsub.s32 0, %v887
    %v889 = vrot.slane %v884, %v888
    %v890 = vlaneseq
    %v891 = vshrl.u32 %v890, 7
    %v892 = vsub.s32 1, %v891
    %v893 = vrot.slane %v884, %v892
    %v1072 = vunpack.c.l.b16 %v708
    %v1073 = vunpack.c.h.b16 %v708
    %v1074 = vunpack.c.l.b16 %v709
    %v1075 = vunpack.c.h.b16 %v709
    %v1076 = vunpack.c.l.b16 %v710
    %v1077 = vunpack.c.h.b16 %v710
    %v1078 = vunpack.c.l.b16 %v711
    %v1079 = vunpack.c.h.b16 %v711
    %v1080 = vunpack.c.l.b16 %v712
    %v1081 = vunpack.c.h.b16 %v712
    %v1082 = vunpack.c.l.b16 %v713
    %v1083 = vunpack.c.h.b16 %v713
    %v1084 = vunpack.c.l.b16 %v714
    %v1085 = vunpack.c.h.b16 %v714
    %v1086 = vunpack.c.l.b16 %v715
    %v1087 = vunpack.c.h.b16 %v715
    %v1088 = vunpack.c.l.b16 %v716
    %v1089 = vunpack.c.h.b16 %v716
    %v1090 = vunpack.c.l.b16 %v717
    %v1091 = vunpack.c.h.b16 %v717
    %v1092 = vunpack.c.l.b16 %v718
    %v1093 = vunpack.c.h.b16 %v718
    %v1094 = vunpack.c.l.b16 %v719
    %v1095 = vunpack.c.h.b16 %v719
    %v1096 = vunpack.c.l.b16 %v720
    %v1097 = vunpack.c.h.b16 %v720
    %v1098 = vunpack.c.l.b16 %v721
    %v1099 = vunpack.c.h.b16 %v721
    %v1100 = vunpack.c.l.b16 %v722
    %v1101 = vunpack.c.h.b16 %v722
    %v1102 = vunpack.c.l.b16 %v723
    %v1103 = vunpack.c.h.b16 %v723
    %v1104 = vunpack.c.l.b16 %v724
    %v1105 = vunpack.c.h.b16 %v724
    %v1106 = vunpack.c.l.b16 %v725
    %v1107 = vunpack.c.h.b16 %v725
    %v1108 = vunpack.c.l.b16 %v726
    %v1109 = vunpack.c.h.b16 %v726
    %v1110 = vunpack.c.l.b16 %v727
    %v1111 = vunpack.c.h.b16 %v727
    %v1112 = vunpack.c.l.b16 %v728
    %v1113 = vunpack.c.h.b16 %v728
    %v1114 = vunpack.c.l.b16 %v729
    %v1115 = vunpack.c.h.b16 %v729
    %v1116 = vunpack.c.l.b16 %v730
    %v1117 = vunpack.c.h.b16 %v730
    %v1118 = vunpack.c.l.b16 %v731
    %v1119 = vunpack.c.h.b16 %v731
    %v1120 = vunpack.c.l.b16 %v732
    %v1121 = vunpack.c.h.b16 %v732
    %v1122 = vunpack.c.l.b16 %v733
    %v1123 = vunpack.c.h.b16 %v733
    %v1124 = vunpack.c.l.b16 %v734
    %v1125 = vunpack.c.h.b16 %v734
    %v1126 = vunpack.c.l.b16 %v735
    %v1127 = vunpack.c.h.b16 %v735
    %v1128 = vunpack.c.l.b16 %v736
    %v1129 = vunpack.c.h.b16 %v736
    %v1130 = vunpack.c.l.b16 %v737
    %v1131 = vunpack.c.h.b16 %v737
    %v1132 = vunpack.c.l.b16 %v738
    %v1133 = vunpack.c.h.b16 %v738
    %v1134 = vunpack.c.l.b16 %v739
    %v1135 = vunpack.c.h.b16 %v739
    %v1136 = vunpack.c.l.b16 %v740
    %v1137 = vunpack.c.h.b16 %v740
    %v1138 = vunpack.c.l.b16 %v741
    %v1139 = vunpack.c.h.b16 %v741
    %v1140 = vunpack.c.l.b16 %v742
    %v1141 = vunpack.c.h.b16 %v742
    %v1142 = vunpack.c.l.b16 %v743
    %v1143 = vunpack.c.h.b16 %v743
    %v1144 = vunpack.c.l.b16 %v744
    %v1145 = vunpack.c.h.b16 %v744
    %v1146 = vunpack.c.l.b16 %v745
    %v1147 = vunpack.c.h.b16 %v745
    %v1148 = vunpack.c.l.b16 %v746
    %v1149 = vunpack.c.h.b16 %v746
    %v1150 = vunpack.c.l.b16 %v747
    %v1151 = vunpack.c.h.b16 %v747
    %v1152 = vunpack.c.l.b16 %v748
    %v1153 = vunpack.c.h.b16 %v748
    %v1154 = vunpack.c.l.b16 %v749
    %v1155 = vunpack.c.h.b16 %v749
    %v1156 = vunpack.c.l.b16 %v750
    %v1157 = vunpack.c.h.b16 %v750
    %v1158 = vunpack.c.l.b16 %v751
    %v1159 = vunpack.c.h.b16 %v751
    %v1160 = vunpack.c.l.b16 %v752
    %v1161 = vunpack.c.h.b16 %v752
    %v1162 = vunpack.c.l.b16 %v753
    %v1163 = vunpack.c.h.b16 %v753
    %v1164 = vunpack.c.l.b16 %v754
    %v1165 = vunpack.c.h.b16 %v754
    %v1166 = vunpack.c.l.b16 %v755
    %v1167 = vunpack.c.h.b16 %v755
    %v1168 = vunpack.c.l.b16 %v756
    %v1169 = vunpack.c.h.b16 %v756
    %v1170 = vunpack.c.l.b16 %v757
    %v1171 = vunpack.c.h.b16 %v757
    %v1172 = vunpack.c.l.b16 %v758
    %v1173 = vunpack.c.h.b16 %v758
    %v1174 = vunpack.c.l.b16 %v759
    %v1175 = vunpack.c.h.b16 %v759
    %v1176 = vunpack.c.l.b16 %v760
    %v1177 = vunpack.c.h.b16 %v760
    %v1178 = vunpack.c.l.b16 %v761
    %v1179 = vunpack.c.h.b16 %v761
    %v1180 = vunpack.c.l.b16 %v762
    %v1181 = vunpack.c.h.b16 %v762
    %v1182 = vunpack.c.l.b16 %v763
    %v1183 = vunpack.c.h.b16 %v763
    %v1184 = vunpack.c.l.b16 %v764
    %v1185 = vunpack.c.h.b16 %v764
    %v1186 = vunpack.c.l.b16 %v765
    %v1187 = vunpack.c.h.b16 %v765
    %v1188 = vunpack.c.l.b16 %v766
    %v1189 = vunpack.c.h.b16 %v766
    %v1190 = vunpack.c.l.b16 %v767
    %v1191 = vunpack.c.h.b16 %v767
    %v1192 = vunpack.c.l.b16 %v768
    %v1193 = vunpack.c.h.b16 %v768
    %v1194 = vunpack.c.l.b16 %v769
    %v1195 = vunpack.c.h.b16 %v769
    %v1196 = vunpack.c.l.b16 %v770
    %v1197 = vunpack.c.h.b16 %v770
    %v1198 = vunpack.c.l.b16 %v771
    %v1199 = vunpack.c.h.b16 %v771
    %v1200 = vunpack.c.l.b16 %v772
    %v1201 = vunpack.c.h.b16 %v772
    %v1202 = vunpack.c.l.b16 %v773
    %v1203 = vunpack.c.h.b16 %v773
    %v1204 = vunpack.c.l.b16 %v774
    %v1205 = vunpack.c.h.b16 %v774
    %v1206 = vunpack.c.l.b16 %v775
    %v1207 = vunpack.c.h.b16 %v775
    %v1208 = vunpack.c.l.b16 %v776
    %v1209 = vunpack.c.h.b16 %v776
    %v1210 = vunpack.c.l.b16 %v777
    %v1211 = vunpack.c.h.b16 %v777
    %v1212 = vunpack.c.l.b16 %v778
    %v1213 = vunpack.c.h.b16 %v778
    %v1214 = vunpack.c.l.b16 %v779
    %v1215 = vunpack.c.h.b16 %v779
    %v1216 = vunpack.c.l.b16 %v780
    %v1217 = vunpack.c.h.b16 %v780
    %v1218 = vunpack.c.l.b16 %v781
    %v1219 = vunpack.c.h.b16 %v781
    %v1220 = vunpack.c.l.b16 %v782
    %v1221 = vunpack.c.h.b16 %v782
    %v1222 = vunpack.c.l.b16 %v783
    %v1223 = vunpack.c.h.b16 %v783
    %v1224 = vunpack.c.l.b16 %v784
    %v1225 = vunpack.c.h.b16 %v784
    %v1226 = vunpack.c.l.b16 %v785
    %v1227 = vunpack.c.h.b16 %v785
    %v1228 = vunpack.c.l.b16 %v786
    %v1229 = vunpack.c.h.b16 %v786
    %v1230 = vunpack.c.l.b16 %v787
    %v1231 = vunpack.c.h.b16 %v787
    %v1232 = vunpack.c.l.b16 %v788
    %v1233 = vunpack.c.h.b16 %v788
    %v1234 = vunpack.c.l.b16 %v789
    %v1235 = vunpack.c.h.b16 %v789
    %v1236 = vunpack.c.l.b16 %v790
    %v1237 = vunpack.c.h.b16 %v790
    %v1238 = vunpack.c.l.b16 %v791
    %v1239 = vunpack.c.h.b16 %v791
    %v1240 = vunpack.c.l.b16 %v792
    %v1241 = vunpack.c.h.b16 %v792
    %v1242 = vunpack.c.l.b16 %v793
    %v1243 = vunpack.c.h.b16 %v793
    %v1244 = vunpack.c.l.b16 %v794
    %v1245 = vunpack.c.h.b16 %v794
    %v1246 = vunpack.c.l.b16 %v795
    %v1247 = vunpack.c.h.b16 %v795
    %v1248 = vunpack.c.l.b16 %v796
    %v1249 = vunpack.c.h.b16 %v796
    %v1250 = vunpack.c.l.b16 %v797
    %v1251 = vunpack.c.h.b16 %v797
    %v1252 = vunpack.c.l.b16 %v798
    %v1253 = vunpack.c.h.b16 %v798
    %v1254 = vunpack.c.l.b16 %v799
    %v1255 = vunpack.c.h.b16 %v799
    %v1256 = vunpack.c.l.b16 %v800
    %v1257 = vunpack.c.h.b16 %v800
    %v1258 = vunpack.c.l.b16 %v801
    %v1259 = vunpack.c.h.b16 %v801
    %v1260 = vunpack.c.l.b16 %v802
    %v1261 = vunpack.c.h.b16 %v802
    %v1262 = vunpack.c.l.b16 %v803
    %v1263 = vunpack.c.h.b16 %v803
    %v1264 = vunpack.c.l.b16 %v804
    %v1265 = vunpack.c.h.b16 %v804
    %v1266 = vunpack.c.l.b16 %v805
    %v1267 = vunpack.c.h.b16 %v805
    %v1268 = vunpack.c.l.b16 %v806
    %v1269 = vunpack.c.h.b16 %v806
    %v1270 = vunpack.c.l.b16 %v807
    %v1271 = vunpack.c.h.b16 %v807
    %v1272 = vunpack.c.l.b16 %v808
    %v1273 = vunpack.c.h.b16 %v808
    %v1274 = vunpack.c.l.b16 %v809
    %v1275 = vunpack.c.h.b16 %v809
    %v1276 = vunpack.c.l.b16 %v810
    %v1277 = vunpack.c.h.b16 %v810
    %v1278 = vunpack.c.l.b16 %v811
    %v1279 = vunpack.c.h.b16 %v811
    %v1280 = vunpack.c.l.b16 %v812
    %v1281 = vunpack.c.h.b16 %v812
    %v1282 = vunpack.c.l.b16 %v813
    %v1283 = vunpack.c.h.b16 %v813
    %v1284 = vunpack.c.l.b16 %v814
    %v1285 = vunpack.c.h.b16 %v814
    %v1286 = vunpack.c.l.b16 %v815
    %v1287 = vunpack.c.h.b16 %v815
    %v1288 = vunpack.c.l.b16 %v816
    %v1289 = vunpack.c.h.b16 %v816
    %v1290 = vunpack.c.l.b16 %v817
    %v1291 = vunpack.c.h.b16 %v817
    %v1292 = vunpack.c.l.b16 %v818
    %v1293 = vunpack.c.h.b16 %v818
    %v1294 = vunpack.c.l.b16 %v819
    %v1295 = vunpack.c.h.b16 %v819
    %v1296 = vunpack.c.l.b16 %v820
    %v1297 = vunpack.c.h.b16 %v820
    %v1298 = vunpack.c.l.b16 %v821
    %v1299 = vunpack.c.h.b16 %v821
    %v1300 = vunpack.c.l.b16 %v822
    %v1301 = vunpack.c.h.b16 %v822
    %v1302 = vunpack.c.l.b16 %v823
    %v1303 = vunpack.c.h.b16 %v823
    %v1304 = vunpack.c.l.b16 %v824
    %v1305 = vunpack.c.h.b16 %v824
    %v1306 = vunpack.c.l.b16 %v825
    %v1307 = vunpack.c.h.b16 %v825
    %v1308 = vunpack.c.l.b16 %v826
    %v1309 = vunpack.c.h.b16 %v826
    %v1310 = vunpack.c.l.b16 %v827
    %v1311 = vunpack.c.h.b16 %v827
    %v1312 = vunpack.c.l.b16 %v828
    %v1313 = vunpack.c.h.b16 %v828
    %v1314 = vunpack.c.l.b16 %v829
    %v1315 = vunpack.c.h.b16 %v829
    %v1316 = vunpack.c.l.b16 %v830
    %v1317 = vunpack.c.h.b16 %v830
    %v1318 = vunpack.c.l.b16 %v831
    %v1319 = vunpack.c.h.b16 %v831
    %v1320 = vunpack.c.l.b16 %v832
    %v1321 = vunpack.c.h.b16 %v832
    %v1322 = vunpack.c.l.b16 %v833
    %v1323 = vunpack.c.h.b16 %v833
    %v1324 = vunpack.c.l.b16 %v834
    %v1325 = vunpack.c.h.b16 %v834
    %v1326 = vunpack.c.l.b16 %v835
    %v1327 = vunpack.c.h.b16 %v835
    %v1328 = vunpack.c.l.b16 %v836
    %v1329 = vunpack.c.h.b16 %v836
    %v1330 = vunpack.c.l.b16 %v837
    %v1331 = vunpack.c.h.b16 %v837
    %v1332 = vunpack.c.l.b16 %v838
    %v1333 = vunpack.c.h.b16 %v838
    %v1334 = vunpack.c.l.b16 %v839
    %v1335 = vunpack.c.h.b16 %v839
    %v1336 = vunpack.c.l.b16 %v840
    %v1337 = vunpack.c.h.b16 %v840
    %v1338 = vunpack.c.l.b16 %v841
    %v1339 = vunpack.c.h.b16 %v841
    %v1340 = vunpack.c.l.b16 %v842
    %v1341 = vunpack.c.h.b16 %v842
    %v1342 = vunpack.c.l.b16 %v843
    %v1343 = vunpack.c.h.b16 %v843
    %v1344 = vunpack.c.l.b16 %v844
    %v1345 = vunpack.c.h.b16 %v844
    %v1346 = vunpack.c.l.b16 %v845
    %v1347 = vunpack.c.h.b16 %v845
    %v1348 = vunpack.c.l.b16 %v846
    %v1349 = vunpack.c.h.b16 %v846
    %v1350 = vunpack.c.l.b16 %v847
    %v1351 = vunpack.c.h.b16 %v847
    %v1352 = vunpack.c.l.b16 %v848
    %v1353 = vunpack.c.h.b16 %v848
    %v1354 = vunpack.c.l.b16 %v849
    %v1355 = vunpack.c.h.b16 %v849
    %v1356 = vunpack.c.l.b16 %v850
    %v1357 = vunpack.c.h.b16 %v850
    %v1358 = vunpack.c.l.b16 %v851
    %v1359 = vunpack.c.h.b16 %v851
    %v1360 = vunpack.c.l.b16 %v852
    %v1361 = vunpack.c.h.b16 %v852
    %v1362 = vunpack.c.l.b16 %v853
    %v1363 = vunpack.c.h.b16 %v853
    %v1364 = vunpack.c.l.b16 %v854
    %v1365 = vunpack.c.h.b16 %v854
    %v1366 = vunpack.c.l.b16 %v855
    %v1367 = vunpack.c.h.b16 %v855
    %v1368 = vunpack.c.l.b16 %v856
    %v1369 = vunpack.c.h.b16 %v856
    %v1370 = vunpack.c.l.b16 %v857
    %v1371 = vunpack.c.h.b16 %v857
    %v1372 = vunpack.c.l.b16 %v858
    %v1373 = vunpack.c.h.b16 %v858
    %v1374 = vunpack.c.l.b16 %v859
    %v1375 = vunpack.c.h.b16 %v859
    %v1376 = vunpack.c.l.b16 %v860
    %v1377 = vunpack.c.h.b16 %v860
    %v1378 = vunpack.c.l.b16 %v861
    %v1379 = vunpack.c.h.b16 %v861
    %v1380 = vunpack.c.l.b16 %v862
    %v1381 = vunpack.c.h.b16 %v862
    %v1382 = vunpack.c.l.b16 %v863
    %v1383 = vunpack.c.h.b16 %v863
    %v1384 = vunpack.c.l.b16 %v864
    %v1385 = vunpack.c.h.b16 %v864
    %v1386 = vunpack.c.l.b16 %v865
    %v1387 = vunpack.c.h.b16 %v865
    %v1388 = vunpack.c.l.b16 %v866
    %v1389 = vunpack.c.h.b16 %v866
    %v1390 = vunpack.c.l.b16 %v867
    %v1391 = vunpack.c.h.b16 %v867
    %v1392 = vunpack.c.l.b16 %v868
    %v1393 = vunpack.c.h.b16 %v868
    %v1394 = vunpack.c.l.b16 %v869
    %v1395 = vunpack.c.h.b16 %v869
    %v1396 = vunpack.c.l.b16 %v870
    %v1397 = vunpack.c.h.b16 %v870
    %v1398 = vunpack.c.l.b16 %v871
    %v1399 = vunpack.c.h.b16 %v871
    %v1400 = vunpack.c.l.b16 %v872
    %v1401 = vunpack.c.h.b16 %v872
    %v1402 = vunpack.c.l.b16 %v873
    %v1403 = vunpack.c.h.b16 %v873
    %v1404 = vunpack.c.l.b16 %v874
    %v1405 = vunpack.c.h.b16 %v874
    %v1406 = vunpack.c.l.b16 %v875
    %v1407 = vunpack.c.h.b16 %v875
    %v1408 = vunpack.c.l.b16 %v876
    %v1409 = vunpack.c.h.b16 %v876
    %v1410 = vunpack.c.l.b16 %v877
    %v1411 = vunpack.c.h.b16 %v877
    %v1412 = vunpack.c.l.b16 %v878
    %v1413 = vunpack.c.h.b16 %v878
    %v1414 = vunpack.c.l.b16 %v879
    %v1415 = vunpack.c.h.b16 %v879
    %v1416 = vunpack.c.l.b16 %v880
    %v1417 = vunpack.c.h.b16 %v880
    %v1418 = vunpack.c.l.b16 %v881
    %v1419 = vunpack.c.h.b16 %v881
    %v1420 = vunpack.c.l.b16 %v882
    %v1421 = vunpack.c.h.b16 %v882
    %v1422 = vunpack.c.l.b16 %v883
    %v1423 = vunpack.c.h.b16 %v883
    %v1424 = vpack.c.b16 %v1074, %v1072
    %v1425 = vpack.c.b16 %v1075, %v1073
    %v1426 = vpack.c.b16 %v1078, %v1076
    %v1427 = vpack.c.b16 %v1079, %v1077
    %v1428 = vpack.c.b16 %v1082, %v1080
    %v1429 = vpack.c.b16 %v1083, %v1081
    %v1430 = vpack.c.b16 %v1086, %v1084
    %v1431 = vpack.c.b16 %v1087, %v1085
    %v1432 = vpack.c.b16 %v1090, %v1088
    %v1433 = vpack.c.b16 %v1091, %v1089
    %v1434 = vpack.c.b16 %v1094, %v1092
    %v1435 = vpack.c.b16 %v1095, %v1093
    %v1436 = vpack.c.b16 %v1098, %v1096
    %v1437 = vpack.c.b16 %v1099, %v1097
    %v1438 = vpack.c.b16 %v1102, %v1100
    %v1439 = vpack.c.b16 %v1103, %v1101
    %v1440 = vpack.c.b16 %v1106, %v1104
    %v1441 = vpack.c.b16 %v1107, %v1105
    %v1442 = vpack.c.b16 %v1110, %v1108
    %v1443 = vpack.c.b16 %v1111, %v1109
    %v1444 = vpack.c.b16 %v1114, %v1112
    %v1445 = vpack.c.b16 %v1115, %v1113
    %v1446 = vpack.c.b16 %v1118, %v1116
    %v1447 = vpack.c.b16 %v1119, %v1117
    %v1448 = vpack.c.b16 %v1122, %v1120
    %v1449 = vpack.c.b16 %v1123, %v1121
    %v1450 = vpack.c.b16 %v1126, %v1124
    %v1451 = vpack.c.b16 %v1127, %v1125
    %v1452 = vpack.c.b16 %v1130, %v1128
    %v1453 = vpack.c.b16 %v1131, %v1129
    %v1454 = vpack.c.b16 %v1134, %v1132
    %v1455 = vpack.c.b16 %v1135, %v1133
    %v1456 = vpack.c.b16 %v1138, %v1136
    %v1457 = vpack.c.b16 %v1139, %v1137
    %v1458 = vpack.c.b16 %v1142, %v1140
    %v1459 = vpack.c.b16 %v1143, %v1141
    %v1460 = vpack.c.b16 %v1146, %v1144
    %v1461 = vpack.c.b16 %v1147, %v1145
    %v1462 = vpack.c.b16 %v1150, %v1148
    %v1463 = vpack.c.b16 %v1151, %v1149
    %v1464 = vpack.c.b16 %v1154, %v1152
    %v1465 = vpack.c.b16 %v1155, %v1153
    %v1466 = vpack.c.b16 %v1158, %v1156
    %v1467 = vpack.c.b16 %v1159, %v1157
    %v1468 = vpack.c.b16 %v1162, %v1160
    %v1469 = vpack.c.b16 %v1163, %v1161
    %v1470 = vpack.c.b16 %v1166, %v1164
    %v1471 = vpack.c.b16 %v1167, %v1165
    %v1472 = vpack.c.b16 %v1170, %v1168
    %v1473 = vpack.c.b16 %v1171, %v1169
    %v1474 = vpack.c.b16 %v1174, %v1172
    %v1475 = vpack.c.b16 %v1175, %v1173
    %v1476 = vpack.c.b16 %v1178, %v1176
    %v1477 = vpack.c.b16 %v1179, %v1177
    %v1478 = vpack.c.b16 %v1182, %v1180
    %v1479 = vpack.c.b16 %v1183, %v1181
    %v1480 = vpack.c.b16 %v1186, %v1184
    %v1481 = vpack.c.b16 %v1187, %v1185
    %v1482 = vpack.c.b16 %v1190, %v1188
    %v1483 = vpack.c.b16 %v1191, %v1189
    %v1484 = vpack.c.b16 %v1194, %v1192
    %v1485 = vpack.c.b16 %v1195, %v1193
    %v1486 = vpack.c.b16 %v1198, %v1196
    %v1487 = vpack.c.b16 %v1199, %v1197
    %v1488 = vpack.c.b16 %v1202, %v1200
    %v1489 = vpack.c.b16 %v1203, %v1201
    %v1490 = vpack.c.b16 %v1206, %v1204
    %v1491 = vpack.c.b16 %v1207, %v1205
    %v1492 = vpack.c.b16 %v1210, %v1208
    %v1493 = vpack.c.b16 %v1211, %v1209
    %v1494 = vpack.c.b16 %v1214, %v1212
    %v1495 = vpack.c.b16 %v1215, %v1213
    %v1496 = vpack.c.b16 %v1218, %v1216
    %v1497 = vpack.c.b16 %v1219, %v1217
    %v1498 = vpack.c.b16 %v1222, %v1220
    %v1499 = vpack.c.b16 %v1223, %v1221
    %v1500 = vpack.c.b16 %v1226, %v1224
    %v1501 = vpack.c.b16 %v1227, %v1225
    %v1502 = vpack.c.b16 %v1230, %v1228
    %v1503 = vpack.c.b16 %v1231, %v1229
    %v1504 = vpack.c.b16 %v1234, %v1232
    %v1505 = vpack.c.b16 %v1235, %v1233
    %v1506 = vpack.c.b16 %v1238, %v1236
    %v1507 = vpack.c.b16 %v1239, %v1237
    %v1508 = vpack.c.b16 %v1242, %v1240
    %v1509 = vpack.c.b16 %v1243, %v1241
    %v1510 = vpack.c.b16 %v1246, %v1244
    %v1511 = vpack.c.b16 %v1247, %v1245
    %v1512 = vpack.c.b16 %v1250, %v1248
    %v1513 = vpack.c.b16 %v1251, %v1249
    %v1514 = vpack.c.b16 %v1254, %v1252
    %v1515 = vpack.c.b16 %v1255, %v1253
    %v1516 = vpack.c.b16 %v1258, %v1256
    %v1517 = vpack.c.b16 %v1259, %v1257
    %v1518 = vpack.c.b16 %v1262, %v1260
    %v1519 = vpack.c.b16 %v1263, %v1261
    %v1520 = vpack.c.b16 %v1266, %v1264
    %v1521 = vpack.c.b16 %v1267, %v1265
    %v1522 = vpack.c.b16 %v1270, %v1268
    %v1523 = vpack.c.b16 %v1271, %v1269
    %v1524 = vpack.c.b16 %v1274, %v1272
    %v1525 = vpack.c.b16 %v1275, %v1273
    %v1526 = vpack.c.b16 %v1278, %v1276
    %v1527 = vpack.c.b16 %v1279, %v1277
    %v1528 = vpack.c.b16 %v1282, %v1280
    %v1529 = vpack.c.b16 %v1283, %v1281
    %v1530 = vpack.c.b16 %v1286, %v1284
    %v1531 = vpack.c.b16 %v1287, %v1285
    %v1532 = vpack.c.b16 %v1290, %v1288
    %v1533 = vpack.c.b16 %v1291, %v1289
    %v1534 = vpack.c.b16 %v1294, %v1292
    %v1535 = vpack.c.b16 %v1295, %v1293
    %v1536 = vpack.c.b16 %v1298, %v1296
    %v1537 = vpack.c.b16 %v1299, %v1297
    %v1538 = vpack.c.b16 %v1302, %v1300
    %v1539 = vpack.c.b16 %v1303, %v1301
    %v1540 = vpack.c.b16 %v1306, %v1304
    %v1541 = vpack.c.b16 %v1307, %v1305
    %v1542 = vpack.c.b16 %v1310, %v1308
    %v1543 = vpack.c.b16 %v1311, %v1309
    %v1544 = vpack.c.b16 %v1314, %v1312
    %v1545 = vpack.c.b16 %v1315, %v1313
    %v1546 = vpack.c.b16 %v1318, %v1316
    %v1547 = vpack.c.b16 %v1319, %v1317
    %v1548 = vpack.c.b16 %v1322, %v1320
    %v1549 = vpack.c.b16 %v1323, %v1321
    %v1550 = vpack.c.b16 %v1326, %v1324
    %v1551 = vpack.c.b16 %v1327, %v1325
    %v1552 = vpack.c.b16 %v1330, %v1328
    %v1553 = vpack.c.b16 %v1331, %v1329
    %v1554 = vpack.c.b16 %v1334, %v1332
    %v1555 = vpack.c.b16 %v1335, %v1333
    %v1556 = vpack.c.b16 %v1338, %v1336
    %v1557 = vpack.c.b16 %v1339, %v1337
    %v1558 = vpack.c.b16 %v1342, %v1340
    %v1559 = vpack.c.b16 %v1343, %v1341
    %v1560 = vpack.c.b16 %v1346, %v1344
    %v1561 = vpack.c.b16 %v1347, %v1345
    %v1562 = vpack.c.b16 %v1350, %v1348
    %v1563 = vpack.c.b16 %v1351, %v1349
    %v1564 = vpack.c.b16 %v1354, %v1352
    %v1565 = vpack.c.b16 %v1355, %v1353
    %v1566 = vpack.c.b16 %v1358, %v1356
    %v1567 = vpack.c.b16 %v1359, %v1357
    %v1568 = vpack.c.b16 %v1362, %v1360
    %v1569 = vpack.c.b16 %v1363, %v1361
    %v1570 = vpack.c.b16 %v1366, %v1364
    %v1571 = vpack.c.b16 %v1367, %v1365
    %v1572 = vpack.c.b16 %v1370, %v1368
    %v1573 = vpack.c.b16 %v1371, %v1369
    %v1574 = vpack.c.b16 %v1374, %v1372
    %v1575 = vpack.c.b16 %v1375, %v1373
    %v1576 = vpack.c.b16 %v1378, %v1376
    %v1577 = vpack.c.b16 %v1379, %v1377
    %v1578 = vpack.c.b16 %v1382, %v1380
    %v1579 = vpack.c.b16 %v1383, %v1381
    %v1580 = vpack.c.b16 %v1386, %v1384
    %v1581 = vpack.c.b16 %v1387, %v1385
    %v1582 = vpack.c.b16 %v1390, %v1388
    %v1583 = vpack.c.b16 %v1391, %v1389
    %v1584 = vpack.c.b16 %v1394, %v1392
    %v1585 = vpack.c.b16 %v1395, %v1393
    %v1586 = vpack.c.b16 %v1398, %v1396
    %v1587 = vpack.c.b16 %v1399, %v1397
    %v1588 = vpack.c.b16 %v1402, %v1400
    %v1589 = vpack.c.b16 %v1403, %v1401
    %v1590 = vpack.c.b16 %v1406, %v1404
    %v1591 = vpack.c.b16 %v1407, %v1405
    %v1592 = vpack.c.b16 %v1410, %v1408
    %v1593 = vpack.c.b16 %v1411, %v1409
    %v1594 = vpack.c.b16 %v1414, %v1412
    %v1595 = vpack.c.b16 %v1415, %v1413
    %v1596 = vpack.c.b16 %v1418, %v1416
    %v1597 = vpack.c.b16 %v1419, %v1417
    %v1598 = vpack.c.b16 %v1422, %v1420
    %v1599 = vpack.c.b16 %v1423, %v1421
    %1776 = vmatprep.subr.bf16.mxu0 %v1439
    %1777 = vmatpush1.bf16.msra.mxu0 %v1438
    %1778 = vmatprep.subr.bf16.mxu0 %v1437
    %1779 = vmatpush1.bf16.msra.mxu0 %v1436
    %1780 = vmatprep.subr.bf16.mxu0 %v1435
    %1781 = vmatpush1.bf16.msra.mxu0 %v1434
    %1782 = vmatprep.subr.bf16.mxu0 %v1433
    %1783 = vmatpush1.bf16.msra.mxu0 %v1432
    %1784 = vmatprep.subr.bf16.mxu0 %v1431
    %1785 = vmatpush1.bf16.msra.mxu0 %v1430
    %1786 = vmatprep.subr.bf16.mxu0 %v1429
    %1787 = vmatpush1.bf16.msra.mxu0 %v1428
    %1788 = vmatprep.subr.bf16.mxu0 %v1427
    %1789 = vmatpush1.bf16.msra.mxu0 %v1426
    %1790 = vmatprep.subr.bf16.mxu0 %v1425
    %1791 = vmatpush1.bf16.msra.mxu0 %v1424
    %1792 = vmatprep.subr.bf16.mxu0 %v1455
    %1793 = vmatpush2.bf16.msra.mxu0 %v1454
    %1794 = vmatprep.subr.bf16.mxu0 %v1453
    %1795 = vmatpush2.bf16.msra.mxu0 %v1452
    %1796 = vmatprep.subr.bf16.mxu0 %v1451
    %1797 = vmatpush2.bf16.msra.mxu0 %v1450
    %1798 = vmatprep.subr.bf16.mxu0 %v1449
    %1799 = vmatpush2.bf16.msra.mxu0 %v1448
    %1800 = vmatprep.subr.bf16.mxu0 %v1447
    %1801 = vmatpush2.bf16.msra.mxu0 %v1446
    %1802 = vmatprep.subr.bf16.mxu0 %v1445
    %1803 = vmatpush2.bf16.msra.mxu0 %v1444
    %1804 = vmatprep.subr.bf16.mxu0 %v1443
    %1805 = vmatpush2.bf16.msra.mxu0 %v1442
    %1806 = vmatprep.subr.bf16.mxu0 %v1441
    %1807 = vmatpush2.bf16.msra.mxu0 %v1440
    %1808 = vmatprep.mubr.bf16.mxu0 %v698
    %1809 = vmatmul.mubr.bf16.gmra.mxu0 %v697
    %v1810 = vpop.f32.mrf.mxu0
    %v1811 = vadd.f32 %v889, %v1810
    %v1812 = vpop.f32.mrf.mxu0
    %v1813 = vadd.f32 %v893, %v1812
    %v1814 = vpop.f32.mrf.mxu0
    %v1815 = vpop.f32.mrf.mxu0
    %1816 = vdwg.mxu0
    %1817 = vmatprep.subr.bf16.mxu0 %v1471
    %1818 = vmatpush1.bf16.msra.mxu0 %v1470
    %1819 = vmatprep.subr.bf16.mxu0 %v1469
    %1820 = vmatpush1.bf16.msra.mxu0 %v1468
    %1821 = vmatprep.subr.bf16.mxu0 %v1467
    %1822 = vmatpush1.bf16.msra.mxu0 %v1466
    %1823 = vmatprep.subr.bf16.mxu0 %v1465
    %1824 = vmatpush1.bf16.msra.mxu0 %v1464
    %1825 = vmatprep.subr.bf16.mxu0 %v1463
    %1826 = vmatpush1.bf16.msra.mxu0 %v1462
    %1827 = vmatprep.subr.bf16.mxu0 %v1461
    %1828 = vmatpush1.bf16.msra.mxu0 %v1460
    %1829 = vmatprep.subr.bf16.mxu0 %v1459
    %1830 = vmatpush1.bf16.msra.mxu0 %v1458
    %1831 = vmatprep.subr.bf16.mxu0 %v1457
    %1832 = vmatpush1.bf16.msra.mxu0 %v1456
    %1833 = vmatprep.subr.bf16.mxu0 %v1487
    %1834 = vmatpush2.bf16.msra.mxu0 %v1486
    %1835 = vmatprep.subr.bf16.mxu0 %v1485
    %1836 = vmatpush2.bf16.msra.mxu0 %v1484
    %1837 = vmatprep.subr.bf16.mxu0 %v1483
    %1838 = vmatpush2.bf16.msra.mxu0 %v1482
    %1839 = vmatprep.subr.bf16.mxu0 %v1481
    %1840 = vmatpush2.bf16.msra.mxu0 %v1480
    %1841 = vmatprep.subr.bf16.mxu0 %v1479
    %1842 = vmatpush2.bf16.msra.mxu0 %v1478
    %1843 = vmatprep.subr.bf16.mxu0 %v1477
    %1844 = vmatpush2.bf16.msra.mxu0 %v1476
    %1845 = vmatprep.subr.bf16.mxu0 %v1475
    %1846 = vmatpush2.bf16.msra.mxu0 %v1474
    %1847 = vmatprep.subr.bf16.mxu0 %v1473
    %1848 = vmatpush2.bf16.msra.mxu0 %v1472
    %1849 = vmatprep.mubr.bf16.mxu0 %v700
    %1850 = vmatmul.mubr.bf16.gmra.mxu0 %v699
    %v1851 = vpop.f32.mrf.mxu0
    %v1852 = vadd.f32 %v1811, %v1851
    %v1853 = vpop.f32.mrf.mxu0
    %v1854 = vadd.f32 %v1813, %v1853
    %v1855 = vpop.f32.mrf.mxu0
    %v1856 = vpop.f32.mrf.mxu0
    %1857 = vdwg.mxu0
    %1858 = vmatprep.subr.bf16.mxu0 %v1503
    %1859 = vmatpush1.bf16.msra.mxu0 %v1502
    %1860 = vmatprep.subr.bf16.mxu0 %v1501
    %1861 = vmatpush1.bf16.msra.mxu0 %v1500
    %1862 = vmatprep.subr.bf16.mxu0 %v1499
    %1863 = vmatpush1.bf16.msra.mxu0 %v1498
    %1864 = vmatprep.subr.bf16.mxu0 %v1497
    %1865 = vmatpush1.bf16.msra.mxu0 %v1496
    %1866 = vmatprep.subr.bf16.mxu0 %v1495
    %1867 = vmatpush1.bf16.msra.mxu0 %v1494
    %1868 = vmatprep.subr.bf16.mxu0 %v1493
    %1869 = vmatpush1.bf16.msra.mxu0 %v1492
    %1870 = vmatprep.subr.bf16.mxu0 %v1491
    %1871 = vmatpush1.bf16.msra.mxu0 %v1490
    %1872 = vmatprep.subr.bf16.mxu0 %v1489
    %1873 = vmatpush1.bf16.msra.mxu0 %v1488
    %1874 = vmatprep.subr.bf16.mxu0 %v1519
    %1875 = vmatpush2.bf16.msra.mxu0 %v1518
    %1876 = vmatprep.subr.bf16.mxu0 %v1517
    %1877 = vmatpush2.bf16.msra.mxu0 %v1516
    %1878 = vmatprep.subr.bf16.mxu0 %v1515
    %1879 = vmatpush2.bf16.msra.mxu0 %v1514
    %1880 = vmatprep.subr.bf16.mxu0 %v1513
    %1881 = vmatpush2.bf16.msra.mxu0 %v1512
    %1882 = vmatprep.subr.bf16.mxu0 %v1511
    %1883 = vmatpush2.bf16.msra.mxu0 %v1510
    %1884 = vmatprep.subr.bf16.mxu0 %v1509
    %1885 = vmatpush2.bf16.msra.mxu0 %v1508
    %1886 = vmatprep.subr.bf16.mxu0 %v1507
    %1887 = vmatpush2.bf16.msra.mxu0 %v1506
    %1888 = vmatprep.subr.bf16.mxu0 %v1505
    %1889 = vmatpush2.bf16.msra.mxu0 %v1504
    %1890 = vmatprep.mubr.bf16.mxu0 %v702
    %1891 = vmatmul.mubr.bf16.gmra.mxu0 %v701
    %v1892 = vpop.f32.mrf.mxu0
    %v1893 = vadd.f32 %v1852, %v1892
    %v1894 = vpop.f32.mrf.mxu0
    %v1895 = vadd.f32 %v1854, %v1894
    %v1896 = vpop.f32.mrf.mxu0
    %v1897 = vpop.f32.mrf.mxu0
    %1898 = vdwg.mxu0
    %1899 = vmatprep.subr.bf16.mxu0 %v1535
    %1900 = vmatpush1.bf16.msra.mxu0 %v1534
    %1901 = vmatprep.subr.bf16.mxu0 %v1533
    %1902 = vmatpush1.bf16.msra.mxu0 %v1532
    %1903 = vmatprep.subr.bf16.mxu0 %v1531
    %1904 = vmatpush1.bf16.msra.mxu0 %v1530
    %1905 = vmatprep.subr.bf16.mxu0 %v1529
    %1906 = vmatpush1.bf16.msra.mxu0 %v1528
    %1907 = vmatprep.subr.bf16.mxu0 %v1527
    %1908 = vmatpush1.bf16.msra.mxu0 %v1526
    %1909 = vmatprep.subr.bf16.mxu0 %v1525
    %1910 = vmatpush1.bf16.msra.mxu0 %v1524
    %1911 = vmatprep.subr.bf16.mxu0 %v1523
    %1912 = vmatpush1.bf16.msra.mxu0 %v1522
    %1913 = vmatprep.subr.bf16.mxu0 %v1521
    %1914 = vmatpush1.bf16.msra.mxu0 %v1520
    %1915 = vmatprep.subr.bf16.mxu0 %v1551
    %1916 = vmatpush2.bf16.msra.mxu0 %v1550
    %1917 = vmatprep.subr.bf16.mxu0 %v1549
    %1918 = vmatpush2.bf16.msra.mxu0 %v1548
    %1919 = vmatprep.subr.bf16.mxu0 %v1547
    %1920 = vmatpush2.bf16.msra.mxu0 %v1546
    %1921 = vmatprep.subr.bf16.mxu0 %v1545
    %1922 = vmatpush2.bf16.msra.mxu0 %v1544
    %1923 = vmatprep.subr.bf16.mxu0 %v1543
    %1924 = vmatpush2.bf16.msra.mxu0 %v1542
    %1925 = vmatprep.subr.bf16.mxu0 %v1541
    %1926 = vmatpush2.bf16.msra.mxu0 %v1540
    %1927 = vmatprep.subr.bf16.mxu0 %v1539
    %1928 = vmatpush2.bf16.msra.mxu0 %v1538
    %1929 = vmatprep.subr.bf16.mxu0 %v1537
    %1930 = vmatpush2.bf16.msra.mxu0 %v1536
    %1931 = vmatprep.mubr.bf16.mxu0 %v704
    %1932 = vmatmul.mubr.bf16.gmra.mxu0 %v703
    %v1933 = vpop.f32.mrf.mxu0
    %v1934 = vadd.f32 %v1893, %v1933
    %v1935 = vpop.f32.mrf.mxu0
    %v1936 = vadd.f32 %v1895, %v1935
    %v1937 = vpop.f32.mrf.mxu0
    %v1938 = vpop.f32.mrf.mxu0
    %1939 = vdwg.mxu0
    %1940 = vmatprep.subr.bf16.mxu0 %v1567
    %1941 = vmatpush1.bf16.msra.mxu0 %v1566
    %1942 = vmatprep.subr.bf16.mxu0 %v1565
    %1943 = vmatpush1.bf16.msra.mxu0 %v1564
    %1944 = vmatprep.subr.bf16.mxu0 %v1563
    %1945 = vmatpush1.bf16.msra.mxu0 %v1562
    %1946 = vmatprep.subr.bf16.mxu0 %v1561
    %1947 = vmatpush1.bf16.msra.mxu0 %v1560
    %1948 = vmatprep.subr.bf16.mxu0 %v1559
    %1949 = vmatpush1.bf16.msra.mxu0 %v1558
    %1950 = vmatprep.subr.bf16.mxu0 %v1557
    %1951 = vmatpush1.bf16.msra.mxu0 %v1556
    %1952 = vmatprep.subr.bf16.mxu0 %v1555
    %1953 = vmatpush1.bf16.msra.mxu0 %v1554
    %1954 = vmatprep.subr.bf16.mxu0 %v1553
    %1955 = vmatpush1.bf16.msra.mxu0 %v1552
    %1956 = vmatprep.subr.bf16.mxu0 %v1583
    %1957 = vmatpush2.bf16.msra.mxu0 %v1582
    %1958 = vmatprep.subr.bf16.mxu0 %v1581
    %1959 = vmatpush2.bf16.msra.mxu0 %v1580
    %1960 = vmatprep.subr.bf16.mxu0 %v1579
    %1961 = vmatpush2.bf16.msra.mxu0 %v1578
    %1962 = vmatprep.subr.bf16.mxu0 %v1577
    %1963 = vmatpush2.bf16.msra.mxu0 %v1576
    %1964 = vmatprep.subr.bf16.mxu0 %v1575
    %1965 = vmatpush2.bf16.msra.mxu0 %v1574
    %1966 = vmatprep.subr.bf16.mxu0 %v1573
    %1967 = vmatpush2.bf16.msra.mxu0 %v1572
    %1968 = vmatprep.subr.bf16.mxu0 %v1571
    %1969 = vmatpush2.bf16.msra.mxu0 %v1570
    %1970 = vmatprep.subr.bf16.mxu0 %v1569
    %1971 = vmatpush2.bf16.msra.mxu0 %v1568
    %1972 = vmatprep.mubr.bf16.mxu0 %v706
    %1973 = vmatmul.mubr.bf16.gmra.mxu0 %v705
    %v1974 = vpop.f32.mrf.mxu0
    %v1975 = vadd.f32 %v1934, %v1974
    %v1976 = vpop.f32.mrf.mxu0
    %v1977 = vadd.f32 %v1936, %v1976
    %v1978 = vpop.f32.mrf.mxu0
    %v1979 = vpop.f32.mrf.mxu0
    %1980 = vdwg.mxu0
    %1981 = vmatprep.subr.bf16.mxu0 %v1599
    %1982 = vmatpush1.bf16.msra.mxu0 %v1598
    %1983 = vmatprep.subr.bf16.mxu0 %v1597
    %1984 = vmatpush1.bf16.msra.mxu0 %v1596
    %1985 = vmatprep.subr.bf16.mxu0 %v1595
    %1986 = vmatpush1.bf16.msra.mxu0 %v1594
    %1987 = vmatprep.subr.bf16.mxu0 %v1593
    %1988 = vmatpush1.bf16.msra.mxu0 %v1592
    %1989 = vmatprep.subr.bf16.mxu0 %v1591
    %1990 = vmatpush1.bf16.msra.mxu0 %v1590
    %1991 = vmatprep.subr.bf16.mxu0 %v1589
    %1992 = vmatpush1.bf16.msra.mxu0 %v1588
    %1993 = vmatprep.subr.bf16.mxu0 %v1587
    %1994 = vmatpush1.bf16.msra.mxu0 %v1586
    %1995 = vmatprep.subr.bf16.mxu0 %v1585
    %1996 = vmatpush1.bf16.msra.mxu0 %v1584
    %1997 = vmatprep.subr.bf16.mxu0 0
    %1998 = vmatpush2.bf16.msra.mxu0 0
    %1999 = vmatprep.subr.bf16.mxu0 0
    %2000 = vmatpush2.bf16.msra.mxu0 0
    %2001 = vmatprep.subr.bf16.mxu0 0
    %2002 = vmatpush2.bf16.msra.mxu0 0
    %2003 = vmatprep.subr.bf16.mxu0 0
    %2004 = vmatpush2.bf16.msra.mxu0 0
    %2005 = vmatprep.subr.bf16.mxu0 0
    %2006 = vmatpush2.bf16.msra.mxu0 0
    %2007 = vmatprep.subr.bf16.mxu0 0
    %2008 = vmatpush2.bf16.msra.mxu0 0
    %2009 = vmatprep.subr.bf16.mxu0 0
    %2010 = vmatpush2.bf16.msra.mxu0 0
    %2011 = vmatprep.subr.bf16.mxu0 0
    %2012 = vmatpush2.bf16.msra.mxu0 0
    %2013 = vmatprep.mubr.bf16.mxu0 0
    %2014 = vmatmul.mubr.bf16.gmra.mxu0 %v707
    %v2015 = vpop.f32.mrf.mxu0
    %v2016 = vadd.f32 %v1975, %v2015
    %v2017 = vpop.f32.mrf.mxu0
    %v2018 = vadd.f32 %v1977, %v2017
    %v2019 = vpop.f32.mrf.mxu0
    %v2020 = vpop.f32.mrf.mxu0
    %2021 = vdwg.mxu0
    %v2022 = vmax.f32 %v2016, 0.0
    %v2023 = vmax.f32 %v2018, 0.0
    %v2024 = vpack.c.bf16 %v2022, %v2022
    %v2025 = vpack.c.bf16 %v2023, %v2023
    %v2026 = vld [vmem:[%s5] sm:$0xf]
    %v2027 = vld [vmem:[%s5 + $0x4] sm:$0xf]
    %v2028 = vld [vmem:[%s5 + $0x8] sm:$0xf]
    %v2029 = vld [vmem:[%s5 + $0xc] sm:$0xf]
    %v2030 = vld [vmem:[%s5 + $0x10] sm:$0xf]
    %v2031 = vld [vmem:[%s5 + $0x14] sm:$0xf]
    %v2032 = vld [vmem:[%s5 + $0x18] sm:$0xf]
    %v2033 = vld [vmem:[%s5 + $0x1c] sm:$0xf]
    %v2034 = vld [vmem:[%s5 + $0x20] sm:$0xf]
    %v2035 = vld [vmem:[%s5 + $0x24] sm:$0xf]
    %v2036 = vld [vmem:[%s5 + $0x28] sm:$0xf]
    %v2037 = vld [vmem:[%s5 + $0x2c] sm:$0xf]
    %v2038 = vld [vmem:[%s5 + $0x30] sm:$0xf]
    %v2039 = vld [vmem:[%s5 + $0x34] sm:$0xf]
    %v2040 = vld [vmem:[%s5 + $0x38] sm:$0xf]
    %v2041 = vld [vmem:[%s5 + $0x3c] sm:$0xf]
    %v2042 = vld [vmem:[%s5 + $0x40] sm:$0xf]
    %v2043 = vld [vmem:[%s5 + $0x44] sm:$0xf]
    %v2044 = vld [vmem:[%s5 + $0x48] sm:$0xf]
    %v2045 = vld [vmem:[%s5 + $0x4c] sm:$0xf]
    %v2046 = vld [vmem:[%s5 + $0x50] sm:$0xf]
    %v2047 = vld [vmem:[%s5 + $0x54] sm:$0xf]
    %v2048 = vld [vmem:[%s5 + $0x58] sm:$0xf]
    %v2049 = vld [vmem:[%s5 + $0x5c] sm:$0xf]
    %v2050 = vld [vmem:[%s5 + $0x60] sm:$0xf]
    %v2051 = vld [vmem:[%s5 + $0x64] sm:$0xf]
    %v2052 = vld [vmem:[%s5 + $0x68] sm:$0xf]
    %v2053 = vld [vmem:[%s5 + $0x6c] sm:$0xf]
    %v2054 = vld [vmem:[%s5 + $0x70] sm:$0xf]
    %v2055 = vld [vmem:[%s5 + $0x74] sm:$0xf]
    %v2056 = vld [vmem:[%s5 + $0x78] sm:$0xf]
    %v2057 = vld [vmem:[%s5 + $0x7c] sm:$0xf]
    %v2058 = vld [vmem:[%s6] sm:$0x1]
    %v2060 = vlaneseq
    %v2061 = vshrl.u32 %v2060, 7
    %v2062 = vsub.s32 0, %v2061
    %v2063 = vrot.slane %v2058, %v2062
    %v2097 = vunpack.c.l.b16 %v2026
    %v2098 = vunpack.c.l.b16 %v2027
    %v2099 = vunpack.c.l.b16 %v2028
    %v2100 = vunpack.c.l.b16 %v2029
    %v2101 = vunpack.c.l.b16 %v2030
    %v2102 = vunpack.c.l.b16 %v2031
    %v2103 = vunpack.c.l.b16 %v2032
    %v2104 = vunpack.c.l.b16 %v2033
    %v2105 = vunpack.c.l.b16 %v2034
    %v2106 = vunpack.c.l.b16 %v2035
    %v2107 = vunpack.c.l.b16 %v2036
    %v2108 = vunpack.c.l.b16 %v2037
    %v2109 = vunpack.c.l.b16 %v2038
    %v2110 = vunpack.c.l.b16 %v2039
    %v2111 = vunpack.c.l.b16 %v2040
    %v2112 = vunpack.c.l.b16 %v2041
    %v2113 = vunpack.c.l.b16 %v2042
    %v2114 = vunpack.c.l.b16 %v2043
    %v2115 = vunpack.c.l.b16 %v2044
    %v2116 = vunpack.c.l.b16 %v2045
    %v2117 = vunpack.c.l.b16 %v2046
    %v2118 = vunpack.c.l.b16 %v2047
    %v2119 = vunpack.c.l.b16 %v2048
    %v2120 = vunpack.c.l.b16 %v2049
    %v2121 = vunpack.c.l.b16 %v2050
    %v2122 = vunpack.c.l.b16 %v2051
    %v2123 = vunpack.c.l.b16 %v2052
    %v2124 = vunpack.c.l.b16 %v2053
    %v2125 = vunpack.c.l.b16 %v2054
    %v2126 = vunpack.c.l.b16 %v2055
    %v2127 = vunpack.c.l.b16 %v2056
    %v2128 = vunpack.c.l.b16 %v2057
    %v2129 = vpack.c.b16 %v2098, %v2097
    %v2130 = vpack.c.b16 %v2100, %v2099
    %v2131 = vpack.c.b16 %v2102, %v2101
    %v2132 = vpack.c.b16 %v2104, %v2103
    %v2133 = vpack.c.b16 %v2106, %v2105
    %v2134 = vpack.c.b16 %v2108, %v2107
    %v2135 = vpack.c.b16 %v2110, %v2109
    %v2136 = vpack.c.b16 %v2112, %v2111
    %v2137 = vpack.c.b16 %v2114, %v2113
    %v2138 = vpack.c.b16 %v2116, %v2115
    %v2139 = vpack.c.b16 %v2118, %v2117
    %v2140 = vpack.c.b16 %v2120, %v2119
    %v2141 = vpack.c.b16 %v2122, %v2121
    %v2142 = vpack.c.b16 %v2124, %v2123
    %v2143 = vpack.c.b16 %v2126, %v2125
    %v2144 = vpack.c.b16 %v2128, %v2127
    %2161 = vmatprep.subr.bf16.mxu0 0
    %2162 = vmatpush1.bf16.msra.mxu0 %v2136
    %2163 = vmatprep.subr.bf16.mxu0 0
    %2164 = vmatpush1.bf16.msra.mxu0 %v2135
    %2165 = vmatprep.subr.bf16.mxu0 0
    %2166 = vmatpush1.bf16.msra.mxu0 %v2134
    %2167 = vmatprep.subr.bf16.mxu0 0
    %2168 = vmatpush1.bf16.msra.mxu0 %v2133
    %2169 = vmatprep.subr.bf16.mxu0 0
    %2170 = vmatpush1.bf16.msra.mxu0 %v2132
    %2171 = vmatprep.subr.bf16.mxu0 0
    %2172 = vmatpush1.bf16.msra.mxu0 %v2131
    %2173 = vmatprep.subr.bf16.mxu0 0
    %2174 = vmatpush1.bf16.msra.mxu0 %v2130
    %2175 = vmatprep.subr.bf16.mxu0 0
    %2176 = vmatpush1.bf16.msra.mxu0 %v2129
    %2177 = vmatprep.subr.bf16.mxu0 0
    %2178 = vmatpush2.bf16.msra.mxu0 %v2144
    %2179 = vmatprep.subr.bf16.mxu0 0
    %2180 = vmatpush2.bf16.msra.mxu0 %v2143
    %2181 = vmatprep.subr.bf16.mxu0 0
    %2182 = vmatpush2.bf16.msra.mxu0 %v2142
    %2183 = vmatprep.subr.bf16.mxu0 0
    %2184 = vmatpush2.bf16.msra.mxu0 %v2141
    %2185 = vmatprep.subr.bf16.mxu0 0
    %2186 = vmatpush2.bf16.msra.mxu0 %v2140
    %2187 = vmatprep.subr.bf16.mxu0 0
    %2188 = vmatpush2.bf16.msra.mxu0 %v2139
    %2189 = vmatprep.subr.bf16.mxu0 0
    %2190 = vmatpush2.bf16.msra.mxu0 %v2138
    %2191 = vmatprep.subr.bf16.mxu0 0
    %2192 = vmatpush2.bf16.msra.mxu0 %v2137
    %2193 = vmatprep.mubr.bf16.mxu0 %v2025
    %2194 = vmatmul.mubr.bf16.gmra.mxu0 %v2024
    %v2195 = vpop.f32.mrf.mxu0
    %v2196 = vadd.f32 %v2063, %v2195
    %v2197 = vpop.f32.mrf.mxu0
    %v2198 = vpop.f32.mrf.mxu0
    %v2199 = vpop.f32.mrf.mxu0
    %2200 = vdwg.mxu0
    %v2201 = vmax.f32 %v2196, 0.0
    %v2202 = vpack.c.bf16 %v2201, %v2201
    %v2203 = vld [vmem:[%s7] sm:$0xf]
    %v2204 = vld [vmem:[%s7 + $0x4] sm:$0xf]
    %v2205 = vld [vmem:[%s7 + $0x8] sm:$0xf]
    %v2206 = vld [vmem:[%s7 + $0xc] sm:$0xf]
    %v2207 = vld [vmem:[%s7 + $0x10] sm:$0xf]
    %v2208 = vld [vmem:[%s7 + $0x14] sm:$0xf]
    %v2209 = vld [vmem:[%s7 + $0x18] sm:$0xf]
    %v2210 = vld [vmem:[%s7 + $0x1c] sm:$0xf]
    %v2211 = vld [vmem:[%s7 + $0x20] sm:$0xf]
    %v2212 = vld [vmem:[%s7 + $0x24] sm:$0xf]
    %v2213 = vld [vmem:[%s7 + $0x28] sm:$0xf]
    %v2214 = vld [vmem:[%s7 + $0x2c] sm:$0xf]
    %v2215 = vld [vmem:[%s7 + $0x30] sm:$0xf]
    %v2216 = vld [vmem:[%s7 + $0x34] sm:$0xf]
    %v2217 = vld [vmem:[%s7 + $0x38] sm:$0xf]
    %v2218 = vld [vmem:[%s7 + $0x3c] sm:$0xf]
    %v2219 = vld [vmem:[%s8] sm:$0x1]
    %v2221 = vlaneseq
    %v2222 = vshrl.u32 %v2221, 7
    %v2223 = vsub.s32 0, %v2222
    %v2224 = vrot.slane %v2219, %v2223
    %v2242 = vunpack.c.l.b16 %v2203
    %v2243 = vunpack.c.l.b16 %v2204
    %v2244 = vunpack.c.l.b16 %v2205
    %v2245 = vunpack.c.l.b16 %v2206
    %v2246 = vunpack.c.l.b16 %v2207
    %v2247 = vunpack.c.l.b16 %v2208
    %v2248 = vunpack.c.l.b16 %v2209
    %v2249 = vunpack.c.l.b16 %v2210
    %v2250 = vunpack.c.l.b16 %v2211
    %v2251 = vunpack.c.l.b16 %v2212
    %v2252 = vunpack.c.l.b16 %v2213
    %v2253 = vunpack.c.l.b16 %v2214
    %v2254 = vunpack.c.l.b16 %v2215
    %v2255 = vunpack.c.l.b16 %v2216
    %v2256 = vunpack.c.l.b16 %v2217
    %v2257 = vunpack.c.l.b16 %v2218
    %v2258 = vpack.c.b16 %v2243, %v2242
    %v2259 = vpack.c.b16 %v2245, %v2244
    %v2260 = vpack.c.b16 %v2247, %v2246
    %v2261 = vpack.c.b16 %v2249, %v2248
    %v2262 = vpack.c.b16 %v2251, %v2250
    %v2263 = vpack.c.b16 %v2253, %v2252
    %v2264 = vpack.c.b16 %v2255, %v2254
    %v2265 = vpack.c.b16 %v2257, %v2256
    %2274 = vmatprep.subr.bf16.mxu0 0
    %2275 = vmatpush1.bf16.msra.mxu0 %v2265
    %2276 = vmatprep.subr.bf16.mxu0 0
    %2277 = vmatpush1.bf16.msra.mxu0 %v2264
    %2278 = vmatprep.subr.bf16.mxu0 0
    %2279 = vmatpush1.bf16.msra.mxu0 %v2263
    %2280 = vmatprep.subr.bf16.mxu0 0
    %2281 = vmatpush1.bf16.msra.mxu0 %v2262
    %2282 = vmatprep.subr.bf16.mxu0 0
    %2283 = vmatpush1.bf16.msra.mxu0 %v2261
    %2284 = vmatprep.subr.bf16.mxu0 0
    %2285 = vmatpush1.bf16.msra.mxu0 %v2260
    %2286 = vmatprep.subr.bf16.mxu0 0
    %2287 = vmatpush1.bf16.msra.mxu0 %v2259
    %2288 = vmatprep.subr.bf16.mxu0 0
    %2289 = vmatpush1.bf16.msra.mxu0 %v2258
    %2290 = vmatprep.subr.bf16.mxu0 0
    %2291 = vmatpush2.bf16.msra.mxu0 0
    %2292 = vmatprep.subr.bf16.mxu0 0
    %2293 = vmatpush2.bf16.msra.mxu0 0
    %2294 = vmatprep.subr.bf16.mxu0 0
    %2295 = vmatpush2.bf16.msra.mxu0 0
    %2296 = vmatprep.subr.bf16.mxu0 0
    %2297 = vmatpush2.bf16.msra.mxu0 0
    %2298 = vmatprep.subr.bf16.mxu0 0
    %2299 = vmatpush2.bf16.msra.mxu0 0
    %2300 = vmatprep.subr.bf16.mxu0 0
    %2301 = vmatpush2.bf16.msra.mxu0 0
    %2302 = vmatprep.subr.bf16.mxu0 0
    %2303 = vmatpush2.bf16.msra.mxu0 0
    %2304 = vmatprep.subr.bf16.mxu0 0
    %2305 = vmatpush2.bf16.msra.mxu0 0
    %2306 = vmatprep.mubr.bf16.mxu0 0
    %2307 = vmatmul.mubr.bf16.gmra.mxu0 %v2202
    %v2308 = vpop.f32.mrf.mxu0
    %v2309 = vadd.f32 %v2224, %v2308
    %v2310 = vpop.f32.mrf.mxu0
    %v2311 = vpop.f32.mrf.mxu0
    %v2312 = vpop.f32.mrf.mxu0
    %2313 = vdwg.mxu0
    %vm2314 = vcmask 130048
    %2315 = vst.msk [vmem:[#allocation8] sm:$0xff] %vm2314, %v2309
    %v2316 = vpack.c.bf16 %v2309, %v2309
    %v2317 = vld [vmem:[%s9] sm:$0xf]
    %v2318 = vld [vmem:[%s9 + $0x4] sm:$0xf]
    %v2319 = vld [vmem:[%s10] sm:$0x1]
    %v2321 = vlaneseq
    %v2322 = vshrl.u32 %v2321, 7
    %v2323 = vsub.s32 0, %v2322
    %v2324 = vrot.slane %v2319, %v2323
    %v2328 = vunpack.c.l.b16 %v2317
    %v2329 = vunpack.c.l.b16 %v2318
    %v2330 = vpack.c.b16 %v2329, %v2328
    %v2333 = vsel %vm2314, %v2316, 0
    %2335 = vmatprep.subr.bf16.mxu0 0
    %2336 = vmatpush1.bf16.msra.mxu0 0
    %2337 = vmatprep.subr.bf16.mxu0 0
    %2338 = vmatpush1.bf16.msra.mxu0 0
    %2339 = vmatprep.subr.bf16.mxu0 0
    %2340 = vmatpush1.bf16.msra.mxu0 0
    %2341 = vmatprep.subr.bf16.mxu0 0
    %2342 = vmatpush1.bf16.msra.mxu0 0
    %2343 = vmatprep.subr.bf16.mxu0 0
    %2344 = vmatpush1.bf16.msra.mxu0 0
    %2345 = vmatprep.subr.bf16.mxu0 0
    %2346 = vmatpush1.bf16.msra.mxu0 0
    %2347 = vmatprep.subr.bf16.mxu0 0
    %2348 = vmatpush1.bf16.msra.mxu0 0
    %2349 = vmatprep.subr.bf16.mxu0 0
    %2350 = vmatpush1.bf16.msra.mxu0 %v2330
    %2351 = vmatprep.subr.bf16.mxu0 0
    %2352 = vmatpush2.bf16.msra.mxu0 0
    %2353 = vmatprep.subr.bf16.mxu0 0
    %2354 = vmatpush2.bf16.msra.mxu0 0
    %2355 = vmatprep.subr.bf16.mxu0 0
    %2356 = vmatpush2.bf16.msra.mxu0 0
    %2357 = vmatprep.subr.bf16.mxu0 0
    %2358 = vmatpush2.bf16.msra.mxu0 0
    %2359 = vmatprep.subr.bf16.mxu0 0
    %2360 = vmatpush2.bf16.msra.mxu0 0
    %2361 = vmatprep.subr.bf16.mxu0 0
    %2362 = vmatpush2.bf16.msra.mxu0 0
    %2363 = vmatprep.subr.bf16.mxu0 0
    %2364 = vmatpush2.bf16.msra.mxu0 0
    %2365 = vmatprep.subr.bf16.mxu0 0
    %2366 = vmatpush2.bf16.msra.mxu0 0
    %2367 = vmatprep.mubr.bf16.mxu0 0
    %2368 = vmatmul.mubr.bf16.gmra.mxu0 %v2333
    %v2369 = vpop.f32.mrf.mxu0
    %v2370 = vadd.f32 %v2324, %v2369
    %v2371 = vpop.f32.mrf.mxu0
    %v2372 = vpop.f32.mrf.mxu0
    %v2373 = vpop.f32.mrf.mxu0
    %2374 = vdwg.mxu0
    %v2375 = vmax.f32 %v2370, 0.0
    %v2376 = vpack.c.bf16 %v2375, %v2375
    %v2377 = vld [vmem:[%s11] sm:$0xff]
    %v2378 = vld [vmem:[%s11 + $0x8] sm:$0xff]
    %v2379 = vld [vmem:[%s11 + $0x10] sm:$0xff]
    %v2380 = vld [vmem:[%s11 + $0x18] sm:$0xff]
    %v2381 = vld [vmem:[%s11 + $0x20] sm:$0xff]
    %v2382 = vld [vmem:[%s11 + $0x28] sm:$0xff]
    %v2383 = vld [vmem:[%s11 + $0x30] sm:$0xff]
    %v2384 = vld [vmem:[%s11 + $0x38] sm:$0xff]
    %v2385 = vld [vmem:[%s11 + $0x40] sm:$0xff]
    %v2386 = vld [vmem:[%s11 + $0x48] sm:$0xff]
    %v2387 = vld [vmem:[%s11 + $0x50] sm:$0xff]
    %v2388 = vld [vmem:[%s11 + $0x58] sm:$0xff]
    %v2389 = vld [vmem:[%s11 + $0x60] sm:$0xff]
    %v2390 = vld [vmem:[%s11 + $0x68] sm:$0xff]
    %v2391 = vld [vmem:[%s11 + $0x70] sm:$0xff]
    %v2392 = vld [vmem:[%s11 + $0x78] sm:$0xff]
    %v2393 = vld [vmem:[%s12] sm:$0x3]
    %v2395 = vlaneseq
    %v2396 = vshrl.u32 %v2395, 7
    %v2397 = vsub.s32 0, %v2396
    %v2398 = vrot.slane %v2393, %v2397
    %v2399 = vlaneseq
    %v2400 = vshrl.u32 %v2399, 7
    %v2401 = vsub.s32 1, %v2400
    %v2402 = vrot.slane %v2393, %v2401
    %v2421 = vunpack.c.l.b16 %v2377
    %v2422 = vunpack.c.h.b16 %v2377
    %v2423 = vunpack.c.l.b16 %v2378
    %v2424 = vunpack.c.h.b16 %v2378
    %v2425 = vunpack.c.l.b16 %v2379
    %v2426 = vunpack.c.h.b16 %v2379
    %v2427 = vunpack.c.l.b16 %v2380
    %v2428 = vunpack.c.h.b16 %v2380
    %v2429 = vunpack.c.l.b16 %v2381
    %v2430 = vunpack.c.h.b16 %v2381
    %v2431 = vunpack.c.l.b16 %v2382
    %v2432 = vunpack.c.h.b16 %v2382
    %v2433 = vunpack.c.l.b16 %v2383
    %v2434 = vunpack.c.h.b16 %v2383
    %v2435 = vunpack.c.l.b16 %v2384
    %v2436 = vunpack.c.h.b16 %v2384
    %v2437 = vunpack.c.l.b16 %v2385
    %v2438 = vunpack.c.h.b16 %v2385
    %v2439 = vunpack.c.l.b16 %v2386
    %v2440 = vunpack.c.h.b16 %v2386
    %v2441 = vunpack.c.l.b16 %v2387
    %v2442 = vunpack.c.h.b16 %v2387
    %v2443 = vunpack.c.l.b16 %v2388
    %v2444 = vunpack.c.h.b16 %v2388
    %v2445 = vunpack.c.l.b16 %v2389
    %v2446 = vunpack.c.h.b16 %v2389
    %v2447 = vunpack.c.l.b16 %v2390
    %v2448 = vunpack.c.h.b16 %v2390
    %v2449 = vunpack.c.l.b16 %v2391
    %v2450 = vunpack.c.h.b16 %v2391
    %v2451 = vunpack.c.l.b16 %v2392
    %v2452 = vunpack.c.h.b16 %v2392
    %v2453 = vpack.c.b16 %v2423, %v2421
    %v2454 = vpack.c.b16 %v2424, %v2422
    %v2455 = vpack.c.b16 %v2427, %v2425
    %v2456 = vpack.c.b16 %v2428, %v2426
    %v2457 = vpack.c.b16 %v2431, %v2429
    %v2458 = vpack.c.b16 %v2432, %v2430
    %v2459 = vpack.c.b16 %v2435, %v2433
    %v2460 = vpack.c.b16 %v2436, %v2434
    %v2461 = vpack.c.b16 %v2439, %v2437
    %v2462 = vpack.c.b16 %v2440, %v2438
    %v2463 = vpack.c.b16 %v2443, %v2441
    %v2464 = vpack.c.b16 %v2444, %v2442
    %v2465 = vpack.c.b16 %v2447, %v2445
    %v2466 = vpack.c.b16 %v2448, %v2446
    %v2467 = vpack.c.b16 %v2451, %v2449
    %v2468 = vpack.c.b16 %v2452, %v2450
    %2485 = vmatprep.subr.bf16.mxu0 %v2468
    %2486 = vmatpush1.bf16.msra.mxu0 %v2467
    %2487 = vmatprep.subr.bf16.mxu0 %v2466
    %2488 = vmatpush1.bf16.msra.mxu0 %v2465
    %2489 = vmatprep.subr.bf16.mxu0 %v2464
    %2490 = vmatpush1.bf16.msra.mxu0 %v2463
    %2491 = vmatprep.subr.bf16.mxu0 %v2462
    %2492 = vmatpush1.bf16.msra.mxu0 %v2461
    %2493 = vmatprep.subr.bf16.mxu0 %v2460
    %2494 = vmatpush1.bf16.msra.mxu0 %v2459
    %2495 = vmatprep.subr.bf16.mxu0 %v2458
    %2496 = vmatpush1.bf16.msra.mxu0 %v2457
    %2497 = vmatprep.subr.bf16.mxu0 %v2456
    %2498 = vmatpush1.bf16.msra.mxu0 %v2455
    %2499 = vmatprep.subr.bf16.mxu0 %v2454
    %2500 = vmatpush1.bf16.msra.mxu0 %v2453
    %2501 = vmatprep.subr.bf16.mxu0 0
    %2502 = vmatpush2.bf16.msra.mxu0 0
    %2503 = vmatprep.subr.bf16.mxu0 0
    %2504 = vmatpush2.bf16.msra.mxu0 0
    %2505 = vmatprep.subr.bf16.mxu0 0
    %2506 = vmatpush2.bf16.msra.mxu0 0
    %2507 = vmatprep.subr.bf16.mxu0 0
    %2508 = vmatpush2.bf16.msra.mxu0 0
    %2509 = vmatprep.subr.bf16.mxu0 0
    %2510 = vmatpush2.bf16.msra.mxu0 0
    %2511 = vmatprep.subr.bf16.mxu0 0
    %2512 = vmatpush2.bf16.msra.mxu0 0
    %2513 = vmatprep.subr.bf16.mxu0 0
    %2514 = vmatpush2.bf16.msra.mxu0 0
    %2515 = vmatprep.subr.bf16.mxu0 0
    %2516 = vmatpush2.bf16.msra.mxu0 0
    %2517 = vmatprep.mubr.bf16.mxu0 0
    %2518 = vmatmul.mubr.bf16.gmra.mxu0 %v2376
    %v2519 = vpop.f32.mrf.mxu0
    %v2520 = vadd.f32 %v2398, %v2519
    %v2521 = vpop.f32.mrf.mxu0
    %v2522 = vadd.f32 %v2402, %v2521
    %v2523 = vpop.f32.mrf.mxu0
    %v2524 = vpop.f32.mrf.mxu0
    %2525 = vdwg.mxu0
    %v2526 = vmax.f32 %v2520, 0.0
    %v2527 = vmax.f32 %v2522, 0.0
    %v2528 = vpack.c.bf16 %v2526, %v2526
    %v2529 = vpack.c.bf16 %v2527, %v2527
    %v2530 = vld [vmem:[#allocation6] sm:$0xff]
    %v2531 = vld [vmem:[#allocation6 + $0x8] sm:$0xff]
    %v2532 = vld [vmem:[#allocation6 + $0x10] sm:$0xff]
    %v2533 = vld [vmem:[#allocation6 + $0x18] sm:$0xff]
    %v2534 = vld [vmem:[#allocation6 + $0x20] sm:$0xff]
    %v2535 = vld [vmem:[#allocation6 + $0x28] sm:$0xf]
    %v2536 = vld [vmem:[#allocation6 + $0x2c] sm:$0xff]
    %v2537 = vld [vmem:[#allocation6 + $0x34] sm:$0xff]
    %v2538 = vld [vmem:[#allocation6 + $0x3c] sm:$0xff]
    %v2539 = vld [vmem:[#allocation6 + $0x44] sm:$0xff]
    %v2540 = vld [vmem:[#allocation6 + $0x4c] sm:$0xff]
    %v2541 = vld [vmem:[#allocation6 + $0x54] sm:$0xf]
    %v2542 = vld [vmem:[#allocation6 + $0x58] sm:$0xff]
    %v2543 = vld [vmem:[#allocation6 + $0x60] sm:$0xff]
    %v2544 = vld [vmem:[#allocation6 + $0x68] sm:$0xff]
    %v2545 = vld [vmem:[#allocation6 + $0x70] sm:$0xff]
    %v2546 = vld [vmem:[#allocation6 + $0x78] sm:$0xff]
    %v2547 = vld [vmem:[#allocation6 + $0x80] sm:$0xf]
    %v2548 = vld [vmem:[#allocation6 + $0x84] sm:$0xff]
    %v2549 = vld [vmem:[#allocation6 + $0x8c] sm:$0xff]
    %v2550 = vld [vmem:[#allocation6 + $0x94] sm:$0xff]
    %v2551 = vld [vmem:[#allocation6 + $0x9c] sm:$0xff]
    %v2552 = vld [vmem:[#allocation6 + $0xa4] sm:$0xff]
    %v2553 = vld [vmem:[#allocation6 + $0xac] sm:$0xf]
    %v2554 = vld [vmem:[#allocation6 + $0xb0] sm:$0xff]
    %v2555 = vld [vmem:[#allocation6 + $0xb8] sm:$0xff]
    %v2556 = vld [vmem:[#allocation6 + $0xc0] sm:$0xff]
    %v2557 = vld [vmem:[#allocation6 + $0xc8] sm:$0xff]
    %v2558 = vld [vmem:[#allocation6 + $0xd0] sm:$0xff]
    %v2559 = vld [vmem:[#allocation6 + $0xd8] sm:$0xf]
    %v2560 = vld [vmem:[#allocation6 + $0xdc] sm:$0xff]
    %v2561 = vld [vmem:[#allocation6 + $0xe4] sm:$0xff]
    %v2562 = vld [vmem:[#allocation6 + $0xec] sm:$0xff]
    %v2563 = vld [vmem:[#allocation6 + $0xf4] sm:$0xff]
    %v2564 = vld [vmem:[#allocation6 + $0xfc] sm:$0xff]
    %v2565 = vld [vmem:[#allocation6 + $0x104] sm:$0xf]
    %v2566 = vld [vmem:[#allocation6 + $0x108] sm:$0xff]
    %v2567 = vld [vmem:[#allocation6 + $0x110] sm:$0xff]
    %v2568 = vld [vmem:[#allocation6 + $0x118] sm:$0xff]
    %v2569 = vld [vmem:[#allocation6 + $0x120] sm:$0xff]
    %v2570 = vld [vmem:[#allocation6 + $0x128] sm:$0xff]
    %v2571 = vld [vmem:[#allocation6 + $0x130] sm:$0xf]
    %v2572 = vld [vmem:[#allocation6 + $0x134] sm:$0xff]
    %v2573 = vld [vmem:[#allocation6 + $0x13c] sm:$0xff]
    %v2574 = vld [vmem:[#allocation6 + $0x144] sm:$0xff]
    %v2575 = vld [vmem:[#allocation6 + $0x14c] sm:$0xff]
    %v2576 = vld [vmem:[#allocation6 + $0x154] sm:$0xff]
    %v2577 = vld [vmem:[#allocation6 + $0x15c] sm:$0xf]
    %v2578 = vld [vmem:[#allocation6 + $0x160] sm:$0xff]
    %v2579 = vld [vmem:[#allocation6 + $0x168] sm:$0xff]
    %v2580 = vld [vmem:[#allocation6 + $0x170] sm:$0xff]
    %v2581 = vld [vmem:[#allocation6 + $0x178] sm:$0xff]
    %v2582 = vld [vmem:[#allocation6 + $0x180] sm:$0xff]
    %v2583 = vld [vmem:[#allocation6 + $0x188] sm:$0xf]
    %v2584 = vld [vmem:[#allocation6 + $0x18c] sm:$0xff]
    %v2585 = vld [vmem:[#allocation6 + $0x194] sm:$0xff]
    %v2586 = vld [vmem:[#allocation6 + $0x19c] sm:$0xff]
    %v2587 = vld [vmem:[#allocation6 + $0x1a4] sm:$0xff]
    %v2588 = vld [vmem:[#allocation6 + $0x1ac] sm:$0xff]
    %v2589 = vld [vmem:[#allocation6 + $0x1b4] sm:$0xf]
    %v2590 = vld [vmem:[#allocation6 + $0x1b8] sm:$0xff]
    %v2591 = vld [vmem:[#allocation6 + $0x1c0] sm:$0xff]
    %v2592 = vld [vmem:[#allocation6 + $0x1c8] sm:$0xff]
    %v2593 = vld [vmem:[#allocation6 + $0x1d0] sm:$0xff]
    %v2594 = vld [vmem:[#allocation6 + $0x1d8] sm:$0xff]
    %v2595 = vld [vmem:[#allocation6 + $0x1e0] sm:$0xf]
    %v2596 = vld [vmem:[#allocation6 + $0x1e4] sm:$0xff]
    %v2597 = vld [vmem:[#allocation6 + $0x1ec] sm:$0xff]
    %v2598 = vld [vmem:[#allocation6 + $0x1f4] sm:$0xff]
    %v2599 = vld [vmem:[#allocation6 + $0x1fc] sm:$0xff]
    %v2600 = vld [vmem:[#allocation6 + $0x204] sm:$0xff]
    %v2601 = vld [vmem:[#allocation6 + $0x20c] sm:$0xf]
    %v2602 = vld [vmem:[#allocation6 + $0x210] sm:$0xff]
    %v2603 = vld [vmem:[#allocation6 + $0x218] sm:$0xff]
    %v2604 = vld [vmem:[#allocation6 + $0x220] sm:$0xff]
    %v2605 = vld [vmem:[#allocation6 + $0x228] sm:$0xff]
    %v2606 = vld [vmem:[#allocation6 + $0x230] sm:$0xff]
    %v2607 = vld [vmem:[#allocation6 + $0x238] sm:$0xf]
    %v2608 = vld [vmem:[#allocation6 + $0x23c] sm:$0xff]
    %v2609 = vld [vmem:[#allocation6 + $0x244] sm:$0xff]
    %v2610 = vld [vmem:[#allocation6 + $0x24c] sm:$0xff]
    %v2611 = vld [vmem:[#allocation6 + $0x254] sm:$0xff]
    %v2612 = vld [vmem:[#allocation6 + $0x25c] sm:$0xff]
    %v2613 = vld [vmem:[#allocation6 + $0x264] sm:$0xf]
    %v2614 = vld [vmem:[#allocation6 + $0x268] sm:$0xff]
    %v2615 = vld [vmem:[#allocation6 + $0x270] sm:$0xff]
    %v2616 = vld [vmem:[#allocation6 + $0x278] sm:$0xff]
    %v2617 = vld [vmem:[#allocation6 + $0x280] sm:$0xff]
    %v2618 = vld [vmem:[#allocation6 + $0x288] sm:$0xff]
    %v2619 = vld [vmem:[#allocation6 + $0x290] sm:$0xf]
    %v2620 = vld [vmem:[#allocation6 + $0x294] sm:$0xff]
    %v2621 = vld [vmem:[#allocation6 + $0x29c] sm:$0xff]
    %v2622 = vld [vmem:[#allocation6 + $0x2a4] sm:$0xff]
    %v2623 = vld [vmem:[#allocation6 + $0x2ac] sm:$0xff]
    %v2624 = vld [vmem:[#allocation6 + $0x2b4] sm:$0xff]
    %v2625 = vld [vmem:[#allocation6 + $0x2bc] sm:$0xf]
    %v2626 = vld [vmem:[#allocation6 + $0x2c0] sm:$0xff]
    %v2627 = vld [vmem:[#allocation6 + $0x2c8] sm:$0xff]
    %v2628 = vld [vmem:[#allocation6 + $0x2d0] sm:$0xff]
    %v2629 = vld [vmem:[#allocation6 + $0x2d8] sm:$0xff]
    %v2630 = vld [vmem:[#allocation6 + $0x2e0] sm:$0xff]
    %v2631 = vld [vmem:[#allocation6 + $0x2e8] sm:$0xf]
    %v2632 = vld [vmem:[#allocation6 + $0x2ec] sm:$0xff]
    %v2633 = vld [vmem:[#allocation6 + $0x2f4] sm:$0xff]
    %v2634 = vld [vmem:[#allocation6 + $0x2fc] sm:$0xff]
    %v2635 = vld [vmem:[#allocation6 + $0x304] sm:$0xff]
    %v2636 = vld [vmem:[#allocation6 + $0x30c] sm:$0xff]
    %v2637 = vld [vmem:[#allocation6 + $0x314] sm:$0xf]
    %v2638 = vld [vmem:[#allocation6 + $0x318] sm:$0xff]
    %v2639 = vld [vmem:[#allocation6 + $0x320] sm:$0xff]
    %v2640 = vld [vmem:[#allocation6 + $0x328] sm:$0xff]
    %v2641 = vld [vmem:[#allocation6 + $0x330] sm:$0xff]
    %v2642 = vld [vmem:[#allocation6 + $0x338] sm:$0xff]
    %v2643 = vld [vmem:[#allocation6 + $0x340] sm:$0xf]
    %v2644 = vld [vmem:[#allocation6 + $0x344] sm:$0xff]
    %v2645 = vld [vmem:[#allocation6 + $0x34c] sm:$0xff]
    %v2646 = vld [vmem:[#allocation6 + $0x354] sm:$0xff]
    %v2647 = vld [vmem:[#allocation6 + $0x35c] sm:$0xff]
    %v2648 = vld [vmem:[#allocation6 + $0x364] sm:$0xff]
    %v2649 = vld [vmem:[#allocation6 + $0x36c] sm:$0xf]
    %v2650 = vld [vmem:[#allocation6 + $0x370] sm:$0xff]
    %v2651 = vld [vmem:[#allocation6 + $0x378] sm:$0xff]
    %v2652 = vld [vmem:[#allocation6 + $0x380] sm:$0xff]
    %v2653 = vld [vmem:[#allocation6 + $0x388] sm:$0xff]
    %v2654 = vld [vmem:[#allocation6 + $0x390] sm:$0xff]
    %v2655 = vld [vmem:[#allocation6 + $0x398] sm:$0xf]
    %v2656 = vld [vmem:[#allocation6 + $0x39c] sm:$0xff]
    %v2657 = vld [vmem:[#allocation6 + $0x3a4] sm:$0xff]
    %v2658 = vld [vmem:[#allocation6 + $0x3ac] sm:$0xff]
    %v2659 = vld [vmem:[#allocation6 + $0x3b4] sm:$0xff]
    %v2660 = vld [vmem:[#allocation6 + $0x3bc] sm:$0xff]
    %v2661 = vld [vmem:[#allocation6 + $0x3c4] sm:$0xf]
    %v2662 = vld [vmem:[#allocation6 + $0x3c8] sm:$0xff]
    %v2663 = vld [vmem:[#allocation6 + $0x3d0] sm:$0xff]
    %v2664 = vld [vmem:[#allocation6 + $0x3d8] sm:$0xff]
    %v2665 = vld [vmem:[#allocation6 + $0x3e0] sm:$0xff]
    %v2666 = vld [vmem:[#allocation6 + $0x3e8] sm:$0xff]
    %v2667 = vld [vmem:[#allocation6 + $0x3f0] sm:$0xf]
    %v2668 = vld [vmem:[#allocation6 + $0x3f4] sm:$0xff]
    %v2669 = vld [vmem:[#allocation6 + $0x3fc] sm:$0xff]
    %v2670 = vld [vmem:[#allocation6 + $0x404] sm:$0xff]
    %v2671 = vld [vmem:[#allocation6 + $0x40c] sm:$0xff]
    %v2672 = vld [vmem:[#allocation6 + $0x414] sm:$0xff]
    %v2673 = vld [vmem:[#allocation6 + $0x41c] sm:$0xf]
    %v2674 = vld [vmem:[#allocation6 + $0x420] sm:$0xff]
    %v2675 = vld [vmem:[#allocation6 + $0x428] sm:$0xff]
    %v2676 = vld [vmem:[#allocation6 + $0x430] sm:$0xff]
    %v2677 = vld [vmem:[#allocation6 + $0x438] sm:$0xff]
    %v2678 = vld [vmem:[#allocation6 + $0x440] sm:$0xff]
    %v2679 = vld [vmem:[#allocation6 + $0x448] sm:$0xf]
    %v2680 = vld [vmem:[#allocation6 + $0x44c] sm:$0xff]
    %v2681 = vld [vmem:[#allocation6 + $0x454] sm:$0xff]
    %v2682 = vld [vmem:[#allocation6 + $0x45c] sm:$0xff]
    %v2683 = vld [vmem:[#allocation6 + $0x464] sm:$0xff]
    %v2684 = vld [vmem:[#allocation6 + $0x46c] sm:$0xff]
    %v2685 = vld [vmem:[#allocation6 + $0x474] sm:$0xf]
    %v2686 = vld [vmem:[#allocation6 + $0x478] sm:$0xff]
    %v2687 = vld [vmem:[#allocation6 + $0x480] sm:$0xff]
    %v2688 = vld [vmem:[#allocation6 + $0x488] sm:$0xff]
    %v2689 = vld [vmem:[#allocation6 + $0x490] sm:$0xff]
    %v2690 = vld [vmem:[#allocation6 + $0x498] sm:$0xff]
    %v2691 = vld [vmem:[#allocation6 + $0x4a0] sm:$0xf]
    %v2692 = vld [vmem:[#allocation6 + $0x4a4] sm:$0xff]
    %v2693 = vld [vmem:[#allocation6 + $0x4ac] sm:$0xff]
    %v2694 = vld [vmem:[#allocation6 + $0x4b4] sm:$0xff]
    %v2695 = vld [vmem:[#allocation6 + $0x4bc] sm:$0xff]
    %v2696 = vld [vmem:[#allocation6 + $0x4c4] sm:$0xff]
    %v2697 = vld [vmem:[#allocation6 + $0x4cc] sm:$0xf]
    %v2698 = vld [vmem:[#allocation6 + $0x4d0] sm:$0xff]
    %v2699 = vld [vmem:[#allocation6 + $0x4d8] sm:$0xff]
    %v2700 = vld [vmem:[#allocation6 + $0x4e0] sm:$0xff]
    %v2701 = vld [vmem:[#allocation6 + $0x4e8] sm:$0xff]
    %v2702 = vld [vmem:[#allocation6 + $0x4f0] sm:$0xff]
    %v2703 = vld [vmem:[#allocation6 + $0x4f8] sm:$0xf]
    %v2704 = vld [vmem:[#allocation6 + $0x4fc] sm:$0xff]
    %v2705 = vld [vmem:[#allocation6 + $0x504] sm:$0xff]
    %v2706 = vld [vmem:[#allocation6 + $0x50c] sm:$0xff]
    %v2707 = vld [vmem:[#allocation6 + $0x514] sm:$0xff]
    %v2708 = vld [vmem:[#allocation6 + $0x51c] sm:$0xff]
    %v2709 = vld [vmem:[#allocation6 + $0x524] sm:$0xf]
    %v2710 = vld [vmem:[#allocation6 + $0x528] sm:$0xff]
    %v2711 = vld [vmem:[#allocation6 + $0x530] sm:$0xff]
    %v2712 = vld [vmem:[#allocation6 + $0x538] sm:$0xff]
    %v2713 = vld [vmem:[#allocation6 + $0x540] sm:$0xff]
    %v2714 = vld [vmem:[#allocation6 + $0x548] sm:$0xff]
    %v2715 = vld [vmem:[#allocation6 + $0x550] sm:$0xf]
    %v2716 = vld [vmem:[#allocation6 + $0x554] sm:$0xff]
    %v2717 = vld [vmem:[#allocation6 + $0x55c] sm:$0xff]
    %v2718 = vld [vmem:[#allocation6 + $0x564] sm:$0xff]
    %v2719 = vld [vmem:[#allocation6 + $0x56c] sm:$0xff]
    %v2720 = vld [vmem:[#allocation6 + $0x574] sm:$0xff]
    %v2721 = vld [vmem:[#allocation6 + $0x57c] sm:$0xf]
    %v2722 = vld [vmem:[%s14] sm:$0xff]
    %v2723 = vld [vmem:[%s14 + $0x8] sm:$0x7]
    %v2726 = vlaneseq
    %v2727 = vshrl.u32 %v2726, 7
    %v2728 = vsub.s32 0, %v2727
    %v2729 = vrot.slane %v2722, %v2728
    %v2730 = vlaneseq
    %v2731 = vshrl.u32 %v2730, 7
    %v2732 = vsub.s32 1, %v2731
    %v2733 = vrot.slane %v2722, %v2732
    %v2734 = vlaneseq
    %v2735 = vshrl.u32 %v2734, 7
    %v2736 = vsub.s32 2, %v2735
    %v2737 = vrot.slane %v2722, %v2736
    %v2738 = vlaneseq
    %v2739 = vshrl.u32 %v2738, 7
    %v2740 = vsub.s32 3, %v2739
    %v2741 = vrot.slane %v2722, %v2740
    %v2742 = vlaneseq
    %v2743 = vshrl.u32 %v2742, 7
    %v2744 = vsub.s32 4, %v2743
    %v2745 = vrot.slane %v2722, %v2744
    %v2746 = vlaneseq
    %v2747 = vshrl.u32 %v2746, 7
    %v2748 = vsub.s32 5, %v2747
    %v2749 = vrot.slane %v2722, %v2748
    %v2750 = vlaneseq
    %v2751 = vshrl.u32 %v2750, 7
    %v2752 = vsub.s32 6, %v2751
    %v2753 = vrot.slane %v2722, %v2752
    %v2754 = vlaneseq
    %v2755 = vshrl.u32 %v2754, 7
    %v2756 = vsub.s32 7, %v2755
    %v2757 = vrot.slane %v2722, %v2756
    %v2758 = vlaneseq
    %v2759 = vshrl.u32 %v2758, 7
    %v2760 = vsub.s32 0, %v2759
    %v2761 = vrot.slane %v2723, %v2760
    %v2762 = vlaneseq
    %v2763 = vshrl.u32 %v2762, 7
    %v2764 = vsub.s32 1, %v2763
    %v2765 = vrot.slane %v2723, %v2764
    %v2766 = vlaneseq
    %v2767 = vshrl.u32 %v2766, 7
    %v2768 = vsub.s32 2, %v2767
    %v2769 = vrot.slane %v2723, %v2768
    %v2973 = vunpack.c.l.b16 %v2530
    %v2974 = vunpack.c.h.b16 %v2530
    %v2975 = vunpack.c.l.b16 %v2531
    %v2976 = vunpack.c.h.b16 %v2531
    %v2977 = vunpack.c.l.b16 %v2532
    %v2978 = vunpack.c.h.b16 %v2532
    %v2979 = vunpack.c.l.b16 %v2533
    %v2980 = vunpack.c.h.b16 %v2533
    %v2981 = vunpack.c.l.b16 %v2534
    %v2982 = vunpack.c.h.b16 %v2534
    %v2983 = vunpack.c.l.b16 %v2535
    %v2984 = vunpack.c.l.b16 %v2536
    %v2985 = vunpack.c.h.b16 %v2536
    %v2986 = vunpack.c.l.b16 %v2537
    %v2987 = vunpack.c.h.b16 %v2537
    %v2988 = vunpack.c.l.b16 %v2538
    %v2989 = vunpack.c.h.b16 %v2538
    %v2990 = vunpack.c.l.b16 %v2539
    %v2991 = vunpack.c.h.b16 %v2539
    %v2992 = vunpack.c.l.b16 %v2540
    %v2993 = vunpack.c.h.b16 %v2540
    %v2994 = vunpack.c.l.b16 %v2541
    %v2995 = vunpack.c.l.b16 %v2542
    %v2996 = vunpack.c.h.b16 %v2542
    %v2997 = vunpack.c.l.b16 %v2543
    %v2998 = vunpack.c.h.b16 %v2543
    %v2999 = vunpack.c.l.b16 %v2544
    %v3000 = vunpack.c.h.b16 %v2544
    %v3001 = vunpack.c.l.b16 %v2545
    %v3002 = vunpack.c.h.b16 %v2545
    %v3003 = vunpack.c.l.b16 %v2546
    %v3004 = vunpack.c.h.b16 %v2546
    %v3005 = vunpack.c.l.b16 %v2547
    %v3006 = vunpack.c.l.b16 %v2548
    %v3007 = vunpack.c.h.b16 %v2548
    %v3008 = vunpack.c.l.b16 %v2549
    %v3009 = vunpack.c.h.b16 %v2549
    %v3010 = vunpack.c.l.b16 %v2550
    %v3011 = vunpack.c.h.b16 %v2550
    %v3012 = vunpack.c.l.b16 %v2551
    %v3013 = vunpack.c.h.b16 %v2551
    %v3014 = vunpack.c.l.b16 %v2552
    %v3015 = vunpack.c.h.b16 %v2552
    %v3016 = vunpack.c.l.b16 %v2553
    %v3017 = vunpack.c.l.b16 %v2554
    %v3018 = vunpack.c.h.b16 %v2554
    %v3019 = vunpack.c.l.b16 %v2555
    %v3020 = vunpack.c.h.b16 %v2555
    %v3021 = vunpack.c.l.b16 %v2556
    %v3022 = vunpack.c.h.b16 %v2556
    %v3023 = vunpack.c.l.b16 %v2557
    %v3024 = vunpack.c.h.b16 %v2557
    %v3025 = vunpack.c.l.b16 %v2558
    %v3026 = vunpack.c.h.b16 %v2558
    %v3027 = vunpack.c.l.b16 %v2559
    %v3028 = vunpack.c.l.b16 %v2560
    %v3029 = vunpack.c.h.b16 %v2560
    %v3030 = vunpack.c.l.b16 %v2561
    %v3031 = vunpack.c.h.b16 %v2561
    %v3032 = vunpack.c.l.b16 %v2562
    %v3033 = vunpack.c.h.b16 %v2562
    %v3034 = vunpack.c.l.b16 %v2563
    %v3035 = vunpack.c.h.b16 %v2563
    %v3036 = vunpack.c.l.b16 %v2564
    %v3037 = vunpack.c.h.b16 %v2564
    %v3038 = vunpack.c.l.b16 %v2565
    %v3039 = vunpack.c.l.b16 %v2566
    %v3040 = vunpack.c.h.b16 %v2566
    %v3041 = vunpack.c.l.b16 %v2567
    %v3042 = vunpack.c.h.b16 %v2567
    %v3043 = vunpack.c.l.b16 %v2568
    %v3044 = vunpack.c.h.b16 %v2568
    %v3045 = vunpack.c.l.b16 %v2569
    %v3046 = vunpack.c.h.b16 %v2569
    %v3047 = vunpack.c.l.b16 %v2570
    %v3048 = vunpack.c.h.b16 %v2570
    %v3049 = vunpack.c.l.b16 %v2571
    %v3050 = vunpack.c.l.b16 %v2572
    %v3051 = vunpack.c.h.b16 %v2572
    %v3052 = vunpack.c.l.b16 %v2573
    %v3053 = vunpack.c.h.b16 %v2573
    %v3054 = vunpack.c.l.b16 %v2574
    %v3055 = vunpack.c.h.b16 %v2574
    %v3056 = vunpack.c.l.b16 %v2575
    %v3057 = vunpack.c.h.b16 %v2575
    %v3058 = vunpack.c.l.b16 %v2576
    %v3059 = vunpack.c.h.b16 %v2576
    %v3060 = vunpack.c.l.b16 %v2577
    %v3061 = vunpack.c.l.b16 %v2578
    %v3062 = vunpack.c.h.b16 %v2578
    %v3063 = vunpack.c.l.b16 %v2579
    %v3064 = vunpack.c.h.b16 %v2579
    %v3065 = vunpack.c.l.b16 %v2580
    %v3066 = vunpack.c.h.b16 %v2580
    %v3067 = vunpack.c.l.b16 %v2581
    %v3068 = vunpack.c.h.b16 %v2581
    %v3069 = vunpack.c.l.b16 %v2582
    %v3070 = vunpack.c.h.b16 %v2582
    %v3071 = vunpack.c.l.b16 %v2583
    %v3072 = vunpack.c.l.b16 %v2584
    %v3073 = vunpack.c.h.b16 %v2584
    %v3074 = vunpack.c.l.b16 %v2585
    %v3075 = vunpack.c.h.b16 %v2585
    %v3076 = vunpack.c.l.b16 %v2586
    %v3077 = vunpack.c.h.b16 %v2586
    %v3078 = vunpack.c.l.b16 %v2587
    %v3079 = vunpack.c.h.b16 %v2587
    %v3080 = vunpack.c.l.b16 %v2588
    %v3081 = vunpack.c.h.b16 %v2588
    %v3082 = vunpack.c.l.b16 %v2589
    %v3083 = vunpack.c.l.b16 %v2590
    %v3084 = vunpack.c.h.b16 %v2590
    %v3085 = vunpack.c.l.b16 %v2591
    %v3086 = vunpack.c.h.b16 %v2591
    %v3087 = vunpack.c.l.b16 %v2592
    %v3088 = vunpack.c.h.b16 %v2592
    %v3089 = vunpack.c.l.b16 %v2593
    %v3090 = vunpack.c.h.b16 %v2593
    %v3091 = vunpack.c.l.b16 %v2594
    %v3092 = vunpack.c.h.b16 %v2594
    %v3093 = vunpack.c.l.b16 %v2595
    %v3094 = vunpack.c.l.b16 %v2596
    %v3095 = vunpack.c.h.b16 %v2596
    %v3096 = vunpack.c.l.b16 %v2597
    %v3097 = vunpack.c.h.b16 %v2597
    %v3098 = vunpack.c.l.b16 %v2598
    %v3099 = vunpack.c.h.b16 %v2598
    %v3100 = vunpack.c.l.b16 %v2599
    %v3101 = vunpack.c.h.b16 %v2599
    %v3102 = vunpack.c.l.b16 %v2600
    %v3103 = vunpack.c.h.b16 %v2600
    %v3104 = vunpack.c.l.b16 %v2601
    %v3105 = vunpack.c.l.b16 %v2602
    %v3106 = vunpack.c.h.b16 %v2602
    %v3107 = vunpack.c.l.b16 %v2603
    %v3108 = vunpack.c.h.b16 %v2603
    %v3109 = vunpack.c.l.b16 %v2604
    %v3110 = vunpack.c.h.b16 %v2604
    %v3111 = vunpack.c.l.b16 %v2605
    %v3112 = vunpack.c.h.b16 %v2605
    %v3113 = vunpack.c.l.b16 %v2606
    %v3114 = vunpack.c.h.b16 %v2606
    %v3115 = vunpack.c.l.b16 %v2607
    %v3116 = vunpack.c.l.b16 %v2608
    %v3117 = vunpack.c.h.b16 %v2608
    %v3118 = vunpack.c.l.b16 %v2609
    %v3119 = vunpack.c.h.b16 %v2609
    %v3120 = vunpack.c.l.b16 %v2610
    %v3121 = vunpack.c.h.b16 %v2610
    %v3122 = vunpack.c.l.b16 %v2611
    %v3123 = vunpack.c.h.b16 %v2611
    %v3124 = vunpack.c.l.b16 %v2612
    %v3125 = vunpack.c.h.b16 %v2612
    %v3126 = vunpack.c.l.b16 %v2613
    %v3127 = vunpack.c.l.b16 %v2614
    %v3128 = vunpack.c.h.b16 %v2614
    %v3129 = vunpack.c.l.b16 %v2615
    %v3130 = vunpack.c.h.b16 %v2615
    %v3131 = vunpack.c.l.b16 %v2616
    %v3132 = vunpack.c.h.b16 %v2616
    %v3133 = vunpack.c.l.b16 %v2617
    %v3134 = vunpack.c.h.b16 %v2617
    %v3135 = vunpack.c.l.b16 %v2618
    %v3136 = vunpack.c.h.b16 %v2618
    %v3137 = vunpack.c.l.b16 %v2619
    %v3138 = vunpack.c.l.b16 %v2620
    %v3139 = vunpack.c.h.b16 %v2620
    %v3140 = vunpack.c.l.b16 %v2621
    %v3141 = vunpack.c.h.b16 %v2621
    %v3142 = vunpack.c.l.b16 %v2622
    %v3143 = vunpack.c.h.b16 %v2622
    %v3144 = vunpack.c.l.b16 %v2623
    %v3145 = vunpack.c.h.b16 %v2623
    %v3146 = vunpack.c.l.b16 %v2624
    %v3147 = vunpack.c.h.b16 %v2624
    %v3148 = vunpack.c.l.b16 %v2625
    %v3149 = vunpack.c.l.b16 %v2626
    %v3150 = vunpack.c.h.b16 %v2626
    %v3151 = vunpack.c.l.b16 %v2627
    %v3152 = vunpack.c.h.b16 %v2627
    %v3153 = vunpack.c.l.b16 %v2628
    %v3154 = vunpack.c.h.b16 %v2628
    %v3155 = vunpack.c.l.b16 %v2629
    %v3156 = vunpack.c.h.b16 %v2629
    %v3157 = vunpack.c.l.b16 %v2630
    %v3158 = vunpack.c.h.b16 %v2630
    %v3159 = vunpack.c.l.b16 %v2631
    %v3160 = vunpack.c.l.b16 %v2632
    %v3161 = vunpack.c.h.b16 %v2632
    %v3162 = vunpack.c.l.b16 %v2633
    %v3163 = vunpack.c.h.b16 %v2633
    %v3164 = vunpack.c.l.b16 %v2634
    %v3165 = vunpack.c.h.b16 %v2634
    %v3166 = vunpack.c.l.b16 %v2635
    %v3167 = vunpack.c.h.b16 %v2635
    %v3168 = vunpack.c.l.b16 %v2636
    %v3169 = vunpack.c.h.b16 %v2636
    %v3170 = vunpack.c.l.b16 %v2637
    %v3171 = vunpack.c.l.b16 %v2638
    %v3172 = vunpack.c.h.b16 %v2638
    %v3173 = vunpack.c.l.b16 %v2639
    %v3174 = vunpack.c.h.b16 %v2639
    %v3175 = vunpack.c.l.b16 %v2640
    %v3176 = vunpack.c.h.b16 %v2640
    %v3177 = vunpack.c.l.b16 %v2641
    %v3178 = vunpack.c.h.b16 %v2641
    %v3179 = vunpack.c.l.b16 %v2642
    %v3180 = vunpack.c.h.b16 %v2642
    %v3181 = vunpack.c.l.b16 %v2643
    %v3182 = vunpack.c.l.b16 %v2644
    %v3183 = vunpack.c.h.b16 %v2644
    %v3184 = vunpack.c.l.b16 %v2645
    %v3185 = vunpack.c.h.b16 %v2645
    %v3186 = vunpack.c.l.b16 %v2646
    %v3187 = vunpack.c.h.b16 %v2646
    %v3188 = vunpack.c.l.b16 %v2647
    %v3189 = vunpack.c.h.b16 %v2647
    %v3190 = vunpack.c.l.b16 %v2648
    %v3191 = vunpack.c.h.b16 %v2648
    %v3192 = vunpack.c.l.b16 %v2649
    %v3193 = vunpack.c.l.b16 %v2650
    %v3194 = vunpack.c.h.b16 %v2650
    %v3195 = vunpack.c.l.b16 %v2651
    %v3196 = vunpack.c.h.b16 %v2651
    %v3197 = vunpack.c.l.b16 %v2652
    %v3198 = vunpack.c.h.b16 %v2652
    %v3199 = vunpack.c.l.b16 %v2653
    %v3200 = vunpack.c.h.b16 %v2653
    %v3201 = vunpack.c.l.b16 %v2654
    %v3202 = vunpack.c.h.b16 %v2654
    %v3203 = vunpack.c.l.b16 %v2655
    %v3204 = vunpack.c.l.b16 %v2656
    %v3205 = vunpack.c.h.b16 %v2656
    %v3206 = vunpack.c.l.b16 %v2657
    %v3207 = vunpack.c.h.b16 %v2657
    %v3208 = vunpack.c.l.b16 %v2658
    %v3209 = vunpack.c.h.b16 %v2658
    %v3210 = vunpack.c.l.b16 %v2659
    %v3211 = vunpack.c.h.b16 %v2659
    %v3212 = vunpack.c.l.b16 %v2660
    %v3213 = vunpack.c.h.b16 %v2660
    %v3214 = vunpack.c.l.b16 %v2661
    %v3215 = vunpack.c.l.b16 %v2662
    %v3216 = vunpack.c.h.b16 %v2662
    %v3217 = vunpack.c.l.b16 %v2663
    %v3218 = vunpack.c.h.b16 %v2663
    %v3219 = vunpack.c.l.b16 %v2664
    %v3220 = vunpack.c.h.b16 %v2664
    %v3221 = vunpack.c.l.b16 %v2665
    %v3222 = vunpack.c.h.b16 %v2665
    %v3223 = vunpack.c.l.b16 %v2666
    %v3224 = vunpack.c.h.b16 %v2666
    %v3225 = vunpack.c.l.b16 %v2667
    %v3226 = vunpack.c.l.b16 %v2668
    %v3227 = vunpack.c.h.b16 %v2668
    %v3228 = vunpack.c.l.b16 %v2669
    %v3229 = vunpack.c.h.b16 %v2669
    %v3230 = vunpack.c.l.b16 %v2670
    %v3231 = vunpack.c.h.b16 %v2670
    %v3232 = vunpack.c.l.b16 %v2671
    %v3233 = vunpack.c.h.b16 %v2671
    %v3234 = vunpack.c.l.b16 %v2672
    %v3235 = vunpack.c.h.b16 %v2672
    %v3236 = vunpack.c.l.b16 %v2673
    %v3237 = vunpack.c.l.b16 %v2674
    %v3238 = vunpack.c.h.b16 %v2674
    %v3239 = vunpack.c.l.b16 %v2675
    %v3240 = vunpack.c.h.b16 %v2675
    %v3241 = vunpack.c.l.b16 %v2676
    %v3242 = vunpack.c.h.b16 %v2676
    %v3243 = vunpack.c.l.b16 %v2677
    %v3244 = vunpack.c.h.b16 %v2677
    %v3245 = vunpack.c.l.b16 %v2678
    %v3246 = vunpack.c.h.b16 %v2678
    %v3247 = vunpack.c.l.b16 %v2679
    %v3248 = vunpack.c.l.b16 %v2680
    %v3249 = vunpack.c.h.b16 %v2680
    %v3250 = vunpack.c.l.b16 %v2681
    %v3251 = vunpack.c.h.b16 %v2681
    %v3252 = vunpack.c.l.b16 %v2682
    %v3253 = vunpack.c.h.b16 %v2682
    %v3254 = vunpack.c.l.b16 %v2683
    %v3255 = vunpack.c.h.b16 %v2683
    %v3256 = vunpack.c.l.b16 %v2684
    %v3257 = vunpack.c.h.b16 %v2684
    %v3258 = vunpack.c.l.b16 %v2685
    %v3259 = vunpack.c.l.b16 %v2686
    %v3260 = vunpack.c.h.b16 %v2686
    %v3261 = vunpack.c.l.b16 %v2687
    %v3262 = vunpack.c.h.b16 %v2687
    %v3263 = vunpack.c.l.b16 %v2688
    %v3264 = vunpack.c.h.b16 %v2688
    %v3265 = vunpack.c.l.b16 %v2689
    %v3266 = vunpack.c.h.b16 %v2689
    %v3267 = vunpack.c.l.b16 %v2690
    %v3268 = vunpack.c.h.b16 %v2690
    %v3269 = vunpack.c.l.b16 %v2691
    %v3270 = vunpack.c.l.b16 %v2692
    %v3271 = vunpack.c.h.b16 %v2692
    %v3272 = vunpack.c.l.b16 %v2693
    %v3273 = vunpack.c.h.b16 %v2693
    %v3274 = vunpack.c.l.b16 %v2694
    %v3275 = vunpack.c.h.b16 %v2694
    %v3276 = vunpack.c.l.b16 %v2695
    %v3277 = vunpack.c.h.b16 %v2695
    %v3278 = vunpack.c.l.b16 %v2696
    %v3279 = vunpack.c.h.b16 %v2696
    %v3280 = vunpack.c.l.b16 %v2697
    %v3281 = vunpack.c.l.b16 %v2698
    %v3282 = vunpack.c.h.b16 %v2698
    %v3283 = vunpack.c.l.b16 %v2699
    %v3284 = vunpack.c.h.b16 %v2699
    %v3285 = vunpack.c.l.b16 %v2700
    %v3286 = vunpack.c.h.b16 %v2700
    %v3287 = vunpack.c.l.b16 %v2701
    %v3288 = vunpack.c.h.b16 %v2701
    %v3289 = vunpack.c.l.b16 %v2702
    %v3290 = vunpack.c.h.b16 %v2702
    %v3291 = vunpack.c.l.b16 %v2703
    %v3292 = vunpack.c.l.b16 %v2704
    %v3293 = vunpack.c.h.b16 %v2704
    %v3294 = vunpack.c.l.b16 %v2705
    %v3295 = vunpack.c.h.b16 %v2705
    %v3296 = vunpack.c.l.b16 %v2706
    %v3297 = vunpack.c.h.b16 %v2706
    %v3298 = vunpack.c.l.b16 %v2707
    %v3299 = vunpack.c.h.b16 %v2707
    %v3300 = vunpack.c.l.b16 %v2708
    %v3301 = vunpack.c.h.b16 %v2708
    %v3302 = vunpack.c.l.b16 %v2709
    %v3303 = vunpack.c.l.b16 %v2710
    %v3304 = vunpack.c.h.b16 %v2710
    %v3305 = vunpack.c.l.b16 %v2711
    %v3306 = vunpack.c.h.b16 %v2711
    %v3307 = vunpack.c.l.b16 %v2712
    %v3308 = vunpack.c.h.b16 %v2712
    %v3309 = vunpack.c.l.b16 %v2713
    %v3310 = vunpack.c.h.b16 %v2713
    %v3311 = vunpack.c.l.b16 %v2714
    %v3312 = vunpack.c.h.b16 %v2714
    %v3313 = vunpack.c.l.b16 %v2715
    %v3314 = vunpack.c.l.b16 %v2716
    %v3315 = vunpack.c.h.b16 %v2716
    %v3316 = vunpack.c.l.b16 %v2717
    %v3317 = vunpack.c.h.b16 %v2717
    %v3318 = vunpack.c.l.b16 %v2718
    %v3319 = vunpack.c.h.b16 %v2718
    %v3320 = vunpack.c.l.b16 %v2719
    %v3321 = vunpack.c.h.b16 %v2719
    %v3322 = vunpack.c.l.b16 %v2720
    %v3323 = vunpack.c.h.b16 %v2720
    %v3324 = vunpack.c.l.b16 %v2721
    %v3325 = vpack.c.b16 %v2984, %v2973
    %v3326 = vpack.c.b16 %v2985, %v2974
    %v3327 = vpack.c.b16 %v2986, %v2975
    %v3328 = vpack.c.b16 %v2987, %v2976
    %v3329 = vpack.c.b16 %v2988, %v2977
    %v3330 = vpack.c.b16 %v2989, %v2978
    %v3331 = vpack.c.b16 %v2990, %v2979
    %v3332 = vpack.c.b16 %v2991, %v2980
    %v3333 = vpack.c.b16 %v2992, %v2981
    %v3334 = vpack.c.b16 %v2993, %v2982
    %v3335 = vpack.c.b16 %v2994, %v2983
    %v3336 = vpack.c.b16 %v3006, %v2995
    %v3337 = vpack.c.b16 %v3007, %v2996
    %v3338 = vpack.c.b16 %v3008, %v2997
    %v3339 = vpack.c.b16 %v3009, %v2998
    %v3340 = vpack.c.b16 %v3010, %v2999
    %v3341 = vpack.c.b16 %v3011, %v3000
    %v3342 = vpack.c.b16 %v3012, %v3001
    %v3343 = vpack.c.b16 %v3013, %v3002
    %v3344 = vpack.c.b16 %v3014, %v3003
    %v3345 = vpack.c.b16 %v3015, %v3004
    %v3346 = vpack.c.b16 %v3016, %v3005
    %v3347 = vpack.c.b16 %v3028, %v3017
    %v3348 = vpack.c.b16 %v3029, %v3018
    %v3349 = vpack.c.b16 %v3030, %v3019
    %v3350 = vpack.c.b16 %v3031, %v3020
    %v3351 = vpack.c.b16 %v3032, %v3021
    %v3352 = vpack.c.b16 %v3033, %v3022
    %v3353 = vpack.c.b16 %v3034, %v3023
    %v3354 = vpack.c.b16 %v3035, %v3024
    %v3355 = vpack.c.b16 %v3036, %v3025
    %v3356 = vpack.c.b16 %v3037, %v3026
    %v3357 = vpack.c.b16 %v3038, %v3027
    %v3358 = vpack.c.b16 %v3050, %v3039
    %v3359 = vpack.c.b16 %v3051, %v3040
    %v3360 = vpack.c.b16 %v3052, %v3041
    %v3361 = vpack.c.b16 %v3053, %v3042
    %v3362 = vpack.c.b16 %v3054, %v3043
    %v3363 = vpack.c.b16 %v3055, %v3044
    %v3364 = vpack.c.b16 %v3056, %v3045
    %v3365 = vpack.c.b16 %v3057, %v3046
    %v3366 = vpack.c.b16 %v3058, %v3047
    %v3367 = vpack.c.b16 %v3059, %v3048
    %v3368 = vpack.c.b16 %v3060, %v3049
    %v3369 = vpack.c.b16 %v3072, %v3061
    %v3370 = vpack.c.b16 %v3073, %v3062
    %v3371 = vpack.c.b16 %v3074, %v3063
    %v3372 = vpack.c.b16 %v3075, %v3064
    %v3373 = vpack.c.b16 %v3076, %v3065
    %v3374 = vpack.c.b16 %v3077, %v3066
    %v3375 = vpack.c.b16 %v3078, %v3067
    %v3376 = vpack.c.b16 %v3079, %v3068
    %v3377 = vpack.c.b16 %v3080, %v3069
    %v3378 = vpack.c.b16 %v3081, %v3070
    %v3379 = vpack.c.b16 %v3082, %v3071
    %v3380 = vpack.c.b16 %v3094, %v3083
    %v3381 = vpack.c.b16 %v3095, %v3084
    %v3382 = vpack.c.b16 %v3096, %v3085
    %v3383 = vpack.c.b16 %v3097, %v3086
    %v3384 = vpack.c.b16 %v3098, %v3087
    %v3385 = vpack.c.b16 %v3099, %v3088
    %v3386 = vpack.c.b16 %v3100, %v3089
    %v3387 = vpack.c.b16 %v3101, %v3090
    %v3388 = vpack.c.b16 %v3102, %v3091
    %v3389 = vpack.c.b16 %v3103, %v3092
    %v3390 = vpack.c.b16 %v3104, %v3093
    %v3391 = vpack.c.b16 %v3116, %v3105
    %v3392 = vpack.c.b16 %v3117, %v3106
    %v3393 = vpack.c.b16 %v3118, %v3107
    %v3394 = vpack.c.b16 %v3119, %v3108
    %v3395 = vpack.c.b16 %v3120, %v3109
    %v3396 = vpack.c.b16 %v3121, %v3110
    %v3397 = vpack.c.b16 %v3122, %v3111
    %v3398 = vpack.c.b16 %v3123, %v3112
    %v3399 = vpack.c.b16 %v3124, %v3113
    %v3400 = vpack.c.b16 %v3125, %v3114
    %v3401 = vpack.c.b16 %v3126, %v3115
    %v3402 = vpack.c.b16 %v3138, %v3127
    %v3403 = vpack.c.b16 %v3139, %v3128
    %v3404 = vpack.c.b16 %v3140, %v3129
    %v3405 = vpack.c.b16 %v3141, %v3130
    %v3406 = vpack.c.b16 %v3142, %v3131
    %v3407 = vpack.c.b16 %v3143, %v3132
    %v3408 = vpack.c.b16 %v3144, %v3133
    %v3409 = vpack.c.b16 %v3145, %v3134
    %v3410 = vpack.c.b16 %v3146, %v3135
    %v3411 = vpack.c.b16 %v3147, %v3136
    %v3412 = vpack.c.b16 %v3148, %v3137
    %v3413 = vpack.c.b16 %v3160, %v3149
    %v3414 = vpack.c.b16 %v3161, %v3150
    %v3415 = vpack.c.b16 %v3162, %v3151
    %v3416 = vpack.c.b16 %v3163, %v3152
    %v3417 = vpack.c.b16 %v3164, %v3153
    %v3418 = vpack.c.b16 %v3165, %v3154
    %v3419 = vpack.c.b16 %v3166, %v3155
    %v3420 = vpack.c.b16 %v3167, %v3156
    %v3421 = vpack.c.b16 %v3168, %v3157
    %v3422 = vpack.c.b16 %v3169, %v3158
    %v3423 = vpack.c.b16 %v3170, %v3159
    %v3424 = vpack.c.b16 %v3182, %v3171
    %v3425 = vpack.c.b16 %v3183, %v3172
    %v3426 = vpack.c.b16 %v3184, %v3173
    %v3427 = vpack.c.b16 %v3185, %v3174
    %v3428 = vpack.c.b16 %v3186, %v3175
    %v3429 = vpack.c.b16 %v3187, %v3176
    %v3430 = vpack.c.b16 %v3188, %v3177
    %v3431 = vpack.c.b16 %v3189, %v3178
    %v3432 = vpack.c.b16 %v3190, %v3179
    %v3433 = vpack.c.b16 %v3191, %v3180
    %v3434 = vpack.c.b16 %v3192, %v3181
    %v3435 = vpack.c.b16 %v3204, %v3193
    %v3436 = vpack.c.b16 %v3205, %v3194
    %v3437 = vpack.c.b16 %v3206, %v3195
    %v3438 = vpack.c.b16 %v3207, %v3196
    %v3439 = vpack.c.b16 %v3208, %v3197
    %v3440 = vpack.c.b16 %v3209, %v3198
    %v3441 = vpack.c.b16 %v3210, %v3199
    %v3442 = vpack.c.b16 %v3211, %v3200
    %v3443 = vpack.c.b16 %v3212, %v3201
    %v3444 = vpack.c.b16 %v3213, %v3202
    %v3445 = vpack.c.b16 %v3214, %v3203
    %v3446 = vpack.c.b16 %v3226, %v3215
    %v3447 = vpack.c.b16 %v3227, %v3216
    %v3448 = vpack.c.b16 %v3228, %v3217
    %v3449 = vpack.c.b16 %v3229, %v3218
    %v3450 = vpack.c.b16 %v3230, %v3219
    %v3451 = vpack.c.b16 %v3231, %v3220
    %v3452 = vpack.c.b16 %v3232, %v3221
    %v3453 = vpack.c.b16 %v3233, %v3222
    %v3454 = vpack.c.b16 %v3234, %v3223
    %v3455 = vpack.c.b16 %v3235, %v3224
    %v3456 = vpack.c.b16 %v3236, %v3225
    %v3457 = vpack.c.b16 %v3248, %v3237
    %v3458 = vpack.c.b16 %v3249, %v3238
    %v3459 = vpack.c.b16 %v3250, %v3239
    %v3460 = vpack.c.b16 %v3251, %v3240
    %v3461 = vpack.c.b16 %v3252, %v3241
    %v3462 = vpack.c.b16 %v3253, %v3242
    %v3463 = vpack.c.b16 %v3254, %v3243
    %v3464 = vpack.c.b16 %v3255, %v3244
    %v3465 = vpack.c.b16 %v3256, %v3245
    %v3466 = vpack.c.b16 %v3257, %v3246
    %v3467 = vpack.c.b16 %v3258, %v3247
    %v3468 = vpack.c.b16 %v3270, %v3259
    %v3469 = vpack.c.b16 %v3271, %v3260
    %v3470 = vpack.c.b16 %v3272, %v3261
    %v3471 = vpack.c.b16 %v3273, %v3262
    %v3472 = vpack.c.b16 %v3274, %v3263
    %v3473 = vpack.c.b16 %v3275, %v3264
    %v3474 = vpack.c.b16 %v3276, %v3265
    %v3475 = vpack.c.b16 %v3277, %v3266
    %v3476 = vpack.c.b16 %v3278, %v3267
    %v3477 = vpack.c.b16 %v3279, %v3268
    %v3478 = vpack.c.b16 %v3280, %v3269
    %v3479 = vpack.c.b16 %v3292, %v3281
    %v3480 = vpack.c.b16 %v3293, %v3282
    %v3481 = vpack.c.b16 %v3294, %v3283
    %v3482 = vpack.c.b16 %v3295, %v3284
    %v3483 = vpack.c.b16 %v3296, %v3285
    %v3484 = vpack.c.b16 %v3297, %v3286
    %v3485 = vpack.c.b16 %v3298, %v3287
    %v3486 = vpack.c.b16 %v3299, %v3288
    %v3487 = vpack.c.b16 %v3300, %v3289
    %v3488 = vpack.c.b16 %v3301, %v3290
    %v3489 = vpack.c.b16 %v3302, %v3291
    %v3490 = vpack.c.b16 %v3314, %v3303
    %v3491 = vpack.c.b16 %v3315, %v3304
    %v3492 = vpack.c.b16 %v3316, %v3305
    %v3493 = vpack.c.b16 %v3317, %v3306
    %v3494 = vpack.c.b16 %v3318, %v3307
    %v3495 = vpack.c.b16 %v3319, %v3308
    %v3496 = vpack.c.b16 %v3320, %v3309
    %v3497 = vpack.c.b16 %v3321, %v3310
    %v3498 = vpack.c.b16 %v3322, %v3311
    %v3499 = vpack.c.b16 %v3323, %v3312
    %v3500 = vpack.c.b16 %v3324, %v3313
    %3677 = vmatprep.subr.bf16.mxu0 %v3403
    %3678 = vmatpush1.bf16.msra.mxu0 %v3402
    %3679 = vmatprep.subr.bf16.mxu0 %v3392
    %3680 = vmatpush1.bf16.msra.mxu0 %v3391
    %3681 = vmatprep.subr.bf16.mxu0 %v3381
    %3682 = vmatpush1.bf16.msra.mxu0 %v3380
    %3683 = vmatprep.subr.bf16.mxu0 %v3370
    %3684 = vmatpush1.bf16.msra.mxu0 %v3369
    %3685 = vmatprep.subr.bf16.mxu0 %v3359
    %3686 = vmatpush1.bf16.msra.mxu0 %v3358
    %3687 = vmatprep.subr.bf16.mxu0 %v3348
    %3688 = vmatpush1.bf16.msra.mxu0 %v3347
    %3689 = vmatprep.subr.bf16.mxu0 %v3337
    %3690 = vmatpush1.bf16.msra.mxu0 %v3336
    %3691 = vmatprep.subr.bf16.mxu0 %v3326
    %3692 = vmatpush1.bf16.msra.mxu0 %v3325
    %3693 = vmatprep.subr.bf16.mxu0 %v3491
    %3694 = vmatpush2.bf16.msra.mxu0 %v3490
    %3695 = vmatprep.subr.bf16.mxu0 %v3480
    %3696 = vmatpush2.bf16.msra.mxu0 %v3479
    %3697 = vmatprep.subr.bf16.mxu0 %v3469
    %3698 = vmatpush2.bf16.msra.mxu0 %v3468
    %3699 = vmatprep.subr.bf16.mxu0 %v3458
    %3700 = vmatpush2.bf16.msra.mxu0 %v3457
    %3701 = vmatprep.subr.bf16.mxu0 %v3447
    %3702 = vmatpush2.bf16.msra.mxu0 %v3446
    %3703 = vmatprep.subr.bf16.mxu0 %v3436
    %3704 = vmatpush2.bf16.msra.mxu0 %v3435
    %3705 = vmatprep.subr.bf16.mxu0 %v3425
    %3706 = vmatpush2.bf16.msra.mxu0 %v3424
    %3707 = vmatprep.subr.bf16.mxu0 %v3414
    %3708 = vmatpush2.bf16.msra.mxu0 %v3413
    %3709 = vmatprep.mubr.bf16.mxu0 %v2529
    %3710 = vmatmul.mubr.bf16.gmra.mxu0 %v2528
    %v3711 = vpop.f32.mrf.mxu0
    %v3712 = vadd.f32 %v2729, %v3711
    %v3713 = vpop.f32.mrf.mxu0
    %v3714 = vadd.f32 %v2733, %v3713
    %v3715 = vpop.f32.mrf.mxu0
    %v3716 = vpop.f32.mrf.mxu0
    %3717 = vdwg.mxu0
    %3718 = vmatprep.subr.bf16.mxu0 %v3405
    %3719 = vmatpush1.bf16.msra.mxu0 %v3404
    %3720 = vmatprep.subr.bf16.mxu0 %v3394
    %3721 = vmatpush1.bf16.msra.mxu0 %v3393
    %3722 = vmatprep.subr.bf16.mxu0 %v3383
    %3723 = vmatpush1.bf16.msra.mxu0 %v3382
    %3724 = vmatprep.subr.bf16.mxu0 %v3372
    %3725 = vmatpush1.bf16.msra.mxu0 %v3371
    %3726 = vmatprep.subr.bf16.mxu0 %v3361
    %3727 = vmatpush1.bf16.msra.mxu0 %v3360
    %3728 = vmatprep.subr.bf16.mxu0 %v3350
    %3729 = vmatpush1.bf16.msra.mxu0 %v3349
    %3730 = vmatprep.subr.bf16.mxu0 %v3339
    %3731 = vmatpush1.bf16.msra.mxu0 %v3338
    %3732 = vmatprep.subr.bf16.mxu0 %v3328
    %3733 = vmatpush1.bf16.msra.mxu0 %v3327
    %3734 = vmatprep.subr.bf16.mxu0 %v3493
    %3735 = vmatpush2.bf16.msra.mxu0 %v3492
    %3736 = vmatprep.subr.bf16.mxu0 %v3482
    %3737 = vmatpush2.bf16.msra.mxu0 %v3481
    %3738 = vmatprep.subr.bf16.mxu0 %v3471
    %3739 = vmatpush2.bf16.msra.mxu0 %v3470
    %3740 = vmatprep.subr.bf16.mxu0 %v3460
    %3741 = vmatpush2.bf16.msra.mxu0 %v3459
    %3742 = vmatprep.subr.bf16.mxu0 %v3449
    %3743 = vmatpush2.bf16.msra.mxu0 %v3448
    %3744 = vmatprep.subr.bf16.mxu0 %v3438
    %3745 = vmatpush2.bf16.msra.mxu0 %v3437
    %3746 = vmatprep.subr.bf16.mxu0 %v3427
    %3747 = vmatpush2.bf16.msra.mxu0 %v3426
    %3748 = vmatprep.subr.bf16.mxu0 %v3416
    %3749 = vmatpush2.bf16.msra.mxu0 %v3415
    %3750 = vmatprep.mubr.bf16.mxu0 %v2529
    %3751 = vmatmul.mubr.bf16.gmra.mxu0 %v2528
    %v3752 = vpop.f32.mrf.mxu0
    %v3753 = vadd.f32 %v2737, %v3752
    %v3754 = vpop.f32.mrf.mxu0
    %v3755 = vadd.f32 %v2741, %v3754
    %v3756 = vpop.f32.mrf.mxu0
    %v3757 = vpop.f32.mrf.mxu0
    %3758 = vdwg.mxu0
    %3759 = vmatprep.subr.bf16.mxu0 %v3407
    %3760 = vmatpush1.bf16.msra.mxu0 %v3406
    %3761 = vmatprep.subr.bf16.mxu0 %v3396
    %3762 = vmatpush1.bf16.msra.mxu0 %v3395
    %3763 = vmatprep.subr.bf16.mxu0 %v3385
    %3764 = vmatpush1.bf16.msra.mxu0 %v3384
    %3765 = vmatprep.subr.bf16.mxu0 %v3374
    %3766 = vmatpush1.bf16.msra.mxu0 %v3373
    %3767 = vmatprep.subr.bf16.mxu0 %v3363
    %3768 = vmatpush1.bf16.msra.mxu0 %v3362
    %3769 = vmatprep.subr.bf16.mxu0 %v3352
    %3770 = vmatpush1.bf16.msra.mxu0 %v3351
    %3771 = vmatprep.subr.bf16.mxu0 %v3341
    %3772 = vmatpush1.bf16.msra.mxu0 %v3340
    %3773 = vmatprep.subr.bf16.mxu0 %v3330
    %3774 = vmatpush1.bf16.msra.mxu0 %v3329
    %3775 = vmatprep.subr.bf16.mxu0 %v3495
    %3776 = vmatpush2.bf16.msra.mxu0 %v3494
    %3777 = vmatprep.subr.bf16.mxu0 %v3484
    %3778 = vmatpush2.bf16.msra.mxu0 %v3483
    %3779 = vmatprep.subr.bf16.mxu0 %v3473
    %3780 = vmatpush2.bf16.msra.mxu0 %v3472
    %3781 = vmatprep.subr.bf16.mxu0 %v3462
    %3782 = vmatpush2.bf16.msra.mxu0 %v3461
    %3783 = vmatprep.subr.bf16.mxu0 %v3451
    %3784 = vmatpush2.bf16.msra.mxu0 %v3450
    %3785 = vmatprep.subr.bf16.mxu0 %v3440
    %3786 = vmatpush2.bf16.msra.mxu0 %v3439
    %3787 = vmatprep.subr.bf16.mxu0 %v3429
    %3788 = vmatpush2.bf16.msra.mxu0 %v3428
    %3789 = vmatprep.subr.bf16.mxu0 %v3418
    %3790 = vmatpush2.bf16.msra.mxu0 %v3417
    %3791 = vmatprep.mubr.bf16.mxu0 %v2529
    %3792 = vmatmul.mubr.bf16.gmra.mxu0 %v2528
    %v3793 = vpop.f32.mrf.mxu0
    %v3794 = vadd.f32 %v2745, %v3793
    %v3795 = vpop.f32.mrf.mxu0
    %v3796 = vadd.f32 %v2749, %v3795
    %v3797 = vpop.f32.mrf.mxu0
    %v3798 = vpop.f32.mrf.mxu0
    %3799 = vdwg.mxu0
    %3800 = vmatprep.subr.bf16.mxu0 %v3409
    %3801 = vmatpush1.bf16.msra.mxu0 %v3408
    %3802 = vmatprep.subr.bf16.mxu0 %v3398
    %3803 = vmatpush1.bf16.msra.mxu0 %v3397
    %3804 = vmatprep.subr.bf16.mxu0 %v3387
    %3805 = vmatpush1.bf16.msra.mxu0 %v3386
    %3806 = vmatprep.subr.bf16.mxu0 %v3376
    %3807 = vmatpush1.bf16.msra.mxu0 %v3375
    %3808 = vmatprep.subr.bf16.mxu0 %v3365
    %3809 = vmatpush1.bf16.msra.mxu0 %v3364
    %3810 = vmatprep.subr.bf16.mxu0 %v3354
    %3811 = vmatpush1.bf16.msra.mxu0 %v3353
    %3812 = vmatprep.subr.bf16.mxu0 %v3343
    %3813 = vmatpush1.bf16.msra.mxu0 %v3342
    %3814 = vmatprep.subr.bf16.mxu0 %v3332
    %3815 = vmatpush1.bf16.msra.mxu0 %v3331
    %3816 = vmatprep.subr.bf16.mxu0 %v3497
    %3817 = vmatpush2.bf16.msra.mxu0 %v3496
    %3818 = vmatprep.subr.bf16.mxu0 %v3486
    %3819 = vmatpush2.bf16.msra.mxu0 %v3485
    %3820 = vmatprep.subr.bf16.mxu0 %v3475
    %3821 = vmatpush2.bf16.msra.mxu0 %v3474
    %3822 = vmatprep.subr.bf16.mxu0 %v3464
    %3823 = vmatpush2.bf16.msra.mxu0 %v3463
    %3824 = vmatprep.subr.bf16.mxu0 %v3453
    %3825 = vmatpush2.bf16.msra.mxu0 %v3452
    %3826 = vmatprep.subr.bf16.mxu0 %v3442
    %3827 = vmatpush2.bf16.msra.mxu0 %v3441
    %3828 = vmatprep.subr.bf16.mxu0 %v3431
    %3829 = vmatpush2.bf16.msra.mxu0 %v3430
    %3830 = vmatprep.subr.bf16.mxu0 %v3420
    %3831 = vmatpush2.bf16.msra.mxu0 %v3419
    %3832 = vmatprep.mubr.bf16.mxu0 %v2529
    %3833 = vmatmul.mubr.bf16.gmra.mxu0 %v2528
    %v3834 = vpop.f32.mrf.mxu0
    %v3835 = vadd.f32 %v2753, %v3834
    %v3836 = vpop.f32.mrf.mxu0
    %v3837 = vadd.f32 %v2757, %v3836
    %v3838 = vpop.f32.mrf.mxu0
    %v3839 = vpop.f32.mrf.mxu0
    %3840 = vdwg.mxu0
    %3841 = vmatprep.subr.bf16.mxu0 %v3411
    %3842 = vmatpush1.bf16.msra.mxu0 %v3410
    %3843 = vmatprep.subr.bf16.mxu0 %v3400
    %3844 = vmatpush1.bf16.msra.mxu0 %v3399
    %3845 = vmatprep.subr.bf16.mxu0 %v3389
    %3846 = vmatpush1.bf16.msra.mxu0 %v3388
    %3847 = vmatprep.subr.bf16.mxu0 %v3378
    %3848 = vmatpush1.bf16.msra.mxu0 %v3377
    %3849 = vmatprep.subr.bf16.mxu0 %v3367
    %3850 = vmatpush1.bf16.msra.mxu0 %v3366
    %3851 = vmatprep.subr.bf16.mxu0 %v3356
    %3852 = vmatpush1.bf16.msra.mxu0 %v3355
    %3853 = vmatprep.subr.bf16.mxu0 %v3345
    %3854 = vmatpush1.bf16.msra.mxu0 %v3344
    %3855 = vmatprep.subr.bf16.mxu0 %v3334
    %3856 = vmatpush1.bf16.msra.mxu0 %v3333
    %3857 = vmatprep.subr.bf16.mxu0 %v3499
    %3858 = vmatpush2.bf16.msra.mxu0 %v3498
    %3859 = vmatprep.subr.bf16.mxu0 %v3488
    %3860 = vmatpush2.bf16.msra.mxu0 %v3487
    %3861 = vmatprep.subr.bf16.mxu0 %v3477
    %3862 = vmatpush2.bf16.msra.mxu0 %v3476
    %3863 = vmatprep.subr.bf16.mxu0 %v3466
    %3864 = vmatpush2.bf16.msra.mxu0 %v3465
    %3865 = vmatprep.subr.bf16.mxu0 %v3455
    %3866 = vmatpush2.bf16.msra.mxu0 %v3454
    %3867 = vmatprep.subr.bf16.mxu0 %v3444
    %3868 = vmatpush2.bf16.msra.mxu0 %v3443
    %3869 = vmatprep.subr.bf16.mxu0 %v3433
    %3870 = vmatpush2.bf16.msra.mxu0 %v3432
    %3871 = vmatprep.subr.bf16.mxu0 %v3422
    %3872 = vmatpush2.bf16.msra.mxu0 %v3421
    %3873 = vmatprep.mubr.bf16.mxu0 %v2529
    %3874 = vmatmul.mubr.bf16.gmra.mxu0 %v2528
    %v3875 = vpop.f32.mrf.mxu0
    %v3876 = vadd.f32 %v2761, %v3875
    %v3877 = vpop.f32.mrf.mxu0
    %v3878 = vadd.f32 %v2765, %v3877
    %v3879 = vpop.f32.mrf.mxu0
    %v3880 = vpop.f32.mrf.mxu0
    %3881 = vdwg.mxu0
    %3882 = vmatprep.subr.bf16.mxu0 0
    %3883 = vmatpush1.bf16.msra.mxu0 %v3412
    %3884 = vmatprep.subr.bf16.mxu0 0
    %3885 = vmatpush1.bf16.msra.mxu0 %v3401
    %3886 = vmatprep.subr.bf16.mxu0 0
    %3887 = vmatpush1.bf16.msra.mxu0 %v3390
    %3888 = vmatprep.subr.bf16.mxu0 0
    %3889 = vmatpush1.bf16.msra.mxu0 %v3379
    %3890 = vmatprep.subr.bf16.mxu0 0
    %3891 = vmatpush1.bf16.msra.mxu0 %v3368
    %3892 = vmatprep.subr.bf16.mxu0 0
    %3893 = vmatpush1.bf16.msra.mxu0 %v3357
    %3894 = vmatprep.subr.bf16.mxu0 0
    %3895 = vmatpush1.bf16.msra.mxu0 %v3346
    %3896 = vmatprep.subr.bf16.mxu0 0
    %3897 = vmatpush1.bf16.msra.mxu0 %v3335
    %3898 = vmatprep.subr.bf16.mxu0 0
    %3899 = vmatpush2.bf16.msra.mxu0 %v3500
    %3900 = vmatprep.subr.bf16.mxu0 0
    %3901 = vmatpush2.bf16.msra.mxu0 %v3489
    %3902 = vmatprep.subr.bf16.mxu0 0
    %3903 = vmatpush2.bf16.msra.mxu0 %v3478
    %3904 = vmatprep.subr.bf16.mxu0 0
    %3905 = vmatpush2.bf16.msra.mxu0 %v3467
    %3906 = vmatprep.subr.bf16.mxu0 0
    %3907 = vmatpush2.bf16.msra.mxu0 %v3456
    %3908 = vmatprep.subr.bf16.mxu0 0
    %3909 = vmatpush2.bf16.msra.mxu0 %v3445
    %3910 = vmatprep.subr.bf16.mxu0 0
    %3911 = vmatpush2.bf16.msra.mxu0 %v3434
    %3912 = vmatprep.subr.bf16.mxu0 0
    %3913 = vmatpush2.bf16.msra.mxu0 %v3423
    %3914 = vmatprep.mubr.bf16.mxu0 %v2529
    %3915 = vmatmul.mubr.bf16.gmra.mxu0 %v2528
    %v3916 = vpop.f32.mrf.mxu0
    %v3917 = vadd.f32 %v2769, %v3916
    %v3918 = vpop.f32.mrf.mxu0
    %v3919 = vpop.f32.mrf.mxu0
    %v3920 = vpop.f32.mrf.mxu0
    %3921 = vdwg.mxu0
    %v3922 = vmax.f32 %v3712, 0.0
    %v3923 = vmax.f32 %v3714, 0.0
    %v3924 = vmax.f32 %v3753, 0.0
    %v3925 = vmax.f32 %v3755, 0.0
    %v3926 = vmax.f32 %v3794, 0.0
    %v3927 = vmax.f32 %v3796, 0.0
    %v3928 = vmax.f32 %v3835, 0.0
    %v3929 = vmax.f32 %v3837, 0.0
    %v3930 = vmax.f32 %v3876, 0.0
    %v3931 = vmax.f32 %v3878, 0.0
    %v3932 = vmax.f32 %v3917, 0.0
    %v3933 = vpack.c.bf16 %v3922, %v3922
    %v3934 = vpack.c.bf16 %v3923, %v3923
    %v3935 = vpack.c.bf16 %v3924, %v3924
    %v3936 = vpack.c.bf16 %v3925, %v3925
    %v3937 = vpack.c.bf16 %v3926, %v3926
    %v3938 = vpack.c.bf16 %v3927, %v3927
    %v3939 = vpack.c.bf16 %v3928, %v3928
    %v3940 = vpack.c.bf16 %v3929, %v3929
    %v3941 = vpack.c.bf16 %v3930, %v3930
    %v3942 = vpack.c.bf16 %v3931, %v3931
    %v3943 = vpack.c.bf16 %v3932, %v3932
    %v3944 = vld [vmem:[%s15] sm:$0xf]
    %v3945 = vld [vmem:[%s15 + $0x4] sm:$0xf]
    %v3946 = vld [vmem:[%s15 + $0x8] sm:$0xf]
    %v3947 = vld [vmem:[%s15 + $0xc] sm:$0xf]
    %v3948 = vld [vmem:[%s15 + $0x10] sm:$0xf]
    %v3949 = vld [vmem:[%s15 + $0x14] sm:$0xf]
    %v3950 = vld [vmem:[%s15 + $0x18] sm:$0xf]
    %v3951 = vld [vmem:[%s15 + $0x1c] sm:$0xf]
    %v3952 = vld [vmem:[%s15 + $0x20] sm:$0xf]
    %v3953 = vld [vmem:[%s15 + $0x24] sm:$0xf]
    %v3954 = vld [vmem:[%s15 + $0x28] sm:$0xf]
    %v3955 = vld [vmem:[%s15 + $0x2c] sm:$0xf]
    %v3956 = vld [vmem:[%s15 + $0x30] sm:$0xf]
    %v3957 = vld [vmem:[%s15 + $0x34] sm:$0xf]
    %v3958 = vld [vmem:[%s15 + $0x38] sm:$0xf]
    %v3959 = vld [vmem:[%s15 + $0x3c] sm:$0xf]
    %v3960 = vld [vmem:[%s15 + $0x40] sm:$0xf]
    %v3961 = vld [vmem:[%s15 + $0x44] sm:$0xf]
    %v3962 = vld [vmem:[%s15 + $0x48] sm:$0xf]
    %v3963 = vld [vmem:[%s15 + $0x4c] sm:$0xf]
    %v3964 = vld [vmem:[%s15 + $0x50] sm:$0xf]
    %v3965 = vld [vmem:[%s15 + $0x54] sm:$0xf]
    %v3966 = vld [vmem:[%s15 + $0x58] sm:$0xf]
    %v3967 = vld [vmem:[%s15 + $0x5c] sm:$0xf]
    %v3968 = vld [vmem:[%s15 + $0x60] sm:$0xf]
    %v3969 = vld [vmem:[%s15 + $0x64] sm:$0xf]
    %v3970 = vld [vmem:[%s15 + $0x68] sm:$0xf]
    %v3971 = vld [vmem:[%s15 + $0x6c] sm:$0xf]
    %v3972 = vld [vmem:[%s15 + $0x70] sm:$0xf]
    %v3973 = vld [vmem:[%s15 + $0x74] sm:$0xf]
    %v3974 = vld [vmem:[%s15 + $0x78] sm:$0xf]
    %v3975 = vld [vmem:[%s15 + $0x7c] sm:$0xf]
    %v3976 = vld [vmem:[%s15 + $0x80] sm:$0xf]
    %v3977 = vld [vmem:[%s15 + $0x84] sm:$0xf]
    %v3978 = vld [vmem:[%s15 + $0x88] sm:$0xf]
    %v3979 = vld [vmem:[%s15 + $0x8c] sm:$0xf]
    %v3980 = vld [vmem:[%s15 + $0x90] sm:$0xf]
    %v3981 = vld [vmem:[%s15 + $0x94] sm:$0xf]
    %v3982 = vld [vmem:[%s15 + $0x98] sm:$0xf]
    %v3983 = vld [vmem:[%s15 + $0x9c] sm:$0xf]
    %v3984 = vld [vmem:[%s15 + $0xa0] sm:$0xf]
    %v3985 = vld [vmem:[%s15 + $0xa4] sm:$0xf]
    %v3986 = vld [vmem:[%s15 + $0xa8] sm:$0xf]
    %v3987 = vld [vmem:[%s15 + $0xac] sm:$0xf]
    %v3988 = vld [vmem:[%s15 + $0xb0] sm:$0xf]
    %v3989 = vld [vmem:[%s15 + $0xb4] sm:$0xf]
    %v3990 = vld [vmem:[%s15 + $0xb8] sm:$0xf]
    %v3991 = vld [vmem:[%s15 + $0xbc] sm:$0xf]
    %v3992 = vld [vmem:[%s15 + $0xc0] sm:$0xf]
    %v3993 = vld [vmem:[%s15 + $0xc4] sm:$0xf]
    %v3994 = vld [vmem:[%s15 + $0xc8] sm:$0xf]
    %v3995 = vld [vmem:[%s15 + $0xcc] sm:$0xf]
    %v3996 = vld [vmem:[%s15 + $0xd0] sm:$0xf]
    %v3997 = vld [vmem:[%s15 + $0xd4] sm:$0xf]
    %v3998 = vld [vmem:[%s15 + $0xd8] sm:$0xf]
    %v3999 = vld [vmem:[%s15 + $0xdc] sm:$0xf]
    %v4000 = vld [vmem:[%s15 + $0xe0] sm:$0xf]
    %v4001 = vld [vmem:[%s15 + $0xe4] sm:$0xf]
    %v4002 = vld [vmem:[%s15 + $0xe8] sm:$0xf]
    %v4003 = vld [vmem:[%s15 + $0xec] sm:$0xf]
    %v4004 = vld [vmem:[%s15 + $0xf0] sm:$0xf]
    %v4005 = vld [vmem:[%s15 + $0xf4] sm:$0xf]
    %v4006 = vld [vmem:[%s15 + $0xf8] sm:$0xf]
    %v4007 = vld [vmem:[%s15 + $0xfc] sm:$0xf]
    %v4008 = vld [vmem:[%s15 + $0x100] sm:$0xf]
    %v4009 = vld [vmem:[%s15 + $0x104] sm:$0xf]
    %v4010 = vld [vmem:[%s15 + $0x108] sm:$0xf]
    %v4011 = vld [vmem:[%s15 + $0x10c] sm:$0xf]
    %v4012 = vld [vmem:[%s15 + $0x110] sm:$0xf]
    %v4013 = vld [vmem:[%s15 + $0x114] sm:$0xf]
    %v4014 = vld [vmem:[%s15 + $0x118] sm:$0xf]
    %v4015 = vld [vmem:[%s15 + $0x11c] sm:$0xf]
    %v4016 = vld [vmem:[%s15 + $0x120] sm:$0xf]
    %v4017 = vld [vmem:[%s15 + $0x124] sm:$0xf]
    %v4018 = vld [vmem:[%s15 + $0x128] sm:$0xf]
    %v4019 = vld [vmem:[%s15 + $0x12c] sm:$0xf]
    %v4020 = vld [vmem:[%s15 + $0x130] sm:$0xf]
    %v4021 = vld [vmem:[%s15 + $0x134] sm:$0xf]
    %v4022 = vld [vmem:[%s15 + $0x138] sm:$0xf]
    %v4023 = vld [vmem:[%s15 + $0x13c] sm:$0xf]
    %v4024 = vld [vmem:[%s15 + $0x140] sm:$0xf]
    %v4025 = vld [vmem:[%s15 + $0x144] sm:$0xf]
    %v4026 = vld [vmem:[%s15 + $0x148] sm:$0xf]
    %v4027 = vld [vmem:[%s15 + $0x14c] sm:$0xf]
    %v4028 = vld [vmem:[%s15 + $0x150] sm:$0xf]
    %v4029 = vld [vmem:[%s15 + $0x154] sm:$0xf]
    %v4030 = vld [vmem:[%s15 + $0x158] sm:$0xf]
    %v4031 = vld [vmem:[%s15 + $0x15c] sm:$0xf]
    %v4032 = vld [vmem:[%s15 + $0x160] sm:$0xf]
    %v4033 = vld [vmem:[%s15 + $0x164] sm:$0xf]
    %v4034 = vld [vmem:[%s15 + $0x168] sm:$0xf]
    %v4035 = vld [vmem:[%s15 + $0x16c] sm:$0xf]
    %v4036 = vld [vmem:[%s15 + $0x170] sm:$0xf]
    %v4037 = vld [vmem:[%s15 + $0x174] sm:$0xf]
    %v4038 = vld [vmem:[%s15 + $0x178] sm:$0xf]
    %v4039 = vld [vmem:[%s15 + $0x17c] sm:$0xf]
    %v4040 = vld [vmem:[%s15 + $0x180] sm:$0xf]
    %v4041 = vld [vmem:[%s15 + $0x184] sm:$0xf]
    %v4042 = vld [vmem:[%s15 + $0x188] sm:$0xf]
    %v4043 = vld [vmem:[%s15 + $0x18c] sm:$0xf]
    %v4044 = vld [vmem:[%s15 + $0x190] sm:$0xf]
    %v4045 = vld [vmem:[%s15 + $0x194] sm:$0xf]
    %v4046 = vld [vmem:[%s15 + $0x198] sm:$0xf]
    %v4047 = vld [vmem:[%s15 + $0x19c] sm:$0xf]
    %v4048 = vld [vmem:[%s15 + $0x1a0] sm:$0xf]
    %v4049 = vld [vmem:[%s15 + $0x1a4] sm:$0xf]
    %v4050 = vld [vmem:[%s15 + $0x1a8] sm:$0xf]
    %v4051 = vld [vmem:[%s15 + $0x1ac] sm:$0xf]
    %v4052 = vld [vmem:[%s15 + $0x1b0] sm:$0xf]
    %v4053 = vld [vmem:[%s15 + $0x1b4] sm:$0xf]
    %v4054 = vld [vmem:[%s15 + $0x1b8] sm:$0xf]
    %v4055 = vld [vmem:[%s15 + $0x1bc] sm:$0xf]
    %v4056 = vld [vmem:[%s15 + $0x1c0] sm:$0xf]
    %v4057 = vld [vmem:[%s15 + $0x1c4] sm:$0xf]
    %v4058 = vld [vmem:[%s15 + $0x1c8] sm:$0xf]
    %v4059 = vld [vmem:[%s15 + $0x1cc] sm:$0xf]
    %v4060 = vld [vmem:[%s15 + $0x1d0] sm:$0xf]
    %v4061 = vld [vmem:[%s15 + $0x1d4] sm:$0xf]
    %v4062 = vld [vmem:[%s15 + $0x1d8] sm:$0xf]
    %v4063 = vld [vmem:[%s15 + $0x1dc] sm:$0xf]
    %v4064 = vld [vmem:[%s15 + $0x1e0] sm:$0xf]
    %v4065 = vld [vmem:[%s15 + $0x1e4] sm:$0xf]
    %v4066 = vld [vmem:[%s15 + $0x1e8] sm:$0xf]
    %v4067 = vld [vmem:[%s15 + $0x1ec] sm:$0xf]
    %v4068 = vld [vmem:[%s15 + $0x1f0] sm:$0xf]
    %v4069 = vld [vmem:[%s15 + $0x1f4] sm:$0xf]
    %v4070 = vld [vmem:[%s15 + $0x1f8] sm:$0xf]
    %v4071 = vld [vmem:[%s15 + $0x1fc] sm:$0xf]
    %v4072 = vld [vmem:[%s15 + $0x200] sm:$0xf]
    %v4073 = vld [vmem:[%s15 + $0x204] sm:$0xf]
    %v4074 = vld [vmem:[%s15 + $0x208] sm:$0xf]
    %v4075 = vld [vmem:[%s15 + $0x20c] sm:$0xf]
    %v4076 = vld [vmem:[%s15 + $0x210] sm:$0xf]
    %v4077 = vld [vmem:[%s15 + $0x214] sm:$0xf]
    %v4078 = vld [vmem:[%s15 + $0x218] sm:$0xf]
    %v4079 = vld [vmem:[%s15 + $0x21c] sm:$0xf]
    %v4080 = vld [vmem:[%s15 + $0x220] sm:$0xf]
    %v4081 = vld [vmem:[%s15 + $0x224] sm:$0xf]
    %v4082 = vld [vmem:[%s15 + $0x228] sm:$0xf]
    %v4083 = vld [vmem:[%s15 + $0x22c] sm:$0xf]
    %v4084 = vld [vmem:[%s15 + $0x230] sm:$0xf]
    %v4085 = vld [vmem:[%s15 + $0x234] sm:$0xf]
    %v4086 = vld [vmem:[%s15 + $0x238] sm:$0xf]
    %v4087 = vld [vmem:[%s15 + $0x23c] sm:$0xf]
    %v4088 = vld [vmem:[%s15 + $0x240] sm:$0xf]
    %v4089 = vld [vmem:[%s15 + $0x244] sm:$0xf]
    %v4090 = vld [vmem:[%s15 + $0x248] sm:$0xf]
    %v4091 = vld [vmem:[%s15 + $0x24c] sm:$0xf]
    %v4092 = vld [vmem:[%s15 + $0x250] sm:$0xf]
    %v4093 = vld [vmem:[%s15 + $0x254] sm:$0xf]
    %v4094 = vld [vmem:[%s15 + $0x258] sm:$0xf]
    %v4095 = vld [vmem:[%s15 + $0x25c] sm:$0xf]
    %v4096 = vld [vmem:[%s15 + $0x260] sm:$0xf]
    %v4097 = vld [vmem:[%s15 + $0x264] sm:$0xf]
    %v4098 = vld [vmem:[%s15 + $0x268] sm:$0xf]
    %v4099 = vld [vmem:[%s15 + $0x26c] sm:$0xf]
    %v4100 = vld [vmem:[%s15 + $0x270] sm:$0xf]
    %v4101 = vld [vmem:[%s15 + $0x274] sm:$0xf]
    %v4102 = vld [vmem:[%s15 + $0x278] sm:$0xf]
    %v4103 = vld [vmem:[%s15 + $0x27c] sm:$0xf]
    %v4104 = vld [vmem:[%s15 + $0x280] sm:$0xf]
    %v4105 = vld [vmem:[%s15 + $0x284] sm:$0xf]
    %v4106 = vld [vmem:[%s15 + $0x288] sm:$0xf]
    %v4107 = vld [vmem:[%s15 + $0x28c] sm:$0xf]
    %v4108 = vld [vmem:[%s15 + $0x290] sm:$0xf]
    %v4109 = vld [vmem:[%s15 + $0x294] sm:$0xf]
    %v4110 = vld [vmem:[%s15 + $0x298] sm:$0xf]
    %v4111 = vld [vmem:[%s15 + $0x29c] sm:$0xf]
    %v4112 = vld [vmem:[%s15 + $0x2a0] sm:$0xf]
    %v4113 = vld [vmem:[%s15 + $0x2a4] sm:$0xf]
    %v4114 = vld [vmem:[%s15 + $0x2a8] sm:$0xf]
    %v4115 = vld [vmem:[%s15 + $0x2ac] sm:$0xf]
    %v4116 = vld [vmem:[%s15 + $0x2b0] sm:$0xf]
    %v4117 = vld [vmem:[%s15 + $0x2b4] sm:$0xf]
    %v4118 = vld [vmem:[%s15 + $0x2b8] sm:$0xf]
    %v4119 = vld [vmem:[%s15 + $0x2bc] sm:$0xf]
    %v4120 = vld [vmem:[%s16] sm:$0x1]
    %v4122 = vlaneseq
    %v4123 = vshrl.u32 %v4122, 7
    %v4124 = vsub.s32 0, %v4123
    %v4125 = vrot.slane %v4120, %v4124
    %v4303 = vunpack.c.l.b16 %v3944
    %v4304 = vunpack.c.l.b16 %v3945
    %v4305 = vunpack.c.l.b16 %v3946
    %v4306 = vunpack.c.l.b16 %v3947
    %v4307 = vunpack.c.l.b16 %v3948
    %v4308 = vunpack.c.l.b16 %v3949
    %v4309 = vunpack.c.l.b16 %v3950
    %v4310 = vunpack.c.l.b16 %v3951
    %v4311 = vunpack.c.l.b16 %v3952
    %v4312 = vunpack.c.l.b16 %v3953
    %v4313 = vunpack.c.l.b16 %v3954
    %v4314 = vunpack.c.l.b16 %v3955
    %v4315 = vunpack.c.l.b16 %v3956
    %v4316 = vunpack.c.l.b16 %v3957
    %v4317 = vunpack.c.l.b16 %v3958
    %v4318 = vunpack.c.l.b16 %v3959
    %v4319 = vunpack.c.l.b16 %v3960
    %v4320 = vunpack.c.l.b16 %v3961
    %v4321 = vunpack.c.l.b16 %v3962
    %v4322 = vunpack.c.l.b16 %v3963
    %v4323 = vunpack.c.l.b16 %v3964
    %v4324 = vunpack.c.l.b16 %v3965
    %v4325 = vunpack.c.l.b16 %v3966
    %v4326 = vunpack.c.l.b16 %v3967
    %v4327 = vunpack.c.l.b16 %v3968
    %v4328 = vunpack.c.l.b16 %v3969
    %v4329 = vunpack.c.l.b16 %v3970
    %v4330 = vunpack.c.l.b16 %v3971
    %v4331 = vunpack.c.l.b16 %v3972
    %v4332 = vunpack.c.l.b16 %v3973
    %v4333 = vunpack.c.l.b16 %v3974
    %v4334 = vunpack.c.l.b16 %v3975
    %v4335 = vunpack.c.l.b16 %v3976
    %v4336 = vunpack.c.l.b16 %v3977
    %v4337 = vunpack.c.l.b16 %v3978
    %v4338 = vunpack.c.l.b16 %v3979
    %v4339 = vunpack.c.l.b16 %v3980
    %v4340 = vunpack.c.l.b16 %v3981
    %v4341 = vunpack.c.l.b16 %v3982
    %v4342 = vunpack.c.l.b16 %v3983
    %v4343 = vunpack.c.l.b16 %v3984
    %v4344 = vunpack.c.l.b16 %v3985
    %v4345 = vunpack.c.l.b16 %v3986
    %v4346 = vunpack.c.l.b16 %v3987
    %v4347 = vunpack.c.l.b16 %v3988
    %v4348 = vunpack.c.l.b16 %v3989
    %v4349 = vunpack.c.l.b16 %v3990
    %v4350 = vunpack.c.l.b16 %v3991
    %v4351 = vunpack.c.l.b16 %v3992
    %v4352 = vunpack.c.l.b16 %v3993
    %v4353 = vunpack.c.l.b16 %v3994
    %v4354 = vunpack.c.l.b16 %v3995
    %v4355 = vunpack.c.l.b16 %v3996
    %v4356 = vunpack.c.l.b16 %v3997
    %v4357 = vunpack.c.l.b16 %v3998
    %v4358 = vunpack.c.l.b16 %v3999
    %v4359 = vunpack.c.l.b16 %v4000
    %v4360 = vunpack.c.l.b16 %v4001
    %v4361 = vunpack.c.l.b16 %v4002
    %v4362 = vunpack.c.l.b16 %v4003
    %v4363 = vunpack.c.l.b16 %v4004
    %v4364 = vunpack.c.l.b16 %v4005
    %v4365 = vunpack.c.l.b16 %v4006
    %v4366 = vunpack.c.l.b16 %v4007
    %v4367 = vunpack.c.l.b16 %v4008
    %v4368 = vunpack.c.l.b16 %v4009
    %v4369 = vunpack.c.l.b16 %v4010
    %v4370 = vunpack.c.l.b16 %v4011
    %v4371 = vunpack.c.l.b16 %v4012
    %v4372 = vunpack.c.l.b16 %v4013
    %v4373 = vunpack.c.l.b16 %v4014
    %v4374 = vunpack.c.l.b16 %v4015
    %v4375 = vunpack.c.l.b16 %v4016
    %v4376 = vunpack.c.l.b16 %v4017
    %v4377 = vunpack.c.l.b16 %v4018
    %v4378 = vunpack.c.l.b16 %v4019
    %v4379 = vunpack.c.l.b16 %v4020
    %v4380 = vunpack.c.l.b16 %v4021
    %v4381 = vunpack.c.l.b16 %v4022
    %v4382 = vunpack.c.l.b16 %v4023
    %v4383 = vunpack.c.l.b16 %v4024
    %v4384 = vunpack.c.l.b16 %v4025
    %v4385 = vunpack.c.l.b16 %v4026
    %v4386 = vunpack.c.l.b16 %v4027
    %v4387 = vunpack.c.l.b16 %v4028
    %v4388 = vunpack.c.l.b16 %v4029
    %v4389 = vunpack.c.l.b16 %v4030
    %v4390 = vunpack.c.l.b16 %v4031
    %v4391 = vunpack.c.l.b16 %v4032
    %v4392 = vunpack.c.l.b16 %v4033
    %v4393 = vunpack.c.l.b16 %v4034
    %v4394 = vunpack.c.l.b16 %v4035
    %v4395 = vunpack.c.l.b16 %v4036
    %v4396 = vunpack.c.l.b16 %v4037
    %v4397 = vunpack.c.l.b16 %v4038
    %v4398 = vunpack.c.l.b16 %v4039
    %v4399 = vunpack.c.l.b16 %v4040
    %v4400 = vunpack.c.l.b16 %v4041
    %v4401 = vunpack.c.l.b16 %v4042
    %v4402 = vunpack.c.l.b16 %v4043
    %v4403 = vunpack.c.l.b16 %v4044
    %v4404 = vunpack.c.l.b16 %v4045
    %v4405 = vunpack.c.l.b16 %v4046
    %v4406 = vunpack.c.l.b16 %v4047
    %v4407 = vunpack.c.l.b16 %v4048
    %v4408 = vunpack.c.l.b16 %v4049
    %v4409 = vunpack.c.l.b16 %v4050
    %v4410 = vunpack.c.l.b16 %v4051
    %v4411 = vunpack.c.l.b16 %v4052
    %v4412 = vunpack.c.l.b16 %v4053
    %v4413 = vunpack.c.l.b16 %v4054
    %v4414 = vunpack.c.l.b16 %v4055
    %v4415 = vunpack.c.l.b16 %v4056
    %v4416 = vunpack.c.l.b16 %v4057
    %v4417 = vunpack.c.l.b16 %v4058
    %v4418 = vunpack.c.l.b16 %v4059
    %v4419 = vunpack.c.l.b16 %v4060
    %v4420 = vunpack.c.l.b16 %v4061
    %v4421 = vunpack.c.l.b16 %v4062
    %v4422 = vunpack.c.l.b16 %v4063
    %v4423 = vunpack.c.l.b16 %v4064
    %v4424 = vunpack.c.l.b16 %v4065
    %v4425 = vunpack.c.l.b16 %v4066
    %v4426 = vunpack.c.l.b16 %v4067
    %v4427 = vunpack.c.l.b16 %v4068
    %v4428 = vunpack.c.l.b16 %v4069
    %v4429 = vunpack.c.l.b16 %v4070
    %v4430 = vunpack.c.l.b16 %v4071
    %v4431 = vunpack.c.l.b16 %v4072
    %v4432 = vunpack.c.l.b16 %v4073
    %v4433 = vunpack.c.l.b16 %v4074
    %v4434 = vunpack.c.l.b16 %v4075
    %v4435 = vunpack.c.l.b16 %v4076
    %v4436 = vunpack.c.l.b16 %v4077
    %v4437 = vunpack.c.l.b16 %v4078
    %v4438 = vunpack.c.l.b16 %v4079
    %v4439 = vunpack.c.l.b16 %v4080
    %v4440 = vunpack.c.l.b16 %v4081
    %v4441 = vunpack.c.l.b16 %v4082
    %v4442 = vunpack.c.l.b16 %v4083
    %v4443 = vunpack.c.l.b16 %v4084
    %v4444 = vunpack.c.l.b16 %v4085
    %v4445 = vunpack.c.l.b16 %v4086
    %v4446 = vunpack.c.l.b16 %v4087
    %v4447 = vunpack.c.l.b16 %v4088
    %v4448 = vunpack.c.l.b16 %v4089
    %v4449 = vunpack.c.l.b16 %v4090
    %v4450 = vunpack.c.l.b16 %v4091
    %v4451 = vunpack.c.l.b16 %v4092
    %v4452 = vunpack.c.l.b16 %v4093
    %v4453 = vunpack.c.l.b16 %v4094
    %v4454 = vunpack.c.l.b16 %v4095
    %v4455 = vunpack.c.l.b16 %v4096
    %v4456 = vunpack.c.l.b16 %v4097
    %v4457 = vunpack.c.l.b16 %v4098
    %v4458 = vunpack.c.l.b16 %v4099
    %v4459 = vunpack.c.l.b16 %v4100
    %v4460 = vunpack.c.l.b16 %v4101
    %v4461 = vunpack.c.l.b16 %v4102
    %v4462 = vunpack.c.l.b16 %v4103
    %v4463 = vunpack.c.l.b16 %v4104
    %v4464 = vunpack.c.l.b16 %v4105
    %v4465 = vunpack.c.l.b16 %v4106
    %v4466 = vunpack.c.l.b16 %v4107
    %v4467 = vunpack.c.l.b16 %v4108
    %v4468 = vunpack.c.l.b16 %v4109
    %v4469 = vunpack.c.l.b16 %v4110
    %v4470 = vunpack.c.l.b16 %v4111
    %v4471 = vunpack.c.l.b16 %v4112
    %v4472 = vunpack.c.l.b16 %v4113
    %v4473 = vunpack.c.l.b16 %v4114
    %v4474 = vunpack.c.l.b16 %v4115
    %v4475 = vunpack.c.l.b16 %v4116
    %v4476 = vunpack.c.l.b16 %v4117
    %v4477 = vunpack.c.l.b16 %v4118
    %v4478 = vunpack.c.l.b16 %v4119
    %v4479 = vpack.c.b16 %v4304, %v4303
    %v4480 = vpack.c.b16 %v4306, %v4305
    %v4481 = vpack.c.b16 %v4308, %v4307
    %v4482 = vpack.c.b16 %v4310, %v4309
    %v4483 = vpack.c.b16 %v4312, %v4311
    %v4484 = vpack.c.b16 %v4314, %v4313
    %v4485 = vpack.c.b16 %v4316, %v4315
    %v4486 = vpack.c.b16 %v4318, %v4317
    %v4487 = vpack.c.b16 %v4320, %v4319
    %v4488 = vpack.c.b16 %v4322, %v4321
    %v4489 = vpack.c.b16 %v4324, %v4323
    %v4490 = vpack.c.b16 %v4326, %v4325
    %v4491 = vpack.c.b16 %v4328, %v4327
    %v4492 = vpack.c.b16 %v4330, %v4329
    %v4493 = vpack.c.b16 %v4332, %v4331
    %v4494 = vpack.c.b16 %v4334, %v4333
    %v4495 = vpack.c.b16 %v4336, %v4335
    %v4496 = vpack.c.b16 %v4338, %v4337
    %v4497 = vpack.c.b16 %v4340, %v4339
    %v4498 = vpack.c.b16 %v4342, %v4341
    %v4499 = vpack.c.b16 %v4344, %v4343
    %v4500 = vpack.c.b16 %v4346, %v4345
    %v4501 = vpack.c.b16 %v4348, %v4347
    %v4502 = vpack.c.b16 %v4350, %v4349
    %v4503 = vpack.c.b16 %v4352, %v4351
    %v4504 = vpack.c.b16 %v4354, %v4353
    %v4505 = vpack.c.b16 %v4356, %v4355
    %v4506 = vpack.c.b16 %v4358, %v4357
    %v4507 = vpack.c.b16 %v4360, %v4359
    %v4508 = vpack.c.b16 %v4362, %v4361
    %v4509 = vpack.c.b16 %v4364, %v4363
    %v4510 = vpack.c.b16 %v4366, %v4365
    %v4511 = vpack.c.b16 %v4368, %v4367
    %v4512 = vpack.c.b16 %v4370, %v4369
    %v4513 = vpack.c.b16 %v4372, %v4371
    %v4514 = vpack.c.b16 %v4374, %v4373
    %v4515 = vpack.c.b16 %v4376, %v4375
    %v4516 = vpack.c.b16 %v4378, %v4377
    %v4517 = vpack.c.b16 %v4380, %v4379
    %v4518 = vpack.c.b16 %v4382, %v4381
    %v4519 = vpack.c.b16 %v4384, %v4383
    %v4520 = vpack.c.b16 %v4386, %v4385
    %v4521 = vpack.c.b16 %v4388, %v4387
    %v4522 = vpack.c.b16 %v4390, %v4389
    %v4523 = vpack.c.b16 %v4392, %v4391
    %v4524 = vpack.c.b16 %v4394, %v4393
    %v4525 = vpack.c.b16 %v4396, %v4395
    %v4526 = vpack.c.b16 %v4398, %v4397
    %v4527 = vpack.c.b16 %v4400, %v4399
    %v4528 = vpack.c.b16 %v4402, %v4401
    %v4529 = vpack.c.b16 %v4404, %v4403
    %v4530 = vpack.c.b16 %v4406, %v4405
    %v4531 = vpack.c.b16 %v4408, %v4407
    %v4532 = vpack.c.b16 %v4410, %v4409
    %v4533 = vpack.c.b16 %v4412, %v4411
    %v4534 = vpack.c.b16 %v4414, %v4413
    %v4535 = vpack.c.b16 %v4416, %v4415
    %v4536 = vpack.c.b16 %v4418, %v4417
    %v4537 = vpack.c.b16 %v4420, %v4419
    %v4538 = vpack.c.b16 %v4422, %v4421
    %v4539 = vpack.c.b16 %v4424, %v4423
    %v4540 = vpack.c.b16 %v4426, %v4425
    %v4541 = vpack.c.b16 %v4428, %v4427
    %v4542 = vpack.c.b16 %v4430, %v4429
    %v4543 = vpack.c.b16 %v4432, %v4431
    %v4544 = vpack.c.b16 %v4434, %v4433
    %v4545 = vpack.c.b16 %v4436, %v4435
    %v4546 = vpack.c.b16 %v4438, %v4437
    %v4547 = vpack.c.b16 %v4440, %v4439
    %v4548 = vpack.c.b16 %v4442, %v4441
    %v4549 = vpack.c.b16 %v4444, %v4443
    %v4550 = vpack.c.b16 %v4446, %v4445
    %v4551 = vpack.c.b16 %v4448, %v4447
    %v4552 = vpack.c.b16 %v4450, %v4449
    %v4553 = vpack.c.b16 %v4452, %v4451
    %v4554 = vpack.c.b16 %v4454, %v4453
    %v4555 = vpack.c.b16 %v4456, %v4455
    %v4556 = vpack.c.b16 %v4458, %v4457
    %v4557 = vpack.c.b16 %v4460, %v4459
    %v4558 = vpack.c.b16 %v4462, %v4461
    %v4559 = vpack.c.b16 %v4464, %v4463
    %v4560 = vpack.c.b16 %v4466, %v4465
    %v4561 = vpack.c.b16 %v4468, %v4467
    %v4562 = vpack.c.b16 %v4470, %v4469
    %v4563 = vpack.c.b16 %v4472, %v4471
    %v4564 = vpack.c.b16 %v4474, %v4473
    %v4565 = vpack.c.b16 %v4476, %v4475
    %v4566 = vpack.c.b16 %v4478, %v4477
    %4655 = vmatprep.subr.bf16.mxu0 0
    %4656 = vmatpush1.bf16.msra.mxu0 %v4486
    %4657 = vmatprep.subr.bf16.mxu0 0
    %4658 = vmatpush1.bf16.msra.mxu0 %v4485
    %4659 = vmatprep.subr.bf16.mxu0 0
    %4660 = vmatpush1.bf16.msra.mxu0 %v4484
    %4661 = vmatprep.subr.bf16.mxu0 0
    %4662 = vmatpush1.bf16.msra.mxu0 %v4483
    %4663 = vmatprep.subr.bf16.mxu0 0
    %4664 = vmatpush1.bf16.msra.mxu0 %v4482
    %4665 = vmatprep.subr.bf16.mxu0 0
    %4666 = vmatpush1.bf16.msra.mxu0 %v4481
    %4667 = vmatprep.subr.bf16.mxu0 0
    %4668 = vmatpush1.bf16.msra.mxu0 %v4480
    %4669 = vmatprep.subr.bf16.mxu0 0
    %4670 = vmatpush1.bf16.msra.mxu0 %v4479
    %4671 = vmatprep.subr.bf16.mxu0 0
    %4672 = vmatpush2.bf16.msra.mxu0 %v4494
    %4673 = vmatprep.subr.bf16.mxu0 0
    %4674 = vmatpush2.bf16.msra.mxu0 %v4493
    %4675 = vmatprep.subr.bf16.mxu0 0
    %4676 = vmatpush2.bf16.msra.mxu0 %v4492
    %4677 = vmatprep.subr.bf16.mxu0 0
    %4678 = vmatpush2.bf16.msra.mxu0 %v4491
    %4679 = vmatprep.subr.bf16.mxu0 0
    %4680 = vmatpush2.bf16.msra.mxu0 %v4490
    %4681 = vmatprep.subr.bf16.mxu0 0
    %4682 = vmatpush2.bf16.msra.mxu0 %v4489
    %4683 = vmatprep.subr.bf16.mxu0 0
    %4684 = vmatpush2.bf16.msra.mxu0 %v4488
    %4685 = vmatprep.subr.bf16.mxu0 0
    %4686 = vmatpush2.bf16.msra.mxu0 %v4487
    %4687 = vmatprep.mubr.bf16.mxu0 %v3934
    %4688 = vmatmul.mubr.bf16.gmra.mxu0 %v3933
    %v4689 = vpop.f32.mrf.mxu0
    %v4690 = vadd.f32 %v4125, %v4689
    %v4691 = vpop.f32.mrf.mxu0
    %v4692 = vpop.f32.mrf.mxu0
    %v4693 = vpop.f32.mrf.mxu0
    %4694 = vdwg.mxu0
    %4695 = vmatprep.subr.bf16.mxu0 0
    %4696 = vmatpush1.bf16.msra.mxu0 %v4502
    %4697 = vmatprep.subr.bf16.mxu0 0
    %4698 = vmatpush1.bf16.msra.mxu0 %v4501
    %4699 = vmatprep.subr.bf16.mxu0 0
    %4700 = vmatpush1.bf16.msra.mxu0 %v4500
    %4701 = vmatprep.subr.bf16.mxu0 0
    %4702 = vmatpush1.bf16.msra.mxu0 %v4499
    %4703 = vmatprep.subr.bf16.mxu0 0
    %4704 = vmatpush1.bf16.msra.mxu0 %v4498
    %4705 = vmatprep.subr.bf16.mxu0 0
    %4706 = vmatpush1.bf16.msra.mxu0 %v4497
    %4707 = vmatprep.subr.bf16.mxu0 0
    %4708 = vmatpush1.bf16.msra.mxu0 %v4496
    %4709 = vmatprep.subr.bf16.mxu0 0
    %4710 = vmatpush1.bf16.msra.mxu0 %v4495
    %4711 = vmatprep.subr.bf16.mxu0 0
    %4712 = vmatpush2.bf16.msra.mxu0 %v4510
    %4713 = vmatprep.subr.bf16.mxu0 0
    %4714 = vmatpush2.bf16.msra.mxu0 %v4509
    %4715 = vmatprep.subr.bf16.mxu0 0
    %4716 = vmatpush2.bf16.msra.mxu0 %v4508
    %4717 = vmatprep.subr.bf16.mxu0 0
    %4718 = vmatpush2.bf16.msra.mxu0 %v4507
    %4719 = vmatprep.subr.bf16.mxu0 0
    %4720 = vmatpush2.bf16.msra.mxu0 %v4506
    %4721 = vmatprep.subr.bf16.mxu0 0
    %4722 = vmatpush2.bf16.msra.mxu0 %v4505
    %4723 = vmatprep.subr.bf16.mxu0 0
    %4724 = vmatpush2.bf16.msra.mxu0 %v4504
    %4725 = vmatprep.subr.bf16.mxu0 0
    %4726 = vmatpush2.bf16.msra.mxu0 %v4503
    %4727 = vmatprep.mubr.bf16.mxu0 %v3936
    %4728 = vmatmul.mubr.bf16.gmra.mxu0 %v3935
    %v4729 = vpop.f32.mrf.mxu0
    %v4730 = vadd.f32 %v4690, %v4729
    %v4731 = vpop.f32.mrf.mxu0
    %v4732 = vpop.f32.mrf.mxu0
    %v4733 = vpop.f32.mrf.mxu0
    %4734 = vdwg.mxu0
    %4735 = vmatprep.subr.bf16.mxu0 0
    %4736 = vmatpush1.bf16.msra.mxu0 %v4518
    %4737 = vmatprep.subr.bf16.mxu0 0
    %4738 = vmatpush1.bf16.msra.mxu0 %v4517
    %4739 = vmatprep.subr.bf16.mxu0 0
    %4740 = vmatpush1.bf16.msra.mxu0 %v4516
    %4741 = vmatprep.subr.bf16.mxu0 0
    %4742 = vmatpush1.bf16.msra.mxu0 %v4515
    %4743 = vmatprep.subr.bf16.mxu0 0
    %4744 = vmatpush1.bf16.msra.mxu0 %v4514
    %4745 = vmatprep.subr.bf16.mxu0 0
    %4746 = vmatpush1.bf16.msra.mxu0 %v4513
    %4747 = vmatprep.subr.bf16.mxu0 0
    %4748 = vmatpush1.bf16.msra.mxu0 %v4512
    %4749 = vmatprep.subr.bf16.mxu0 0
    %4750 = vmatpush1.bf16.msra.mxu0 %v4511
    %4751 = vmatprep.subr.bf16.mxu0 0
    %4752 = vmatpush2.bf16.msra.mxu0 %v4526
    %4753 = vmatprep.subr.bf16.mxu0 0
    %4754 = vmatpush2.bf16.msra.mxu0 %v4525
    %4755 = vmatprep.subr.bf16.mxu0 0
    %4756 = vmatpush2.bf16.msra.mxu0 %v4524
    %4757 = vmatprep.subr.bf16.mxu0 0
    %4758 = vmatpush2.bf16.msra.mxu0 %v4523
    %4759 = vmatprep.subr.bf16.mxu0 0
    %4760 = vmatpush2.bf16.msra.mxu0 %v4522
    %4761 = vmatprep.subr.bf16.mxu0 0
    %4762 = vmatpush2.bf16.msra.mxu0 %v4521
    %4763 = vmatprep.subr.bf16.mxu0 0
    %4764 = vmatpush2.bf16.msra.mxu0 %v4520
    %4765 = vmatprep.subr.bf16.mxu0 0
    %4766 = vmatpush2.bf16.msra.mxu0 %v4519
    %4767 = vmatprep.mubr.bf16.mxu0 %v3938
    %4768 = vmatmul.mubr.bf16.gmra.mxu0 %v3937
    %v4769 = vpop.f32.mrf.mxu0
    %v4770 = vadd.f32 %v4730, %v4769
    %v4771 = vpop.f32.mrf.mxu0
    %v4772 = vpop.f32.mrf.mxu0
    %v4773 = vpop.f32.mrf.mxu0
    %4774 = vdwg.mxu0
    %4775 = vmatprep.subr.bf16.mxu0 0
    %4776 = vmatpush1.bf16.msra.mxu0 %v4534
    %4777 = vmatprep.subr.bf16.mxu0 0
    %4778 = vmatpush1.bf16.msra.mxu0 %v4533
    %4779 = vmatprep.subr.bf16.mxu0 0
    %4780 = vmatpush1.bf16.msra.mxu0 %v4532
    %4781 = vmatprep.subr.bf16.mxu0 0
    %4782 = vmatpush1.bf16.msra.mxu0 %v4531
    %4783 = vmatprep.subr.bf16.mxu0 0
    %4784 = vmatpush1.bf16.msra.mxu0 %v4530
    %4785 = vmatprep.subr.bf16.mxu0 0
    %4786 = vmatpush1.bf16.msra.mxu0 %v4529
    %4787 = vmatprep.subr.bf16.mxu0 0
    %4788 = vmatpush1.bf16.msra.mxu0 %v4528
    %4789 = vmatprep.subr.bf16.mxu0 0
    %4790 = vmatpush1.bf16.msra.mxu0 %v4527
    %4791 = vmatprep.subr.bf16.mxu0 0
    %4792 = vmatpush2.bf16.msra.mxu0 %v4542
    %4793 = vmatprep.subr.bf16.mxu0 0
    %4794 = vmatpush2.bf16.msra.mxu0 %v4541
    %4795 = vmatprep.subr.bf16.mxu0 0
    %4796 = vmatpush2.bf16.msra.mxu0 %v4540
    %4797 = vmatprep.subr.bf16.mxu0 0
    %4798 = vmatpush2.bf16.msra.mxu0 %v4539
    %4799 = vmatprep.subr.bf16.mxu0 0
    %4800 = vmatpush2.bf16.msra.mxu0 %v4538
    %4801 = vmatprep.subr.bf16.mxu0 0
    %4802 = vmatpush2.bf16.msra.mxu0 %v4537
    %4803 = vmatprep.subr.bf16.mxu0 0
    %4804 = vmatpush2.bf16.msra.mxu0 %v4536
    %4805 = vmatprep.subr.bf16.mxu0 0
    %4806 = vmatpush2.bf16.msra.mxu0 %v4535
    %4807 = vmatprep.mubr.bf16.mxu0 %v3940
    %4808 = vmatmul.mubr.bf16.gmra.mxu0 %v3939
    %v4809 = vpop.f32.mrf.mxu0
    %v4810 = vadd.f32 %v4770, %v4809
    %v4811 = vpop.f32.mrf.mxu0
    %v4812 = vpop.f32.mrf.mxu0
    %v4813 = vpop.f32.mrf.mxu0
    %4814 = vdwg.mxu0
    %4815 = vmatprep.subr.bf16.mxu0 0
    %4816 = vmatpush1.bf16.msra.mxu0 %v4550
    %4817 = vmatprep.subr.bf16.mxu0 0
    %4818 = vmatpush1.bf16.msra.mxu0 %v4549
    %4819 = vmatprep.subr.bf16.mxu0 0
    %4820 = vmatpush1.bf16.msra.mxu0 %v4548
    %4821 = vmatprep.subr.bf16.mxu0 0
    %4822 = vmatpush1.bf16.msra.mxu0 %v4547
    %4823 = vmatprep.subr.bf16.mxu0 0
    %4824 = vmatpush1.bf16.msra.mxu0 %v4546
    %4825 = vmatprep.subr.bf16.mxu0 0
    %4826 = vmatpush1.bf16.msra.mxu0 %v4545
    %4827 = vmatprep.subr.bf16.mxu0 0
    %4828 = vmatpush1.bf16.msra.mxu0 %v4544
    %4829 = vmatprep.subr.bf16.mxu0 0
    %4830 = vmatpush1.bf16.msra.mxu0 %v4543
    %4831 = vmatprep.subr.bf16.mxu0 0
    %4832 = vmatpush2.bf16.msra.mxu0 %v4558
    %4833 = vmatprep.subr.bf16.mxu0 0
    %4834 = vmatpush2.bf16.msra.mxu0 %v4557
    %4835 = vmatprep.subr.bf16.mxu0 0
    %4836 = vmatpush2.bf16.msra.mxu0 %v4556
    %4837 = vmatprep.subr.bf16.mxu0 0
    %4838 = vmatpush2.bf16.msra.mxu0 %v4555
    %4839 = vmatprep.subr.bf16.mxu0 0
    %4840 = vmatpush2.bf16.msra.mxu0 %v4554
    %4841 = vmatprep.subr.bf16.mxu0 0
    %4842 = vmatpush2.bf16.msra.mxu0 %v4553
    %4843 = vmatprep.subr.bf16.mxu0 0
    %4844 = vmatpush2.bf16.msra.mxu0 %v4552
    %4845 = vmatprep.subr.bf16.mxu0 0
    %4846 = vmatpush2.bf16.msra.mxu0 %v4551
    %4847 = vmatprep.mubr.bf16.mxu0 %v3942
    %4848 = vmatmul.mubr.bf16.gmra.mxu0 %v3941
    %v4849 = vpop.f32.mrf.mxu0
    %v4850 = vadd.f32 %v4810, %v4849
    %v4851 = vpop.f32.mrf.mxu0
    %v4852 = vpop.f32.mrf.mxu0
    %v4853 = vpop.f32.mrf.mxu0
    %4854 = vdwg.mxu0
    %4855 = vmatprep.subr.bf16.mxu0 0
    %4856 = vmatpush1.bf16.msra.mxu0 %v4566
    %4857 = vmatprep.subr.bf16.mxu0 0
    %4858 = vmatpush1.bf16.msra.mxu0 %v4565
    %4859 = vmatprep.subr.bf16.mxu0 0
    %4860 = vmatpush1.bf16.msra.mxu0 %v4564
    %4861 = vmatprep.subr.bf16.mxu0 0
    %4862 = vmatpush1.bf16.msra.mxu0 %v4563
    %4863 = vmatprep.subr.bf16.mxu0 0
    %4864 = vmatpush1.bf16.msra.mxu0 %v4562
    %4865 = vmatprep.subr.bf16.mxu0 0
    %4866 = vmatpush1.bf16.msra.mxu0 %v4561
    %4867 = vmatprep.subr.bf16.mxu0 0
    %4868 = vmatpush1.bf16.msra.mxu0 %v4560
    %4869 = vmatprep.subr.bf16.mxu0 0
    %4870 = vmatpush1.bf16.msra.mxu0 %v4559
    %4871 = vmatprep.subr.bf16.mxu0 0
    %4872 = vmatpush2.bf16.msra.mxu0 0
    %4873 = vmatprep.subr.bf16.mxu0 0
    %4874 = vmatpush2.bf16.msra.mxu0 0
    %4875 = vmatprep.subr.bf16.mxu0 0
    %4876 = vmatpush2.bf16.msra.mxu0 0
    %4877 = vmatprep.subr.bf16.mxu0 0
    %4878 = vmatpush2.bf16.msra.mxu0 0
    %4879 = vmatprep.subr.bf16.mxu0 0
    %4880 = vmatpush2.bf16.msra.mxu0 0
    %4881 = vmatprep.subr.bf16.mxu0 0
    %4882 = vmatpush2.bf16.msra.mxu0 0
    %4883 = vmatprep.subr.bf16.mxu0 0
    %4884 = vmatpush2.bf16.msra.mxu0 0
    %4885 = vmatprep.subr.bf16.mxu0 0
    %4886 = vmatpush2.bf16.msra.mxu0 0
    %4887 = vmatprep.mubr.bf16.mxu0 0
    %4888 = vmatmul.mubr.bf16.gmra.mxu0 %v3943
    %v4889 = vpop.f32.mrf.mxu0
    %v4890 = vadd.f32 %v4850, %v4889
    %v4891 = vpop.f32.mrf.mxu0
    %v4892 = vpop.f32.mrf.mxu0
    %v4893 = vpop.f32.mrf.mxu0
    %4894 = vdwg.mxu0
    %v4895 = vmax.f32 %v4890, 0.0
    %v4896 = vld [vmem:[%s17] sm:$0x1]
    %v4898 = vlaneseq
    %v4899 = vshrl.u32 %v4898, 7
    %v4900 = vsub.s32 0, %v4899
    %v4901 = vrot.slane %v4896, %v4900
    %v4903 = vmul.f32 %v4895, %v4901
    %v4904 = vld [vmem:[%s18] sm:$0x1]
    %v4906 = vlaneseq
    %v4907 = vshrl.u32 %v4906, 7
    %v4908 = vsub.s32 0, %v4907
    %v4909 = vrot.slane %v4904, %v4908
    %v4911 = vadd.f32 %v4903, %v4909
    %4912 = vst.msk [vmem:[#allocation9] sm:$0xff] %vm437, %v4911
    %v4913 = vld [vmem:[%s19] sm:$0xf]
    %v4914 = vld [vmem:[%s19 + $0x4] sm:$0xf]
    %v4915 = vld [vmem:[#allocation2] sm:$0x1]
    %v4917 = vlaneseq
    %v4918 = vshrl.u32 %v4917, 7
    %v4919 = vsub.s32 0, %v4918
    %v4920 = vrot.slane %v4915, %v4919
    %v4924 = vunpack.c.l.b16 %v4913
    %v4925 = vunpack.c.l.b16 %v4914
    %v4926 = vpack.c.b16 %v4925, %v4924
    %4928 = vmatprep.subr.bf16.mxu0 0
    %4929 = vmatpush1.bf16.msra.mxu0 0
    %4930 = vmatprep.subr.bf16.mxu0 0
    %4931 = vmatpush1.bf16.msra.mxu0 0
    %4932 = vmatprep.subr.bf16.mxu0 0
    %4933 = vmatpush1.bf16.msra.mxu0 0
    %4934 = vmatprep.subr.bf16.mxu0 0
    %4935 = vmatpush1.bf16.msra.mxu0 0
    %4936 = vmatprep.subr.bf16.mxu0 0
    %4937 = vmatpush1.bf16.msra.mxu0 0
    %4938 = vmatprep.subr.bf16.mxu0 0
    %4939 = vmatpush1.bf16.msra.mxu0 0
    %4940 = vmatprep.subr.bf16.mxu0 0
    %4941 = vmatpush1.bf16.msra.mxu0 0
    %4942 = vmatprep.subr.bf16.mxu0 0
    %4943 = vmatpush1.bf16.msra.mxu0 %v4926
    %4944 = vmatprep.subr.bf16.mxu0 0
    %4945 = vmatpush2.bf16.msra.mxu0 0
    %4946 = vmatprep.subr.bf16.mxu0 0
    %4947 = vmatpush2.bf16.msra.mxu0 0
    %4948 = vmatprep.subr.bf16.mxu0 0
    %4949 = vmatpush2.bf16.msra.mxu0 0
    %4950 = vmatprep.subr.bf16.mxu0 0
    %4951 = vmatpush2.bf16.msra.mxu0 0
    %4952 = vmatprep.subr.bf16.mxu0 0
    %4953 = vmatpush2.bf16.msra.mxu0 0
    %4954 = vmatprep.subr.bf16.mxu0 0
    %4955 = vmatpush2.bf16.msra.mxu0 0
    %4956 = vmatprep.subr.bf16.mxu0 0
    %4957 = vmatpush2.bf16.msra.mxu0 0
    %4958 = vmatprep.subr.bf16.mxu0 0
    %4959 = vmatpush2.bf16.msra.mxu0 0
    %4960 = vmatprep.mubr.bf16.mxu0 0
    %4961 = vmatmul.mubr.bf16.gmra.mxu0 %v2333
    %v4962 = vpop.f32.mrf.mxu0
    %v4963 = vadd.f32 %v4920, %v4962
    %v4964 = vpop.f32.mrf.mxu0
    %v4965 = vpop.f32.mrf.mxu0
    %v4966 = vpop.f32.mrf.mxu0
    %4967 = vdwg.mxu0
    %v4968 = vxor.u32 %v4963, 2147483648
    %v4969 = vmul.f32 %v4968, 1.442695
    %v4970 = vpow.pop %v4969
    %v4971 = vadd.f32 %v4970, 1.0
    %v4972 = vrcp.pop %v4971
    %v4973 = vmul.f32 1.0, %v4972
    %vm4974 = vcmask 7168
    %4975 = vst.msk [vmem:[%s23] sm:$0xff] %vm4974, %v4973
    // Predicated region
    $region94: #{autoencoder_forward.1} parent=1 // pred_check
      _
    $region95: #{autoencoder_forward.1} parent=1 // pred_check_branch
      %4977 = sbr.rel (0) target = $region97
    $region96: #{autoencoder_forward.1} parent=1 // pred_region
      %s4979 = ssub.s32 128, 128
      %4980 = vsyncadd [#allocation5], %s4979
      %s4982 = sshll.u32 [#allocation8], 4
      %s4983 = int_to_ptr.vmem [resolvable:$true] %s4982
      %4985 = dma.vmem_to_hbm [thread:$0]  %s4983, 128, %s21, [#allocation5]
    $region97: #{autoencoder_forward.1} parent=1 // pred_fallthru
      _
    // Predicated region
    $region98: #{autoencoder_forward.1} parent=1 // pred_check
      _
    $region99: #{autoencoder_forward.1} parent=1 // pred_check_branch
      %4987 = sbr.rel (0) target = $region101
    $region100: #{autoencoder_forward.1} parent=1 // pred_region
      %s4989 = ssub.s32 128, 128
      %4990 = vsyncadd [#allocation10], %s4989
      %s4992 = sshll.u32 [#allocation9], 4
      %s4993 = int_to_ptr.vmem [resolvable:$true] %s4992
      %4995 = dma.vmem_to_hbm [thread:$0]  %s4993, 128, %s22, [#allocation10]
    $region101: #{autoencoder_forward.1} parent=1 // pred_fallthru
      _
    // Predicated region
    $region102: #{autoencoder_forward.1} parent=1 // pred_check
      _
    $region103: #{autoencoder_forward.1} parent=1 // pred_check_branch
      %4997 = sbr.rel (0) target = $region105
    $region104: #{autoencoder_forward.1} parent=1 // pred_region
      _
    $region105: #{autoencoder_forward.1} parent=1 // pred_fallthru
      _
    // Predicated region
    $region106: #{autoencoder_forward.1} parent=1 // pred_check
      _
    $region107: #{autoencoder_forward.1} parent=1 // pred_check_branch
      %4999 = sbr.rel (0) target = $region109
    $region108: #{autoencoder_forward.1} parent=1 // pred_region
      %5000 = dma.done [#allocation5], 128
    $region109: #{autoencoder_forward.1} parent=1 // pred_fallthru
      _
    // Predicated region
    $region110: #{autoencoder_forward.1} parent=1 // pred_check
      _
    $region111: #{autoencoder_forward.1} parent=1 // pred_check_branch
      %5002 = sbr.rel (0) target = $region113
    $region112: #{autoencoder_forward.1} parent=1 // pred_region
      %5003 = dma.done [#allocation10], 128
    $region113: #{autoencoder_forward.1} parent=1 // pred_fallthru
      _
    // Predicated region
    $region114: #{autoencoder_forward.1} parent=1 // pred_check
      _
    $region115: #{autoencoder_forward.1} parent=1 // pred_check_branch
      %5005 = sbr.rel (0) target = $region117
    $region116: #{autoencoder_forward.1} parent=1 // pred_region
      _
    $region117: #{autoencoder_forward.1} parent=1 // pred_fallthru
      _
    %5006 = vsyncpa [#allocation4], 1
    %5007 = vsyncpa [#allocation7], 1
    %5008 = vsyncpa [#allocation5], 1
    %5009 = vsyncpa [#allocation10], 1

</llo_original>
